<compile_context>
chip_gen: v6e
topology: v6e:2x2x1
jax: 0.10.0
libtpu: 0.0.40
codegen_flags: <defaults>
</compile_context>

<pallas_src>
import numpy as np
import jax
import jax.numpy as jnp
from jax import lax
from jax.experimental import pallas as pl
from jax.experimental.pallas import tpu as pltpu

# ----------------------------- configuration --------------------------------
TAG_TO_IX = {"B": 0, "I": 1, "O": 2, "<START>": 3, "<STOP>": 4}
START_IDX = TAG_TO_IX["<START>"]
STOP_IDX = TAG_TO_IX["<STOP>"]
K = len(TAG_TO_IX)          # tagset_size
HIDDEN = 32                 # bert.config.hidden_size
LSTM_HIDDEN = 32            # lstm_hidden
HH = LSTM_HIDDEN // 2       # per-direction hidden size
VOCAB = 64
SEQ = 10                    # token ids incl. [CLS]/[SEP]
T = SEQ - 2                 # CRF sequence length
B = 4                       # sentences per call (batched inside one kernel step)
NEG = -10000.0

# lane layout of the packed weight / constant slabs
GATE_OFF = 0
BERT_OFF = 8 * HH                 # 128
TAG_OFF = 8 * HH + HIDDEN         # 160
W_LANES = 8 * HH + HIDDEN + K     # 165
OUT_LANES = 128                   # lane-dense output slab


# ------------------------------ fused kernel ---------------------------------
def _fused_kernel(ids_ref, emb_ref, w_ref, c_ref, out_ref):
    f32 = jnp.float32
    BT = B * T

    # ---- embedding gather (bert_enc: lookup + drop [CLS]/[SEP]) -------------
    # Token ids are read as SMEM scalars (scalar prefetch) and turned into a
    # one-hot matrix; the gather is one (BT, VOCAB) @ (VOCAB, HIDDEN) MXU pass.
    # Rows are ordered t-major / b-minor so feats[t*B:(t+1)*B] is "all
    # sentences at time t" for the batched Viterbi DP below.
    sub_bt = lax.broadcasted_iota(jnp.int32, (BT, 1), 0)
    ids_col = jnp.zeros((BT, 1), jnp.int32)
    for t in range(T):
        for b in range(B):
            r = t * B + b
            ids_col = jnp.where(sub_bt == r, ids_ref[b, t + 1], ids_col)
    lane_vocab = lax.broadcasted_iota(jnp.int32, (BT, VOCAB), 1)
    onehot = (lane_vocab == ids_col).astype(f32)                      # (BT, VOCAB)
    emb = jnp.dot(onehot, emb_ref[...], preferred_element_type=f32)   # (BT, H)

    # ---- unpack the two constant slabs --------------------------------------
    wslab = w_ref[...]                                   # (HIDDEN, W_LANES)
    cslab = c_ref[...]                                   # (1+K, W_LANES)
    w_gates = wslab[:, GATE_OFF:GATE_OFF + 8 * HH]       # (H, 128)
    bert_w = wslab[:, BERT_OFF:BERT_OFF + HIDDEN]        # (H, H)
    w2t = wslab[:, TAG_OFF:TAG_OFF + K]                  # (H, K)
    bias = cslab[0:1, :]
    b_gates = bias[:, GATE_OFF:GATE_OFF + 8 * HH]
    bert_b = bias[:, BERT_OFF:BERT_OFF + HIDDEN]
    b2t = bias[:, TAG_OFF:TAG_OFF + K]
    trans = cslab[1:1 + K, 0:K]                          # trans[next, prev]
    stop_row = cslab[1 + STOP_IDX:2 + STOP_IDX, 0:K]     # trans[STOP, :]

    # ---- synthetic BERT encoder layer (stand-in) ----------------------------
    x = jnp.tanh(jnp.dot(emb, bert_w, preferred_element_type=f32) + bert_b)

    # ---- BiLSTM with seq_len == 1, zero initial state ------------------------
    # Gate columns packed as [i_f i_r | f_f f_r | g_f g_r | o_f o_r], HH each.
    g = jnp.dot(x, w_gates, preferred_element_type=f32) + b_gates    # (BT, 8*HH)
    i_all = jax.nn.sigmoid(g[:, 0:2 * HH])               # [i_f | i_r]
    g_all = jnp.tanh(g[:, 4 * HH:6 * HH])                # [g_f | g_r]
    o_all = jax.nn.sigmoid(g[:, 6 * HH:8 * HH])          # [o_f | o_r]
    # forget gate multiplies c0 == 0 -> drops out
    h = o_all * jnp.tanh(i_all * g_all)                  # (BT, LSTM_HIDDEN)
    feats = jnp.dot(h, w2t, preferred_element_type=f32) + b2t        # (BT, K)

    # ---- Viterbi DP, vectorized over tags AND batch --------------------------
    lane_bk = lax.broadcasted_iota(jnp.int32, (B, K), 1)
    prev_iota = lax.broadcasted_iota(jnp.int32, (B, K, K), 2)
    fv = jnp.where(lane_bk == START_IDX,
                   jnp.zeros((B, K), f32),
                   jnp.full((B, K), NEG, f32))           # (B, K) over prev
    trans_b = trans[None, :, :]                          # (1, K, K)

    bptrs = []
    for t in range(T):                                   # T = 8: fully unrolled
        m = fv[:, None, :] + trans_b                     # (B,K,K): [b, next, prev]
        vmax = jnp.max(m, axis=-1, keepdims=True)        # (B, K, 1) best over prev
        bp = jnp.min(jnp.where(m == vmax, prev_iota, K),
                     axis=-1)                            # (B, K) argmax (first)
        bptrs.append(bp)
        fv = vmax[:, :, 0] + feats[t * B:(t + 1) * B, :]  # + emissions at time t

    term = fv + stop_row                                 # (B, K)
    score = jnp.max(term, axis=-1, keepdims=True)        # (B, 1)
    best = jnp.min(jnp.where(term == score, lane_bk, K),
                   axis=-1, keepdims=True)               # (B, 1) int32

    # ---- on-device backtrace, packed into one lane-dense (B, 128) i32 slab ---
    lane_out = lax.broadcasted_iota(jnp.int32, (B, OUT_LANES), 1)
    out = jnp.where(lane_out == T - 1, best, jnp.zeros((B, OUT_LANES), jnp.int32))
    for t in range(T - 1, 0, -1):
        best = jnp.sum(jnp.where(lane_bk == best, bptrs[t], 0),
                       axis=-1, keepdims=True)           # bptrs[t][best], (B, 1)
        out = jnp.where(lane_out == t - 1, best, out)
    start = jnp.sum(jnp.where(lane_bk == best, bptrs[0], 0),
                    axis=-1, keepdims=True)              # should be START_IDX
    out = jnp.where(lane_out == T, start, out)
    out = jnp.where(lane_out == T + 1, pltpu.bitcast(score, jnp.int32), out)
    out_ref[...] = out


def _rep_spec(shape):
    # Whole-array, block-index-constant spec (index_map gets (grid_i, ids_ref)).
    n = len(shape)
    return pl.BlockSpec(shape, lambda i, ids, _n=n: (0,) * _n)


def _run_fused(token_ids, p):
    grid_spec = pltpu.PrefetchScalarGridSpec(
        num_scalar_prefetch=1,                 # token_ids -> SMEM
        grid=(1,),                             # single fused step
        in_specs=[
            _rep_spec((VOCAB, HIDDEN)),        # embedding table
            _rep_spec((HIDDEN, W_LANES)),      # [w_gates | bert_w | w2t]
            _rep_spec((1 + K, W_LANES)),       # [bias row ; transitions]
        ],
        out_specs=pl.BlockSpec((B, OUT_LANES), lambda i, ids: (0, 0)),
    )
    return pl.pallas_call(
        _fused_kernel,
        out_shape=jax.ShapeDtypeStruct((B, OUT_LANES), jnp.int32),
        grid_spec=grid_spec,
    )(token_ids, p["emb_table"], p["w_slab"], p["c_slab"])


@jax.jit
def forward_batch(packed_params, token_ids):
    # Everything (embedding gather, BERT stand-in, BiLSTM, CRF Viterbi decode
    # and backtrace) runs inside the single Pallas call.
    return _run_fused(token_ids, packed_params)


def forward(packed_params, token_ids):
    """Returns a list of (path_score, best_path) per sentence, like the module."""
    out = forward_batch(packed_params, token_ids)
    jax.block_until_ready(out)
    out_np = np.asarray(out)                              # (B, 128) int32
    paths = out_np[:, :T]
    starts = out_np[:, T]
    scores = out_np[:, T + 1].copy().view(np.float32)     # undo in-kernel bitcast
    results = []
    for b in range(token_ids.shape[0]):
        assert int(starts[b]) == START_IDX
        results.append((float(scores[b]), [int(t) for t in paths[b]]))
    return results


# ----------------------------- parameter init --------------------------------
def init_params(key):
    ks = jax.random.split(key, 12)

    def randn(k, shape, scale=0.1):
        return scale * jax.random.normal(k, shape, dtype=jnp.float32)

    params = {
        "emb_table": randn(ks[0], (VOCAB, HIDDEN), 1.0),
        "bert_w": randn(ks[1], (HIDDEN, HIDDEN)),
        "bert_b": randn(ks[2], (1, HIDDEN)),
        # LSTM weights pre-transposed to (input, 4*HH), gate order [i, f, g, o];
        # biases are b_ih + b_hh combined.
        "wih_f": randn(ks[3], (HIDDEN, 4 * HH)),
        "b_f": randn(ks[4], (1, 4 * HH)) + randn(ks[5], (1, 4 * HH)),
        "wih_r": randn(ks[6], (HIDDEN, 4 * HH)),
        "b_r": randn(ks[7], (1, 4 * HH)) + randn(ks[8], (1, 4 * HH)),
        "w2t": randn(ks[9], (LSTM_HIDDEN, K)),
        "b2t": randn(ks[10], (1, K)),
    }
    trans = jax.random.normal(ks[11], (K, K), dtype=jnp.float32)
    trans = trans.at[START_IDX, :].set(NEG)   # never transition into START
    trans = trans.at[:, STOP_IDX].set(NEG)    # never transition out of STOP
    params["transitions"] = trans
    return params


def pack_params(params):
    """Pack per-direction LSTM gate weights into one (HIDDEN, 8*HH) block and
    lane-concatenate all small constants into two VMEM slabs:
      w_slab (HIDDEN, 165): lanes [0:128)=gates, [128:160)=bert_w, [160:165)=w2t
      c_slab (1+K,   165): row 0 = matching bias row, rows 1..K = transitions."""
    def interleave(wf, wr):
        cols = []
        for gate in range(4):
            cols.append(wf[:, gate * HH:(gate + 1) * HH])
            cols.append(wr[:, gate * HH:(gate + 1) * HH])
        return jnp.concatenate(cols, axis=-1)

    w_gates = interleave(params["wih_f"], params["wih_r"])      # (H, 128)
    b_gates = interleave(params["b_f"], params["b_r"])          # (1, 128)
    w_slab = jnp.concatenate(
        [w_gates, params["bert_w"], params["w2t"]], axis=-1)    # (H, 165)
    bias_row = jnp.concatenate(
        [b_gates, params["bert_b"], params["b2t"]], axis=-1)    # (1, 165)
    trans_pad = jnp.zeros((K, W_LANES), jnp.float32)
    trans_pad = trans_pad.at[:, :K].set(params["transitions"])  # (K, 165)
    c_slab = jnp.concatenate([bias_row, trans_pad], axis=0)     # (1+K, 165)
    return {
        "emb_table": params["emb_table"].astype(jnp.float32),
        "w_slab": w_slab.astype(jnp.float32),
        "c_slab": c_slab.astype(jnp.float32),
    }


if __name__ == "__main__":
    key = jax.random.PRNGKey(0)
    pkey, skey = jax.random.split(key)
    packed = pack_params(init_params(pkey))
    token_ids = jax.random.randint(skey, (B, SEQ), 0, VOCAB, dtype=jnp.int32)

    results = forward(packed, token_ids)
    assert len(results) == B
    for score, tag_seq in results:
        assert len(tag_seq) == T
        assert all(0 <= t < K for t in tag_seq)
        assert np.isfinite(score)
    print("KERNEL_OK")
</pallas_src>

<mosaic_0001>
module attributes {stable_mosaic.version = 11 : i64} {
  func.func @_fused_kernel(%arg0: i32, %arg1: memref<4x10xi32, #tpu.memory_space<smem>>, %arg2: memref<64x32xf32, #tpu.memory_space<vmem>>, %arg3: memref<32x165xf32, #tpu.memory_space<vmem>>, %arg4: memref<6x165xf32, #tpu.memory_space<vmem>>, %arg5: memref<4x128xi32, #tpu.memory_space<vmem>>) attributes {dimension_semantics = [#tpu.dimension_semantics<arbitrary>], iteration_bounds = array<i64: 1>, scalar_prefetch = 1 : i64, scratch_operands = 0 : i64, tpu.core_type = #tpu.core_type<tc>, window_params = [{pipeline_mode = #tpu.pipeline_mode<synchronous>, transform_indices = @transform_0, window_bounds = array<i64: 64, 32>}, {pipeline_mode = #tpu.pipeline_mode<synchronous>, transform_indices = @transform_1, window_bounds = array<i64: 32, 165>}, {pipeline_mode = #tpu.pipeline_mode<synchronous>, transform_indices = @transform_2, window_bounds = array<i64: 6, 165>}, {pipeline_mode = #tpu.pipeline_mode<synchronous>, transform_indices = @transform_3, window_bounds = array<i64: 4, 128>}]} {
    %0 = tpu.iota {dimensions = array<i32: 0>} : vector<32x1xi32>
    %c0_i32 = arith.constant 0 : i32
    %1 = vector.broadcast %c0_i32 : i32 to vector<32x1xi32>
    %c0_i32_0 = arith.constant 0 : i32
    %2 = vector.broadcast %c0_i32_0 : i32 to vector<32x1xi32>
    %3 = arith.cmpi eq, %0, %2 : vector<32x1xi32>
    %c0 = arith.constant 0 : index
    %c1 = arith.constant 1 : index
    %4 = memref.load %arg1[%c0, %c1] : memref<4x10xi32, #tpu.memory_space<smem>>
    %5 = vector.broadcast %4 : i32 to vector<32x1xi32>
    %6 = arith.select %3, %5, %1 : vector<32x1xi1>, vector<32x1xi32>
    %c1_i32 = arith.constant 1 : i32
    %7 = vector.broadcast %c1_i32 : i32 to vector<32x1xi32>
    %8 = arith.cmpi eq, %0, %7 : vector<32x1xi32>
    %c1_1 = arith.constant 1 : index
    %c1_2 = arith.constant 1 : index
    %9 = memref.load %arg1[%c1_1, %c1_2] : memref<4x10xi32, #tpu.memory_space<smem>>
    %10 = vector.broadcast %9 : i32 to vector<32x1xi32>
    %11 = arith.select %8, %10, %6 : vector<32x1xi1>, vector<32x1xi32>
    %c2_i32 = arith.constant 2 : i32
    %12 = vector.broadcast %c2_i32 : i32 to vector<32x1xi32>
    %13 = arith.cmpi eq, %0, %12 : vector<32x1xi32>
    %c2 = arith.constant 2 : index
    %c1_3 = arith.constant 1 : index
    %14 = memref.load %arg1[%c2, %c1_3] : memref<4x10xi32, #tpu.memory_space<smem>>
    %15 = vector.broadcast %14 : i32 to vector<32x1xi32>
    %16 = arith.select %13, %15, %11 : vector<32x1xi1>, vector<32x1xi32>
    %c3_i32 = arith.constant 3 : i32
    %17 = vector.broadcast %c3_i32 : i32 to vector<32x1xi32>
    %18 = arith.cmpi eq, %0, %17 : vector<32x1xi32>
    %c3 = arith.constant 3 : index
    %c1_4 = arith.constant 1 : index
    %19 = memref.load %arg1[%c3, %c1_4] : memref<4x10xi32, #tpu.memory_space<smem>>
    %20 = vector.broadcast %19 : i32 to vector<32x1xi32>
    %21 = arith.select %18, %20, %16 : vector<32x1xi1>, vector<32x1xi32>
    %c4_i32 = arith.constant 4 : i32
    %22 = vector.broadcast %c4_i32 : i32 to vector<32x1xi32>
    %23 = arith.cmpi eq, %0, %22 : vector<32x1xi32>
    %c0_5 = arith.constant 0 : index
    %c2_6 = arith.constant 2 : index
    %24 = memref.load %arg1[%c0_5, %c2_6] : memref<4x10xi32, #tpu.memory_space<smem>>
    %25 = vector.broadcast %24 : i32 to vector<32x1xi32>
    %26 = arith.select %23, %25, %21 : vector<32x1xi1>, vector<32x1xi32>
    %c5_i32 = arith.constant 5 : i32
    %27 = vector.broadcast %c5_i32 : i32 to vector<32x1xi32>
    %28 = arith.cmpi eq, %0, %27 : vector<32x1xi32>
    %c1_7 = arith.constant 1 : index
    %c2_8 = arith.constant 2 : index
    %29 = memref.load %arg1[%c1_7, %c2_8] : memref<4x10xi32, #tpu.memory_space<smem>>
    %30 = vector.broadcast %29 : i32 to vector<32x1xi32>
    %31 = arith.select %28, %30, %26 : vector<32x1xi1>, vector<32x1xi32>
    %c6_i32 = arith.constant 6 : i32
    %32 = vector.broadcast %c6_i32 : i32 to vector<32x1xi32>
    %33 = arith.cmpi eq, %0, %32 : vector<32x1xi32>
    %c2_9 = arith.constant 2 : index
    %c2_10 = arith.constant 2 : index
    %34 = memref.load %arg1[%c2_9, %c2_10] : memref<4x10xi32, #tpu.memory_space<smem>>
    %35 = vector.broadcast %34 : i32 to vector<32x1xi32>
    %36 = arith.select %33, %35, %31 : vector<32x1xi1>, vector<32x1xi32>
    %c7_i32 = arith.constant 7 : i32
    %37 = vector.broadcast %c7_i32 : i32 to vector<32x1xi32>
    %38 = arith.cmpi eq, %0, %37 : vector<32x1xi32>
    %c3_11 = arith.constant 3 : index
    %c2_12 = arith.constant 2 : index
    %39 = memref.load %arg1[%c3_11, %c2_12] : memref<4x10xi32, #tpu.memory_space<smem>>
    %40 = vector.broadcast %39 : i32 to vector<32x1xi32>
    %41 = arith.select %38, %40, %36 : vector<32x1xi1>, vector<32x1xi32>
    %c8_i32 = arith.constant 8 : i32
    %42 = vector.broadcast %c8_i32 : i32 to vector<32x1xi32>
    %43 = arith.cmpi eq, %0, %42 : vector<32x1xi32>
    %c0_13 = arith.constant 0 : index
    %c3_14 = arith.constant 3 : index
    %44 = memref.load %arg1[%c0_13, %c3_14] : memref<4x10xi32, #tpu.memory_space<smem>>
    %45 = vector.broadcast %44 : i32 to vector<32x1xi32>
    %46 = arith.select %43, %45, %41 : vector<32x1xi1>, vector<32x1xi32>
    %c9_i32 = arith.constant 9 : i32
    %47 = vector.broadcast %c9_i32 : i32 to vector<32x1xi32>
    %48 = arith.cmpi eq, %0, %47 : vector<32x1xi32>
    %c1_15 = arith.constant 1 : index
    %c3_16 = arith.constant 3 : index
    %49 = memref.load %arg1[%c1_15, %c3_16] : memref<4x10xi32, #tpu.memory_space<smem>>
    %50 = vector.broadcast %49 : i32 to vector<32x1xi32>
    %51 = arith.select %48, %50, %46 : vector<32x1xi1>, vector<32x1xi32>
    %c10_i32 = arith.constant 10 : i32
    %52 = vector.broadcast %c10_i32 : i32 to vector<32x1xi32>
    %53 = arith.cmpi eq, %0, %52 : vector<32x1xi32>
    %c2_17 = arith.constant 2 : index
    %c3_18 = arith.constant 3 : index
    %54 = memref.load %arg1[%c2_17, %c3_18] : memref<4x10xi32, #tpu.memory_space<smem>>
    %55 = vector.broadcast %54 : i32 to vector<32x1xi32>
    %56 = arith.select %53, %55, %51 : vector<32x1xi1>, vector<32x1xi32>
    %c11_i32 = arith.constant 11 : i32
    %57 = vector.broadcast %c11_i32 : i32 to vector<32x1xi32>
    %58 = arith.cmpi eq, %0, %57 : vector<32x1xi32>
    %c3_19 = arith.constant 3 : index
    %c3_20 = arith.constant 3 : index
    %59 = memref.load %arg1[%c3_19, %c3_20] : memref<4x10xi32, #tpu.memory_space<smem>>
    %60 = vector.broadcast %59 : i32 to vector<32x1xi32>
    %61 = arith.select %58, %60, %56 : vector<32x1xi1>, vector<32x1xi32>
    %c12_i32 = arith.constant 12 : i32
    %62 = vector.broadcast %c12_i32 : i32 to vector<32x1xi32>
    %63 = arith.cmpi eq, %0, %62 : vector<32x1xi32>
    %c0_21 = arith.constant 0 : index
    %c4 = arith.constant 4 : index
    %64 = memref.load %arg1[%c0_21, %c4] : memref<4x10xi32, #tpu.memory_space<smem>>
    %65 = vector.broadcast %64 : i32 to vector<32x1xi32>
    %66 = arith.select %63, %65, %61 : vector<32x1xi1>, vector<32x1xi32>
    %c13_i32 = arith.constant 13 : i32
    %67 = vector.broadcast %c13_i32 : i32 to vector<32x1xi32>
    %68 = arith.cmpi eq, %0, %67 : vector<32x1xi32>
    %c1_22 = arith.constant 1 : index
    %c4_23 = arith.constant 4 : index
    %69 = memref.load %arg1[%c1_22, %c4_23] : memref<4x10xi32, #tpu.memory_space<smem>>
    %70 = vector.broadcast %69 : i32 to vector<32x1xi32>
    %71 = arith.select %68, %70, %66 : vector<32x1xi1>, vector<32x1xi32>
    %c14_i32 = arith.constant 14 : i32
    %72 = vector.broadcast %c14_i32 : i32 to vector<32x1xi32>
    %73 = arith.cmpi eq, %0, %72 : vector<32x1xi32>
    %c2_24 = arith.constant 2 : index
    %c4_25 = arith.constant 4 : index
    %74 = memref.load %arg1[%c2_24, %c4_25] : memref<4x10xi32, #tpu.memory_space<smem>>
    %75 = vector.broadcast %74 : i32 to vector<32x1xi32>
    %76 = arith.select %73, %75, %71 : vector<32x1xi1>, vector<32x1xi32>
    %c15_i32 = arith.constant 15 : i32
    %77 = vector.broadcast %c15_i32 : i32 to vector<32x1xi32>
    %78 = arith.cmpi eq, %0, %77 : vector<32x1xi32>
    %c3_26 = arith.constant 3 : index
    %c4_27 = arith.constant 4 : index
    %79 = memref.load %arg1[%c3_26, %c4_27] : memref<4x10xi32, #tpu.memory_space<smem>>
    %80 = vector.broadcast %79 : i32 to vector<32x1xi32>
    %81 = arith.select %78, %80, %76 : vector<32x1xi1>, vector<32x1xi32>
    %c16_i32 = arith.constant 16 : i32
    %82 = vector.broadcast %c16_i32 : i32 to vector<32x1xi32>
    %83 = arith.cmpi eq, %0, %82 : vector<32x1xi32>
    %c0_28 = arith.constant 0 : index
    %c5 = arith.constant 5 : index
    %84 = memref.load %arg1[%c0_28, %c5] : memref<4x10xi32, #tpu.memory_space<smem>>
    %85 = vector.broadcast %84 : i32 to vector<32x1xi32>
    %86 = arith.select %83, %85, %81 : vector<32x1xi1>, vector<32x1xi32>
    %c17_i32 = arith.constant 17 : i32
    %87 = vector.broadcast %c17_i32 : i32 to vector<32x1xi32>
    %88 = arith.cmpi eq, %0, %87 : vector<32x1xi32>
    %c1_29 = arith.constant 1 : index
    %c5_30 = arith.constant 5 : index
    %89 = memref.load %arg1[%c1_29, %c5_30] : memref<4x10xi32, #tpu.memory_space<smem>>
    %90 = vector.broadcast %89 : i32 to vector<32x1xi32>
    %91 = arith.select %88, %90, %86 : vector<32x1xi1>, vector<32x1xi32>
    %c18_i32 = arith.constant 18 : i32
    %92 = vector.broadcast %c18_i32 : i32 to vector<32x1xi32>
    %93 = arith.cmpi eq, %0, %92 : vector<32x1xi32>
    %c2_31 = arith.constant 2 : index
    %c5_32 = arith.constant 5 : index
    %94 = memref.load %arg1[%c2_31, %c5_32] : memref<4x10xi32, #tpu.memory_space<smem>>
    %95 = vector.broadcast %94 : i32 to vector<32x1xi32>
    %96 = arith.select %93, %95, %91 : vector<32x1xi1>, vector<32x1xi32>
    %c19_i32 = arith.constant 19 : i32
    %97 = vector.broadcast %c19_i32 : i32 to vector<32x1xi32>
    %98 = arith.cmpi eq, %0, %97 : vector<32x1xi32>
    %c3_33 = arith.constant 3 : index
    %c5_34 = arith.constant 5 : index
    %99 = memref.load %arg1[%c3_33, %c5_34] : memref<4x10xi32, #tpu.memory_space<smem>>
    %100 = vector.broadcast %99 : i32 to vector<32x1xi32>
    %101 = arith.select %98, %100, %96 : vector<32x1xi1>, vector<32x1xi32>
    %c20_i32 = arith.constant 20 : i32
    %102 = vector.broadcast %c20_i32 : i32 to vector<32x1xi32>
    %103 = arith.cmpi eq, %0, %102 : vector<32x1xi32>
    %c0_35 = arith.constant 0 : index
    %c6 = arith.constant 6 : index
    %104 = memref.load %arg1[%c0_35, %c6] : memref<4x10xi32, #tpu.memory_space<smem>>
    %105 = vector.broadcast %104 : i32 to vector<32x1xi32>
    %106 = arith.select %103, %105, %101 : vector<32x1xi1>, vector<32x1xi32>
    %c21_i32 = arith.constant 21 : i32
    %107 = vector.broadcast %c21_i32 : i32 to vector<32x1xi32>
    %108 = arith.cmpi eq, %0, %107 : vector<32x1xi32>
    %c1_36 = arith.constant 1 : index
    %c6_37 = arith.constant 6 : index
    %109 = memref.load %arg1[%c1_36, %c6_37] : memref<4x10xi32, #tpu.memory_space<smem>>
    %110 = vector.broadcast %109 : i32 to vector<32x1xi32>
    %111 = arith.select %108, %110, %106 : vector<32x1xi1>, vector<32x1xi32>
    %c22_i32 = arith.constant 22 : i32
    %112 = vector.broadcast %c22_i32 : i32 to vector<32x1xi32>
    %113 = arith.cmpi eq, %0, %112 : vector<32x1xi32>
    %c2_38 = arith.constant 2 : index
    %c6_39 = arith.constant 6 : index
    %114 = memref.load %arg1[%c2_38, %c6_39] : memref<4x10xi32, #tpu.memory_space<smem>>
    %115 = vector.broadcast %114 : i32 to vector<32x1xi32>
    %116 = arith.select %113, %115, %111 : vector<32x1xi1>, vector<32x1xi32>
    %c23_i32 = arith.constant 23 : i32
    %117 = vector.broadcast %c23_i32 : i32 to vector<32x1xi32>
    %118 = arith.cmpi eq, %0, %117 : vector<32x1xi32>
    %c3_40 = arith.constant 3 : index
    %c6_41 = arith.constant 6 : index
    %119 = memref.load %arg1[%c3_40, %c6_41] : memref<4x10xi32, #tpu.memory_space<smem>>
    %120 = vector.broadcast %119 : i32 to vector<32x1xi32>
    %121 = arith.select %118, %120, %116 : vector<32x1xi1>, vector<32x1xi32>
    %c24_i32 = arith.constant 24 : i32
    %122 = vector.broadcast %c24_i32 : i32 to vector<32x1xi32>
    %123 = arith.cmpi eq, %0, %122 : vector<32x1xi32>
    %c0_42 = arith.constant 0 : index
    %c7 = arith.constant 7 : index
    %124 = memref.load %arg1[%c0_42, %c7] : memref<4x10xi32, #tpu.memory_space<smem>>
    %125 = vector.broadcast %124 : i32 to vector<32x1xi32>
    %126 = arith.select %123, %125, %121 : vector<32x1xi1>, vector<32x1xi32>
    %c25_i32 = arith.constant 25 : i32
    %127 = vector.broadcast %c25_i32 : i32 to vector<32x1xi32>
    %128 = arith.cmpi eq, %0, %127 : vector<32x1xi32>
    %c1_43 = arith.constant 1 : index
    %c7_44 = arith.constant 7 : index
    %129 = memref.load %arg1[%c1_43, %c7_44] : memref<4x10xi32, #tpu.memory_space<smem>>
    %130 = vector.broadcast %129 : i32 to vector<32x1xi32>
    %131 = arith.select %128, %130, %126 : vector<32x1xi1>, vector<32x1xi32>
    %c26_i32 = arith.constant 26 : i32
    %132 = vector.broadcast %c26_i32 : i32 to vector<32x1xi32>
    %133 = arith.cmpi eq, %0, %132 : vector<32x1xi32>
    %c2_45 = arith.constant 2 : index
    %c7_46 = arith.constant 7 : index
    %134 = memref.load %arg1[%c2_45, %c7_46] : memref<4x10xi32, #tpu.memory_space<smem>>
    %135 = vector.broadcast %134 : i32 to vector<32x1xi32>
    %136 = arith.select %133, %135, %131 : vector<32x1xi1>, vector<32x1xi32>
    %c27_i32 = arith.constant 27 : i32
    %137 = vector.broadcast %c27_i32 : i32 to vector<32x1xi32>
    %138 = arith.cmpi eq, %0, %137 : vector<32x1xi32>
    %c3_47 = arith.constant 3 : index
    %c7_48 = arith.constant 7 : index
    %139 = memref.load %arg1[%c3_47, %c7_48] : memref<4x10xi32, #tpu.memory_space<smem>>
    %140 = vector.broadcast %139 : i32 to vector<32x1xi32>
    %141 = arith.select %138, %140, %136 : vector<32x1xi1>, vector<32x1xi32>
    %c28_i32 = arith.constant 28 : i32
    %142 = vector.broadcast %c28_i32 : i32 to vector<32x1xi32>
    %143 = arith.cmpi eq, %0, %142 : vector<32x1xi32>
    %c0_49 = arith.constant 0 : index
    %c8 = arith.constant 8 : index
    %144 = memref.load %arg1[%c0_49, %c8] : memref<4x10xi32, #tpu.memory_space<smem>>
    %145 = vector.broadcast %144 : i32 to vector<32x1xi32>
    %146 = arith.select %143, %145, %141 : vector<32x1xi1>, vector<32x1xi32>
    %c29_i32 = arith.constant 29 : i32
    %147 = vector.broadcast %c29_i32 : i32 to vector<32x1xi32>
    %148 = arith.cmpi eq, %0, %147 : vector<32x1xi32>
    %c1_50 = arith.constant 1 : index
    %c8_51 = arith.constant 8 : index
    %149 = memref.load %arg1[%c1_50, %c8_51] : memref<4x10xi32, #tpu.memory_space<smem>>
    %150 = vector.broadcast %149 : i32 to vector<32x1xi32>
    %151 = arith.select %148, %150, %146 : vector<32x1xi1>, vector<32x1xi32>
    %c30_i32 = arith.constant 30 : i32
    %152 = vector.broadcast %c30_i32 : i32 to vector<32x1xi32>
    %153 = arith.cmpi eq, %0, %152 : vector<32x1xi32>
    %c2_52 = arith.constant 2 : index
    %c8_53 = arith.constant 8 : index
    %154 = memref.load %arg1[%c2_52, %c8_53] : memref<4x10xi32, #tpu.memory_space<smem>>
    %155 = vector.broadcast %154 : i32 to vector<32x1xi32>
    %156 = arith.select %153, %155, %151 : vector<32x1xi1>, vector<32x1xi32>
    %c31_i32 = arith.constant 31 : i32
    %157 = vector.broadcast %c31_i32 : i32 to vector<32x1xi32>
    %158 = arith.cmpi eq, %0, %157 : vector<32x1xi32>
    %c3_54 = arith.constant 3 : index
    %c8_55 = arith.constant 8 : index
    %159 = memref.load %arg1[%c3_54, %c8_55] : memref<4x10xi32, #tpu.memory_space<smem>>
    %160 = vector.broadcast %159 : i32 to vector<32x1xi32>
    %161 = arith.select %158, %160, %156 : vector<32x1xi1>, vector<32x1xi32>
    %162 = tpu.iota {dimensions = array<i32: 1>} : vector<32x64xi32>
    %163 = vector.broadcast %161 : vector<32x1xi32> to vector<32x64xi32>
    %164 = arith.cmpi eq, %162, %163 : vector<32x64xi32>
    %165 = arith.extui %164 : vector<32x64xi1> to vector<32x64xi32>
    %166 = arith.sitofp %165 : vector<32x64xi32> to vector<32x64xf32>
    %c0_56 = arith.constant 0 : index
    %c0_57 = arith.constant 0 : index
    %167 = vector.load %arg2[%c0_56, %c0_57] : memref<64x32xf32, #tpu.memory_space<vmem>>, vector<64x32xf32>
    %cst = arith.constant dense<0.000000e+00> : vector<32x32xf32>
    %168 = tpu.matmul %166, %167, %cst {dimension_numbers = #tpu.dot_dimension_numbers<[1], [0], [0], [1], [0, 0, 1, 1], [], []>} : vector<32x64xf32>, vector<64x32xf32>, vector<32x32xf32> -> vector<32x32xf32>
    %c0_58 = arith.constant 0 : index
    %c0_59 = arith.constant 0 : index
    %169 = vector.load %arg3[%c0_58, %c0_59] : memref<32x165xf32, #tpu.memory_space<vmem>>, vector<32x165xf32>
    %c0_60 = arith.constant 0 : index
    %c0_61 = arith.constant 0 : index
    %170 = vector.load %arg4[%c0_60, %c0_61] : memref<6x165xf32, #tpu.memory_space<vmem>>, vector<6x165xf32>
    %171 = vector.extract_strided_slice %169 {offsets = [0, 0], sizes = [32, 128], strides = [1, 1]} : vector<32x165xf32> to vector<32x128xf32>
    %172 = vector.extract_strided_slice %169 {offsets = [0, 128], sizes = [32, 32], strides = [1, 1]} : vector<32x165xf32> to vector<32x32xf32>
    %173 = vector.extract_strided_slice %169 {offsets = [0, 160], sizes = [32, 5], strides = [1, 1]} : vector<32x165xf32> to vector<32x5xf32>
    %174 = vector.extract_strided_slice %170 {offsets = [0, 0], sizes = [1, 165], strides = [1, 1]} : vector<6x165xf32> to vector<1x165xf32>
    %175 = vector.extract_strided_slice %174 {offsets = [0, 0], sizes = [1, 128], strides = [1, 1]} : vector<1x165xf32> to vector<1x128xf32>
    %176 = vector.extract_strided_slice %174 {offsets = [0, 128], sizes = [1, 32], strides = [1, 1]} : vector<1x165xf32> to vector<1x32xf32>
    %177 = vector.extract_strided_slice %174 {offsets = [0, 160], sizes = [1, 5], strides = [1, 1]} : vector<1x165xf32> to vector<1x5xf32>
    %178 = vector.extract_strided_slice %170 {offsets = [1, 0], sizes = [5, 5], strides = [1, 1]} : vector<6x165xf32> to vector<5x5xf32>
    %179 = vector.extract_strided_slice %170 {offsets = [5, 0], sizes = [1, 5], strides = [1, 1]} : vector<6x165xf32> to vector<1x5xf32>
    %cst_62 = arith.constant dense<0.000000e+00> : vector<32x32xf32>
    %180 = tpu.matmul %168, %172, %cst_62 {dimension_numbers = #tpu.dot_dimension_numbers<[1], [0], [0], [1], [0, 0, 1, 1], [], []>} : vector<32x32xf32>, vector<32x32xf32>, vector<32x32xf32> -> vector<32x32xf32>
    %181 = vector.broadcast %176 : vector<1x32xf32> to vector<32x32xf32>
    %182 = arith.addf %180, %181 : vector<32x32xf32>
    %183 = math.tanh %182 : vector<32x32xf32>
    %cst_63 = arith.constant dense<0.000000e+00> : vector<32x128xf32>
    %184 = tpu.matmul %183, %171, %cst_63 {dimension_numbers = #tpu.dot_dimension_numbers<[1], [0], [0], [1], [0, 0, 1, 1], [], []>} : vector<32x32xf32>, vector<32x128xf32>, vector<32x128xf32> -> vector<32x128xf32>
    %185 = vector.broadcast %175 : vector<1x128xf32> to vector<32x128xf32>
    %186 = arith.addf %184, %185 : vector<32x128xf32>
    %187 = vector.extract_strided_slice %186 {offsets = [0, 0], sizes = [32, 32], strides = [1, 1]} : vector<32x128xf32> to vector<32x32xf32>
    %188 = arith.negf %187 : vector<32x32xf32>
    %189 = math.exp %188 : vector<32x32xf32>
    %cst_64 = arith.constant 1.000000e+00 : f32
    %190 = vector.broadcast %cst_64 : f32 to vector<32x32xf32>
    %191 = arith.addf %190, %189 : vector<32x32xf32>
    %192 = arith.divf %190, %191 : vector<32x32xf32>
    %193 = vector.extract_strided_slice %186 {offsets = [0, 64], sizes = [32, 32], strides = [1, 1]} : vector<32x128xf32> to vector<32x32xf32>
    %194 = math.tanh %193 : vector<32x32xf32>
    %195 = vector.extract_strided_slice %186 {offsets = [0, 96], sizes = [32, 32], strides = [1, 1]} : vector<32x128xf32> to vector<32x32xf32>
    %196 = arith.negf %195 : vector<32x32xf32>
    %197 = math.exp %196 : vector<32x32xf32>
    %cst_65 = arith.constant 1.000000e+00 : f32
    %198 = vector.broadcast %cst_65 : f32 to vector<32x32xf32>
    %199 = arith.addf %198, %197 : vector<32x32xf32>
    %200 = arith.divf %198, %199 : vector<32x32xf32>
    %201 = arith.mulf %192, %194 : vector<32x32xf32>
    %202 = math.tanh %201 : vector<32x32xf32>
    %203 = arith.mulf %200, %202 : vector<32x32xf32>
    %cst_66 = arith.constant dense<0.000000e+00> : vector<32x5xf32>
    %204 = tpu.matmul %203, %173, %cst_66 {dimension_numbers = #tpu.dot_dimension_numbers<[1], [0], [0], [1], [0, 0, 1, 1], [], []>} : vector<32x32xf32>, vector<32x5xf32>, vector<32x5xf32> -> vector<32x5xf32>
    %205 = vector.broadcast %177 : vector<1x5xf32> to vector<32x5xf32>
    %206 = arith.addf %204, %205 : vector<32x5xf32>
    %207 = tpu.iota {dimensions = array<i32: 1>} : vector<4x5xi32>
    %208 = tpu.iota {dimensions = array<i32: 2>} : vector<4x5x5xi32>
    %c3_i32_67 = arith.constant 3 : i32
    %209 = vector.broadcast %c3_i32_67 : i32 to vector<4x5xi32>
    %210 = arith.cmpi eq, %207, %209 : vector<4x5xi32>
    %cst_68 = arith.constant 0.000000e+00 : f32
    %211 = vector.broadcast %cst_68 : f32 to vector<4x5xf32>
    %cst_69 = arith.constant -1.000000e+04 : f32
    %212 = vector.broadcast %cst_69 : f32 to vector<4x5xf32>
    %213 = arith.select %210, %211, %212 : vector<4x5xi1>, vector<4x5xf32>
    %214 = vector.shape_cast %178 : vector<5x5xf32> to vector<1x5x5xf32>
    %215 = vector.shape_cast %213 : vector<4x5xf32> to vector<4x1x5xf32>
    %216 = vector.broadcast %215 : vector<4x1x5xf32> to vector<4x5x5xf32>
    %217 = vector.broadcast %214 : vector<1x5x5xf32> to vector<4x5x5xf32>
    %218 = arith.addf %216, %217 : vector<4x5x5xf32>
    %cst_70 = arith.constant dense<0xFF800000> : vector<4x5xf32>
    %219 = vector.multi_reduction <maximumf>, %218, %cst_70 [2] : vector<4x5x5xf32> to vector<4x5xf32>
    %220 = vector.shape_cast %219 : vector<4x5xf32> to vector<4x5x1xf32>
    %221 = vector.broadcast %220 : vector<4x5x1xf32> to vector<4x5x5xf32>
    %222 = arith.cmpf oeq, %218, %221 : vector<4x5x5xf32>
    %c5_i32_71 = arith.constant 5 : i32
    %223 = vector.broadcast %c5_i32_71 : i32 to vector<4x5x5xi32>
    %224 = arith.select %222, %208, %223 : vector<4x5x5xi1>, vector<4x5x5xi32>
    %cst_72 = arith.constant dense<2147483647> : vector<4x5xi32>
    %225 = vector.multi_reduction <minsi>, %224, %cst_72 [2] : vector<4x5x5xi32> to vector<4x5xi32>
    %226 = vector.shape_cast %220 : vector<4x5x1xf32> to vector<4x5xf32>
    %227 = vector.extract_strided_slice %206 {offsets = [0, 0], sizes = [4, 5], strides = [1, 1]} : vector<32x5xf32> to vector<4x5xf32>
    %228 = arith.addf %226, %227 : vector<4x5xf32>
    %229 = vector.shape_cast %228 : vector<4x5xf32> to vector<4x1x5xf32>
    %230 = vector.broadcast %229 : vector<4x1x5xf32> to vector<4x5x5xf32>
    %231 = vector.broadcast %214 : vector<1x5x5xf32> to vector<4x5x5xf32>
    %232 = arith.addf %230, %231 : vector<4x5x5xf32>
    %cst_73 = arith.constant dense<0xFF800000> : vector<4x5xf32>
    %233 = vector.multi_reduction <maximumf>, %232, %cst_73 [2] : vector<4x5x5xf32> to vector<4x5xf32>
    %234 = vector.shape_cast %233 : vector<4x5xf32> to vector<4x5x1xf32>
    %235 = vector.broadcast %234 : vector<4x5x1xf32> to vector<4x5x5xf32>
    %236 = arith.cmpf oeq, %232, %235 : vector<4x5x5xf32>
    %c5_i32_74 = arith.constant 5 : i32
    %237 = vector.broadcast %c5_i32_74 : i32 to vector<4x5x5xi32>
    %238 = arith.select %236, %208, %237 : vector<4x5x5xi1>, vector<4x5x5xi32>
    %cst_75 = arith.constant dense<2147483647> : vector<4x5xi32>
    %239 = vector.multi_reduction <minsi>, %238, %cst_75 [2] : vector<4x5x5xi32> to vector<4x5xi32>
    %240 = vector.shape_cast %234 : vector<4x5x1xf32> to vector<4x5xf32>
    %241 = vector.extract_strided_slice %206 {offsets = [4, 0], sizes = [4, 5], strides = [1, 1]} : vector<32x5xf32> to vector<4x5xf32>
    %242 = arith.addf %240, %241 : vector<4x5xf32>
    %243 = vector.shape_cast %242 : vector<4x5xf32> to vector<4x1x5xf32>
    %244 = vector.broadcast %243 : vector<4x1x5xf32> to vector<4x5x5xf32>
    %245 = vector.broadcast %214 : vector<1x5x5xf32> to vector<4x5x5xf32>
    %246 = arith.addf %244, %245 : vector<4x5x5xf32>
    %cst_76 = arith.constant dense<0xFF800000> : vector<4x5xf32>
    %247 = vector.multi_reduction <maximumf>, %246, %cst_76 [2] : vector<4x5x5xf32> to vector<4x5xf32>
    %248 = vector.shape_cast %247 : vector<4x5xf32> to vector<4x5x1xf32>
    %249 = vector.broadcast %248 : vector<4x5x1xf32> to vector<4x5x5xf32>
    %250 = arith.cmpf oeq, %246, %249 : vector<4x5x5xf32>
    %c5_i32_77 = arith.constant 5 : i32
    %251 = vector.broadcast %c5_i32_77 : i32 to vector<4x5x5xi32>
    %252 = arith.select %250, %208, %251 : vector<4x5x5xi1>, vector<4x5x5xi32>
    %cst_78 = arith.constant dense<2147483647> : vector<4x5xi32>
    %253 = vector.multi_reduction <minsi>, %252, %cst_78 [2] : vector<4x5x5xi32> to vector<4x5xi32>
    %254 = vector.shape_cast %248 : vector<4x5x1xf32> to vector<4x5xf32>
    %255 = vector.extract_strided_slice %206 {offsets = [8, 0], sizes = [4, 5], strides = [1, 1]} : vector<32x5xf32> to vector<4x5xf32>
    %256 = arith.addf %254, %255 : vector<4x5xf32>
    %257 = vector.shape_cast %256 : vector<4x5xf32> to vector<4x1x5xf32>
    %258 = vector.broadcast %257 : vector<4x1x5xf32> to vector<4x5x5xf32>
    %259 = vector.broadcast %214 : vector<1x5x5xf32> to vector<4x5x5xf32>
    %260 = arith.addf %258, %259 : vector<4x5x5xf32>
    %cst_79 = arith.constant dense<0xFF800000> : vector<4x5xf32>
    %261 = vector.multi_reduction <maximumf>, %260, %cst_79 [2] : vector<4x5x5xf32> to vector<4x5xf32>
    %262 = vector.shape_cast %261 : vector<4x5xf32> to vector<4x5x1xf32>
    %263 = vector.broadcast %262 : vector<4x5x1xf32> to vector<4x5x5xf32>
    %264 = arith.cmpf oeq, %260, %263 : vector<4x5x5xf32>
    %c5_i32_80 = arith.constant 5 : i32
    %265 = vector.broadcast %c5_i32_80 : i32 to vector<4x5x5xi32>
    %266 = arith.select %264, %208, %265 : vector<4x5x5xi1>, vector<4x5x5xi32>
    %cst_81 = arith.constant dense<2147483647> : vector<4x5xi32>
    %267 = vector.multi_reduction <minsi>, %266, %cst_81 [2] : vector<4x5x5xi32> to vector<4x5xi32>
    %268 = vector.shape_cast %262 : vector<4x5x1xf32> to vector<4x5xf32>
    %269 = vector.extract_strided_slice %206 {offsets = [12, 0], sizes = [4, 5], strides = [1, 1]} : vector<32x5xf32> to vector<4x5xf32>
    %270 = arith.addf %268, %269 : vector<4x5xf32>
    %271 = vector.shape_cast %270 : vector<4x5xf32> to vector<4x1x5xf32>
    %272 = vector.broadcast %271 : vector<4x1x5xf32> to vector<4x5x5xf32>
    %273 = vector.broadcast %214 : vector<1x5x5xf32> to vector<4x5x5xf32>
    %274 = arith.addf %272, %273 : vector<4x5x5xf32>
    %cst_82 = arith.constant dense<0xFF800000> : vector<4x5xf32>
    %275 = vector.multi_reduction <maximumf>, %274, %cst_82 [2] : vector<4x5x5xf32> to vector<4x5xf32>
    %276 = vector.shape_cast %275 : vector<4x5xf32> to vector<4x5x1xf32>
    %277 = vector.broadcast %276 : vector<4x5x1xf32> to vector<4x5x5xf32>
    %278 = arith.cmpf oeq, %274, %277 : vector<4x5x5xf32>
    %c5_i32_83 = arith.constant 5 : i32
    %279 = vector.broadcast %c5_i32_83 : i32 to vector<4x5x5xi32>
    %280 = arith.select %278, %208, %279 : vector<4x5x5xi1>, vector<4x5x5xi32>
    %cst_84 = arith.constant dense<2147483647> : vector<4x5xi32>
    %281 = vector.multi_reduction <minsi>, %280, %cst_84 [2] : vector<4x5x5xi32> to vector<4x5xi32>
    %282 = vector.shape_cast %276 : vector<4x5x1xf32> to vector<4x5xf32>
    %283 = vector.extract_strided_slice %206 {offsets = [16, 0], sizes = [4, 5], strides = [1, 1]} : vector<32x5xf32> to vector<4x5xf32>
    %284 = arith.addf %282, %283 : vector<4x5xf32>
    %285 = vector.shape_cast %284 : vector<4x5xf32> to vector<4x1x5xf32>
    %286 = vector.broadcast %285 : vector<4x1x5xf32> to vector<4x5x5xf32>
    %287 = vector.broadcast %214 : vector<1x5x5xf32> to vector<4x5x5xf32>
    %288 = arith.addf %286, %287 : vector<4x5x5xf32>
    %cst_85 = arith.constant dense<0xFF800000> : vector<4x5xf32>
    %289 = vector.multi_reduction <maximumf>, %288, %cst_85 [2] : vector<4x5x5xf32> to vector<4x5xf32>
    %290 = vector.shape_cast %289 : vector<4x5xf32> to vector<4x5x1xf32>
    %291 = vector.broadcast %290 : vector<4x5x1xf32> to vector<4x5x5xf32>
    %292 = arith.cmpf oeq, %288, %291 : vector<4x5x5xf32>
    %c5_i32_86 = arith.constant 5 : i32
    %293 = vector.broadcast %c5_i32_86 : i32 to vector<4x5x5xi32>
    %294 = arith.select %292, %208, %293 : vector<4x5x5xi1>, vector<4x5x5xi32>
    %cst_87 = arith.constant dense<2147483647> : vector<4x5xi32>
    %295 = vector.multi_reduction <minsi>, %294, %cst_87 [2] : vector<4x5x5xi32> to vector<4x5xi32>
    %296 = vector.shape_cast %290 : vector<4x5x1xf32> to vector<4x5xf32>
    %297 = vector.extract_strided_slice %206 {offsets = [20, 0], sizes = [4, 5], strides = [1, 1]} : vector<32x5xf32> to vector<4x5xf32>
    %298 = arith.addf %296, %297 : vector<4x5xf32>
    %299 = vector.shape_cast %298 : vector<4x5xf32> to vector<4x1x5xf32>
    %300 = vector.broadcast %299 : vector<4x1x5xf32> to vector<4x5x5xf32>
    %301 = vector.broadcast %214 : vector<1x5x5xf32> to vector<4x5x5xf32>
    %302 = arith.addf %300, %301 : vector<4x5x5xf32>
    %cst_88 = arith.constant dense<0xFF800000> : vector<4x5xf32>
    %303 = vector.multi_reduction <maximumf>, %302, %cst_88 [2] : vector<4x5x5xf32> to vector<4x5xf32>
    %304 = vector.shape_cast %303 : vector<4x5xf32> to vector<4x5x1xf32>
    %305 = vector.broadcast %304 : vector<4x5x1xf32> to vector<4x5x5xf32>
    %306 = arith.cmpf oeq, %302, %305 : vector<4x5x5xf32>
    %c5_i32_89 = arith.constant 5 : i32
    %307 = vector.broadcast %c5_i32_89 : i32 to vector<4x5x5xi32>
    %308 = arith.select %306, %208, %307 : vector<4x5x5xi1>, vector<4x5x5xi32>
    %cst_90 = arith.constant dense<2147483647> : vector<4x5xi32>
    %309 = vector.multi_reduction <minsi>, %308, %cst_90 [2] : vector<4x5x5xi32> to vector<4x5xi32>
    %310 = vector.shape_cast %304 : vector<4x5x1xf32> to vector<4x5xf32>
    %311 = vector.extract_strided_slice %206 {offsets = [24, 0], sizes = [4, 5], strides = [1, 1]} : vector<32x5xf32> to vector<4x5xf32>
    %312 = arith.addf %310, %311 : vector<4x5xf32>
    %313 = vector.shape_cast %312 : vector<4x5xf32> to vector<4x1x5xf32>
    %314 = vector.broadcast %313 : vector<4x1x5xf32> to vector<4x5x5xf32>
    %315 = vector.broadcast %214 : vector<1x5x5xf32> to vector<4x5x5xf32>
    %316 = arith.addf %314, %315 : vector<4x5x5xf32>
    %cst_91 = arith.constant dense<0xFF800000> : vector<4x5xf32>
    %317 = vector.multi_reduction <maximumf>, %316, %cst_91 [2] : vector<4x5x5xf32> to vector<4x5xf32>
    %318 = vector.shape_cast %317 : vector<4x5xf32> to vector<4x5x1xf32>
    %319 = vector.broadcast %318 : vector<4x5x1xf32> to vector<4x5x5xf32>
    %320 = arith.cmpf oeq, %316, %319 : vector<4x5x5xf32>
    %c5_i32_92 = arith.constant 5 : i32
    %321 = vector.broadcast %c5_i32_92 : i32 to vector<4x5x5xi32>
    %322 = arith.select %320, %208, %321 : vector<4x5x5xi1>, vector<4x5x5xi32>
    %cst_93 = arith.constant dense<2147483647> : vector<4x5xi32>
    %323 = vector.multi_reduction <minsi>, %322, %cst_93 [2] : vector<4x5x5xi32> to vector<4x5xi32>
    %324 = vector.shape_cast %318 : vector<4x5x1xf32> to vector<4x5xf32>
    %325 = vector.extract_strided_slice %206 {offsets = [28, 0], sizes = [4, 5], strides = [1, 1]} : vector<32x5xf32> to vector<4x5xf32>
    %326 = arith.addf %324, %325 : vector<4x5xf32>
    %327 = vector.broadcast %179 : vector<1x5xf32> to vector<4x5xf32>
    %328 = arith.addf %326, %327 : vector<4x5xf32>
    %cst_94 = arith.constant dense<0xFF800000> : vector<4xf32>
    %329 = vector.multi_reduction <maximumf>, %328, %cst_94 [1] : vector<4x5xf32> to vector<4xf32>
    %330 = vector.shape_cast %329 : vector<4xf32> to vector<4x1xf32>
    %331 = vector.broadcast %330 : vector<4x1xf32> to vector<4x5xf32>
    %332 = arith.cmpf oeq, %328, %331 : vector<4x5xf32>
    %c5_i32_95 = arith.constant 5 : i32
    %333 = vector.broadcast %c5_i32_95 : i32 to vector<4x5xi32>
    %334 = arith.select %332, %207, %333 : vector<4x5xi1>, vector<4x5xi32>
    %cst_96 = arith.constant dense<2147483647> : vector<4xi32>
    %335 = vector.multi_reduction <minsi>, %334, %cst_96 [1] : vector<4x5xi32> to vector<4xi32>
    %336 = vector.shape_cast %335 : vector<4xi32> to vector<4x1xi32>
    %337 = tpu.iota {dimensions = array<i32: 1>} : vector<4x128xi32>
    %c7_i32_97 = arith.constant 7 : i32
    %338 = vector.broadcast %c7_i32_97 : i32 to vector<4x128xi32>
    %339 = arith.cmpi eq, %337, %338 : vector<4x128xi32>
    %c0_i32_98 = arith.constant 0 : i32
    %340 = vector.broadcast %c0_i32_98 : i32 to vector<4x128xi32>
    %341 = vector.shape_cast %336 : vector<4x1xi32> to vector<4x1xi32>
    %342 = vector.broadcast %341 : vector<4x1xi32> to vector<4x128xi32>
    %343 = arith.select %339, %342, %340 : vector<4x128xi1>, vector<4x128xi32>
    %344 = vector.broadcast %336 : vector<4x1xi32> to vector<4x5xi32>
    %345 = arith.cmpi eq, %207, %344 : vector<4x5xi32>
    %c0_i32_99 = arith.constant 0 : i32
    %346 = vector.broadcast %c0_i32_99 : i32 to vector<4x5xi32>
    %347 = arith.select %345, %323, %346 : vector<4x5xi1>, vector<4x5xi32>
    %cst_100 = arith.constant dense<0> : vector<4xi32>
    %348 = vector.multi_reduction <add>, %347, %cst_100 [1] : vector<4x5xi32> to vector<4xi32>
    %349 = vector.shape_cast %348 : vector<4xi32> to vector<4x1xi32>
    %c6_i32_101 = arith.constant 6 : i32
    %350 = vector.broadcast %c6_i32_101 : i32 to vector<4x128xi32>
    %351 = arith.cmpi eq, %337, %350 : vector<4x128xi32>
    %352 = vector.shape_cast %349 : vector<4x1xi32> to vector<4x1xi32>
    %353 = vector.broadcast %352 : vector<4x1xi32> to vector<4x128xi32>
    %354 = arith.select %351, %353, %343 : vector<4x128xi1>, vector<4x128xi32>
    %355 = vector.broadcast %349 : vector<4x1xi32> to vector<4x5xi32>
    %356 = arith.cmpi eq, %207, %355 : vector<4x5xi32>
    %c0_i32_102 = arith.constant 0 : i32
    %357 = vector.broadcast %c0_i32_102 : i32 to vector<4x5xi32>
    %358 = arith.select %356, %309, %357 : vector<4x5xi1>, vector<4x5xi32>
    %cst_103 = arith.constant dense<0> : vector<4xi32>
    %359 = vector.multi_reduction <add>, %358, %cst_103 [1] : vector<4x5xi32> to vector<4xi32>
    %360 = vector.shape_cast %359 : vector<4xi32> to vector<4x1xi32>
    %c5_i32_104 = arith.constant 5 : i32
    %361 = vector.broadcast %c5_i32_104 : i32 to vector<4x128xi32>
    %362 = arith.cmpi eq, %337, %361 : vector<4x128xi32>
    %363 = vector.shape_cast %360 : vector<4x1xi32> to vector<4x1xi32>
    %364 = vector.broadcast %363 : vector<4x1xi32> to vector<4x128xi32>
    %365 = arith.select %362, %364, %354 : vector<4x128xi1>, vector<4x128xi32>
    %366 = vector.broadcast %360 : vector<4x1xi32> to vector<4x5xi32>
    %367 = arith.cmpi eq, %207, %366 : vector<4x5xi32>
    %c0_i32_105 = arith.constant 0 : i32
    %368 = vector.broadcast %c0_i32_105 : i32 to vector<4x5xi32>
    %369 = arith.select %367, %295, %368 : vector<4x5xi1>, vector<4x5xi32>
    %cst_106 = arith.constant dense<0> : vector<4xi32>
    %370 = vector.multi_reduction <add>, %369, %cst_106 [1] : vector<4x5xi32> to vector<4xi32>
    %371 = vector.shape_cast %370 : vector<4xi32> to vector<4x1xi32>
    %c4_i32_107 = arith.constant 4 : i32
    %372 = vector.broadcast %c4_i32_107 : i32 to vector<4x128xi32>
    %373 = arith.cmpi eq, %337, %372 : vector<4x128xi32>
    %374 = vector.shape_cast %371 : vector<4x1xi32> to vector<4x1xi32>
    %375 = vector.broadcast %374 : vector<4x1xi32> to vector<4x128xi32>
    %376 = arith.select %373, %375, %365 : vector<4x128xi1>, vector<4x128xi32>
    %377 = vector.broadcast %371 : vector<4x1xi32> to vector<4x5xi32>
    %378 = arith.cmpi eq, %207, %377 : vector<4x5xi32>
    %c0_i32_108 = arith.constant 0 : i32
    %379 = vector.broadcast %c0_i32_108 : i32 to vector<4x5xi32>
    %380 = arith.select %378, %281, %379 : vector<4x5xi1>, vector<4x5xi32>
    %cst_109 = arith.constant dense<0> : vector<4xi32>
    %381 = vector.multi_reduction <add>, %380, %cst_109 [1] : vector<4x5xi32> to vector<4xi32>
    %382 = vector.shape_cast %381 : vector<4xi32> to vector<4x1xi32>
    %c3_i32_110 = arith.constant 3 : i32
    %383 = vector.broadcast %c3_i32_110 : i32 to vector<4x128xi32>
    %384 = arith.cmpi eq, %337, %383 : vector<4x128xi32>
    %385 = vector.shape_cast %382 : vector<4x1xi32> to vector<4x1xi32>
    %386 = vector.broadcast %385 : vector<4x1xi32> to vector<4x128xi32>
    %387 = arith.select %384, %386, %376 : vector<4x128xi1>, vector<4x128xi32>
    %388 = vector.broadcast %382 : vector<4x1xi32> to vector<4x5xi32>
    %389 = arith.cmpi eq, %207, %388 : vector<4x5xi32>
    %c0_i32_111 = arith.constant 0 : i32
    %390 = vector.broadcast %c0_i32_111 : i32 to vector<4x5xi32>
    %391 = arith.select %389, %267, %390 : vector<4x5xi1>, vector<4x5xi32>
    %cst_112 = arith.constant dense<0> : vector<4xi32>
    %392 = vector.multi_reduction <add>, %391, %cst_112 [1] : vector<4x5xi32> to vector<4xi32>
    %393 = vector.shape_cast %392 : vector<4xi32> to vector<4x1xi32>
    %c2_i32_113 = arith.constant 2 : i32
    %394 = vector.broadcast %c2_i32_113 : i32 to vector<4x128xi32>
    %395 = arith.cmpi eq, %337, %394 : vector<4x128xi32>
    %396 = vector.shape_cast %393 : vector<4x1xi32> to vector<4x1xi32>
    %397 = vector.broadcast %396 : vector<4x1xi32> to vector<4x128xi32>
    %398 = arith.select %395, %397, %387 : vector<4x128xi1>, vector<4x128xi32>
    %399 = vector.broadcast %393 : vector<4x1xi32> to vector<4x5xi32>
    %400 = arith.cmpi eq, %207, %399 : vector<4x5xi32>
    %c0_i32_114 = arith.constant 0 : i32
    %401 = vector.broadcast %c0_i32_114 : i32 to vector<4x5xi32>
    %402 = arith.select %400, %253, %401 : vector<4x5xi1>, vector<4x5xi32>
    %cst_115 = arith.constant dense<0> : vector<4xi32>
    %403 = vector.multi_reduction <add>, %402, %cst_115 [1] : vector<4x5xi32> to vector<4xi32>
    %404 = vector.shape_cast %403 : vector<4xi32> to vector<4x1xi32>
    %c1_i32_116 = arith.constant 1 : i32
    %405 = vector.broadcast %c1_i32_116 : i32 to vector<4x128xi32>
    %406 = arith.cmpi eq, %337, %405 : vector<4x128xi32>
    %407 = vector.shape_cast %404 : vector<4x1xi32> to vector<4x1xi32>
    %408 = vector.broadcast %407 : vector<4x1xi32> to vector<4x128xi32>
    %409 = arith.select %406, %408, %398 : vector<4x128xi1>, vector<4x128xi32>
    %410 = vector.broadcast %404 : vector<4x1xi32> to vector<4x5xi32>
    %411 = arith.cmpi eq, %207, %410 : vector<4x5xi32>
    %c0_i32_117 = arith.constant 0 : i32
    %412 = vector.broadcast %c0_i32_117 : i32 to vector<4x5xi32>
    %413 = arith.select %411, %239, %412 : vector<4x5xi1>, vector<4x5xi32>
    %cst_118 = arith.constant dense<0> : vector<4xi32>
    %414 = vector.multi_reduction <add>, %413, %cst_118 [1] : vector<4x5xi32> to vector<4xi32>
    %415 = vector.shape_cast %414 : vector<4xi32> to vector<4x1xi32>
    %c0_i32_119 = arith.constant 0 : i32
    %416 = vector.broadcast %c0_i32_119 : i32 to vector<4x128xi32>
    %417 = arith.cmpi eq, %337, %416 : vector<4x128xi32>
    %418 = vector.shape_cast %415 : vector<4x1xi32> to vector<4x1xi32>
    %419 = vector.broadcast %418 : vector<4x1xi32> to vector<4x128xi32>
    %420 = arith.select %417, %419, %409 : vector<4x128xi1>, vector<4x128xi32>
    %421 = vector.broadcast %415 : vector<4x1xi32> to vector<4x5xi32>
    %422 = arith.cmpi eq, %207, %421 : vector<4x5xi32>
    %c0_i32_120 = arith.constant 0 : i32
    %423 = vector.broadcast %c0_i32_120 : i32 to vector<4x5xi32>
    %424 = arith.select %422, %225, %423 : vector<4x5xi1>, vector<4x5xi32>
    %cst_121 = arith.constant dense<0> : vector<4xi32>
    %425 = vector.multi_reduction <add>, %424, %cst_121 [1] : vector<4x5xi32> to vector<4xi32>
    %426 = vector.shape_cast %425 : vector<4xi32> to vector<4x1xi32>
    %c8_i32_122 = arith.constant 8 : i32
    %427 = vector.broadcast %c8_i32_122 : i32 to vector<4x128xi32>
    %428 = arith.cmpi eq, %337, %427 : vector<4x128xi32>
    %429 = vector.shape_cast %426 : vector<4x1xi32> to vector<4x1xi32>
    %430 = vector.broadcast %429 : vector<4x1xi32> to vector<4x128xi32>
    %431 = arith.select %428, %430, %420 : vector<4x128xi1>, vector<4x128xi32>
    %c9_i32_123 = arith.constant 9 : i32
    %432 = vector.broadcast %c9_i32_123 : i32 to vector<4x128xi32>
    %433 = arith.cmpi eq, %337, %432 : vector<4x128xi32>
    %434 = tpu.bitcast %330 : vector<4x1xf32> -> vector<4x1xi32>
    %435 = vector.shape_cast %434 : vector<4x1xi32> to vector<4x1xi32>
    %436 = vector.broadcast %435 : vector<4x1xi32> to vector<4x128xi32>
    %437 = arith.select %433, %436, %431 : vector<4x128xi1>, vector<4x128xi32>
    %c0_124 = arith.constant 0 : index
    %c0_125 = arith.constant 0 : index
    %438 = vector.load %arg5[%c0_124, %c0_125] : memref<4x128xi32, #tpu.memory_space<vmem>>, vector<4x128xi32>
    tpu.vector_store %arg5[%c0_124, %c0_125], %437 {strides = array<i32>} : memref<4x128xi32, #tpu.memory_space<vmem>>, vector<4x128xi32>,
    return
  }
  func.func @transform_0(%arg0: i32, %arg1: memref<4x10xi32, #tpu.memory_space<smem>>) -> (i32, i32) {
    %c0_i32 = arith.constant 0 : i32
    %c0_i32_0 = arith.constant 0 : i32
    %c0_i32_1 = arith.constant 0 : i32
    return %c0_i32, %c0_i32_0 : i32, i32
  }
  func.func @transform_1(%arg0: i32, %arg1: memref<4x10xi32, #tpu.memory_space<smem>>) -> (i32, i32) {
    %c0_i32 = arith.constant 0 : i32
    %c0_i32_0 = arith.constant 0 : i32
    %c0_i32_1 = arith.constant 0 : i32
    return %c0_i32, %c0_i32_0 : i32, i32
  }
  func.func @transform_2(%arg0: i32, %arg1: memref<4x10xi32, #tpu.memory_space<smem>>) -> (i32, i32) {
    %c0_i32 = arith.constant 0 : i32
    %c0_i32_0 = arith.constant 0 : i32
    %c0_i32_1 = arith.constant 0 : i32
    return %c0_i32, %c0_i32_0 : i32, i32
  }
  func.func @transform_3(%arg0: i32, %arg1: memref<4x10xi32, #tpu.memory_space<smem>>) -> (i32, i32) {
    %c0_i32 = arith.constant 0 : i32
    %c0_i32_0 = arith.constant 0 : i32
    %c0_i32_1 = arith.constant 0 : i32
    return %c0_i32, %c0_i32_0 : i32, i32
  }
}

</mosaic_0001>

<llo_original>
// kernel: forward_batch.1
$region0: #{forward_batch.1}
  #allocation0 [shape = 'u32[]', space=smem, size = 0x4, offset = 0x4, fixed_abs, tag = 'smem constant byte address 0x4 - core index']
  #allocation1 [shape = 'u32[144,128]{1,0:T(1,128)}', space=vmem, size = 0x12000, scoped, tag = 'internal scratch']
  #allocation2 [shape = 's32[1]{0}', space=sflag, size = 0x4, scoped, tag = 'scoped memory for forward_batch.1']
  #allocation3 [shape = 'u8[2048]{0}', space=smem, size = 0x800, scoped, tag = 'prefetched SMEM operand 0']
  %s0 = inlined_call_operand.vmem [shape: s32[4,10], index: 0, kind: input, shape index: {}]
  %s1 = inlined_call_operand.vmem [shape: f32[64,32], index: 1, kind: input, shape index: {}]
  %s2 = inlined_call_operand.vmem [shape: f32[32,165], index: 2, kind: input, shape index: {}]
  %s3 = inlined_call_operand.vmem [shape: f32[6,165], index: 3, kind: input, shape index: {}]
  %s4 = inlined_call_operand.hbm [shape: s32[4,128], index: 4, kind: output, shape index: {}]
  %s5 = sld [smem:[#allocation0]]
  $region22: #{forward_batch.1} parent=0
    _
  %s7 = ssub.s32 1, %s5
  %s8 = scalar_select 0, %s7, %s5
  %s9 = sshll.u32 %s0, 4
  %s10 = int_to_ptr.vmem [resolvable:$true] %s9
  %12 = dma.vmem_to_smem %s10, 64, [#allocation3], [#allocation2]
  %13 = dma.done [#allocation2], 64
  %14 = sfence
  $region1: #{forward_batch.1} parent=0
    #allocation4 [shape = 'u8[2048]{0}', space=vmem, size = 0x800, scoped, tag = 'output window, operand 0, single buffered']
    #allocation5 [shape = 's32[1]{0}', space=sflag, size = 0x4, scoped, tag = 'scoped memory for forward_batch.1']
    %15 = vsyncpa [#allocation5], 0
    // Predicated region
    $region2: #{forward_batch.1} parent=1 // pred_check
      _
    $region3: #{forward_batch.1} parent=1 // pred_check_branch
      %17 = sbr.rel (0) target = $region5
    $region4: #{forward_batch.1} parent=1 // pred_region
      _
    $region5: #{forward_batch.1} parent=1 // pred_fallthru
      _
    // Predicated region
    $region6: #{forward_batch.1} parent=1 // pred_check
      _
    $region7: #{forward_batch.1} parent=1 // pred_check_branch
      %19 = sbr.rel (0) target = $region9
    $region8: #{forward_batch.1} parent=1 // pred_region
      _
    $region9: #{forward_batch.1} parent=1 // pred_fallthru
      _
    // Predicated region
    $region10: #{forward_batch.1} parent=1 // pred_check
      _
    $region11: #{forward_batch.1} parent=1 // pred_check_branch
      %21 = sbr.rel (0) target = $region13
    $region12: #{forward_batch.1} parent=1 // pred_region
      _
    $region13: #{forward_batch.1} parent=1 // pred_fallthru
      _
    %v22 = vlaneseq
    %v23 = vshrl.u32 %v22, 7
    %v24 = vadd.s32 %v23, 8
    %v25 = vadd.s32 %v23, 16
    %v26 = vadd.s32 %v23, 24
    %vm27 = vcmp.eq.s32.totalorder %v23, 0
    %vm28 = vcmp.eq.s32.totalorder %v24, 0
    %vm29 = vcmp.eq.s32.totalorder %v25, 0
    %vm30 = vcmp.eq.s32.totalorder %v26, 0
    %s31 = sld [smem:[#allocation3 + $0x1]]
    %v32 = vstv %s31
    %v33 = vsel %vm27, %v32, 0
    %v34 = vsel %vm28, %v32, 0
    %v35 = vsel %vm29, %v32, 0
    %v36 = vsel %vm30, %v32, 0
    %vm37 = vcmp.eq.s32.totalorder %v23, 1
    %vm38 = vcmp.eq.s32.totalorder %v24, 1
    %vm39 = vcmp.eq.s32.totalorder %v25, 1
    %vm40 = vcmp.eq.s32.totalorder %v26, 1
    %s41 = sld [smem:[#allocation3 + $0x81]]
    %v42 = vstv %s41
    %v43 = vsel %vm37, %v42, %v33
    %v44 = vsel %vm38, %v42, %v34
    %v45 = vsel %vm39, %v42, %v35
    %v46 = vsel %vm40, %v42, %v36
    %vm47 = vcmp.eq.s32.totalorder %v23, 2
    %vm48 = vcmp.eq.s32.totalorder %v24, 2
    %vm49 = vcmp.eq.s32.totalorder %v25, 2
    %vm50 = vcmp.eq.s32.totalorder %v26, 2
    %s51 = sld [smem:[#allocation3 + $0x101]]
    %v52 = vstv %s51
    %v53 = vsel %vm47, %v52, %v43
    %v54 = vsel %vm48, %v52, %v44
    %v55 = vsel %vm49, %v52, %v45
    %v56 = vsel %vm50, %v52, %v46
    %vm57 = vcmp.eq.s32.totalorder %v23, 3
    %vm58 = vcmp.eq.s32.totalorder %v24, 3
    %vm59 = vcmp.eq.s32.totalorder %v25, 3
    %vm60 = vcmp.eq.s32.totalorder %v26, 3
    %s61 = sld [smem:[#allocation3 + $0x181]]
    %v62 = vstv %s61
    %v63 = vsel %vm57, %v62, %v53
    %v64 = vsel %vm58, %v62, %v54
    %v65 = vsel %vm59, %v62, %v55
    %v66 = vsel %vm60, %v62, %v56
    %vm67 = vcmp.eq.s32.totalorder %v23, 4
    %vm68 = vcmp.eq.s32.totalorder %v24, 4
    %vm69 = vcmp.eq.s32.totalorder %v25, 4
    %vm70 = vcmp.eq.s32.totalorder %v26, 4
    %s71 = sld [smem:[#allocation3 + $0x2]]
    %v72 = vstv %s71
    %v73 = vsel %vm67, %v72, %v63
    %v74 = vsel %vm68, %v72, %v64
    %v75 = vsel %vm69, %v72, %v65
    %v76 = vsel %vm70, %v72, %v66
    %vm77 = vcmp.eq.s32.totalorder %v23, 5
    %vm78 = vcmp.eq.s32.totalorder %v24, 5
    %vm79 = vcmp.eq.s32.totalorder %v25, 5
    %vm80 = vcmp.eq.s32.totalorder %v26, 5
    %s81 = sld [smem:[#allocation3 + $0x82]]
    %v82 = vstv %s81
    %v83 = vsel %vm77, %v82, %v73
    %v84 = vsel %vm78, %v82, %v74
    %v85 = vsel %vm79, %v82, %v75
    %v86 = vsel %vm80, %v82, %v76
    %vm87 = vcmp.eq.s32.totalorder %v23, 6
    %vm88 = vcmp.eq.s32.totalorder %v24, 6
    %vm89 = vcmp.eq.s32.totalorder %v25, 6
    %vm90 = vcmp.eq.s32.totalorder %v26, 6
    %s91 = sld [smem:[#allocation3 + $0x102]]
    %v92 = vstv %s91
    %v93 = vsel %vm87, %v92, %v83
    %v94 = vsel %vm88, %v92, %v84
    %v95 = vsel %vm89, %v92, %v85
    %v96 = vsel %vm90, %v92, %v86
    %vm97 = vcmp.eq.s32.totalorder %v23, 7
    %vm98 = vcmp.eq.s32.totalorder %v24, 7
    %vm99 = vcmp.eq.s32.totalorder %v25, 7
    %vm100 = vcmp.eq.s32.totalorder %v26, 7
    %s101 = sld [smem:[#allocation3 + $0x182]]
    %v102 = vstv %s101
    %v103 = vsel %vm97, %v102, %v93
    %v104 = vsel %vm98, %v102, %v94
    %v105 = vsel %vm99, %v102, %v95
    %v106 = vsel %vm100, %v102, %v96
    %vm107 = vcmp.eq.s32.totalorder %v23, 8
    %vm108 = vcmp.eq.s32.totalorder %v24, 8
    %vm109 = vcmp.eq.s32.totalorder %v25, 8
    %vm110 = vcmp.eq.s32.totalorder %v26, 8
    %s111 = sld [smem:[#allocation3 + $0x3]]
    %v112 = vstv %s111
    %v113 = vsel %vm107, %v112, %v103
    %v114 = vsel %vm108, %v112, %v104
    %v115 = vsel %vm109, %v112, %v105
    %v116 = vsel %vm110, %v112, %v106
    %vm117 = vcmp.eq.s32.totalorder %v23, 9
    %vm118 = vcmp.eq.s32.totalorder %v24, 9
    %vm119 = vcmp.eq.s32.totalorder %v25, 9
    %vm120 = vcmp.eq.s32.totalorder %v26, 9
    %s121 = sld [smem:[#allocation3 + $0x83]]
    %v122 = vstv %s121
    %v123 = vsel %vm117, %v122, %v113
    %v124 = vsel %vm118, %v122, %v114
    %v125 = vsel %vm119, %v122, %v115
    %v126 = vsel %vm120, %v122, %v116
    %vm127 = vcmp.eq.s32.totalorder %v23, 10
    %vm128 = vcmp.eq.s32.totalorder %v24, 10
    %vm129 = vcmp.eq.s32.totalorder %v25, 10
    %vm130 = vcmp.eq.s32.totalorder %v26, 10
    %s131 = sld [smem:[#allocation3 + $0x103]]
    %v132 = vstv %s131
    %v133 = vsel %vm127, %v132, %v123
    %v134 = vsel %vm128, %v132, %v124
    %v135 = vsel %vm129, %v132, %v125
    %v136 = vsel %vm130, %v132, %v126
    %vm137 = vcmp.eq.s32.totalorder %v23, 11
    %vm138 = vcmp.eq.s32.totalorder %v24, 11
    %vm139 = vcmp.eq.s32.totalorder %v25, 11
    %vm140 = vcmp.eq.s32.totalorder %v26, 11
    %s141 = sld [smem:[#allocation3 + $0x183]]
    %v142 = vstv %s141
    %v143 = vsel %vm137, %v142, %v133
    %v144 = vsel %vm138, %v142, %v134
    %v145 = vsel %vm139, %v142, %v135
    %v146 = vsel %vm140, %v142, %v136
    %vm147 = vcmp.eq.s32.totalorder %v23, 12
    %vm148 = vcmp.eq.s32.totalorder %v24, 12
    %vm149 = vcmp.eq.s32.totalorder %v25, 12
    %vm150 = vcmp.eq.s32.totalorder %v26, 12
    %s151 = sld [smem:[#allocation3 + $0x4]]
    %v152 = vstv %s151
    %v153 = vsel %vm147, %v152, %v143
    %v154 = vsel %vm148, %v152, %v144
    %v155 = vsel %vm149, %v152, %v145
    %v156 = vsel %vm150, %v152, %v146
    %vm157 = vcmp.eq.s32.totalorder %v23, 13
    %vm158 = vcmp.eq.s32.totalorder %v24, 13
    %vm159 = vcmp.eq.s32.totalorder %v25, 13
    %vm160 = vcmp.eq.s32.totalorder %v26, 13
    %s161 = sld [smem:[#allocation3 + $0x84]]
    %v162 = vstv %s161
    %v163 = vsel %vm157, %v162, %v153
    %v164 = vsel %vm158, %v162, %v154
    %v165 = vsel %vm159, %v162, %v155
    %v166 = vsel %vm160, %v162, %v156
    %vm167 = vcmp.eq.s32.totalorder %v23, 14
    %vm168 = vcmp.eq.s32.totalorder %v24, 14
    %vm169 = vcmp.eq.s32.totalorder %v25, 14
    %vm170 = vcmp.eq.s32.totalorder %v26, 14
    %s171 = sld [smem:[#allocation3 + $0x104]]
    %v172 = vstv %s171
    %v173 = vsel %vm167, %v172, %v163
    %v174 = vsel %vm168, %v172, %v164
    %v175 = vsel %vm169, %v172, %v165
    %v176 = vsel %vm170, %v172, %v166
    %vm177 = vcmp.eq.s32.totalorder %v23, 15
    %vm178 = vcmp.eq.s32.totalorder %v24, 15
    %vm179 = vcmp.eq.s32.totalorder %v25, 15
    %vm180 = vcmp.eq.s32.totalorder %v26, 15
    %s181 = sld [smem:[#allocation3 + $0x184]]
    %v182 = vstv %s181
    %v183 = vsel %vm177, %v182, %v173
    %v184 = vsel %vm178, %v182, %v174
    %v185 = vsel %vm179, %v182, %v175
    %v186 = vsel %vm180, %v182, %v176
    %vm187 = vcmp.eq.s32.totalorder %v23, 16
    %vm188 = vcmp.eq.s32.totalorder %v24, 16
    %vm189 = vcmp.eq.s32.totalorder %v25, 16
    %vm190 = vcmp.eq.s32.totalorder %v26, 16
    %s191 = sld [smem:[#allocation3 + $0x5]]
    %v192 = vstv %s191
    %v193 = vsel %vm187, %v192, %v183
    %v194 = vsel %vm188, %v192, %v184
    %v195 = vsel %vm189, %v192, %v185
    %v196 = vsel %vm190, %v192, %v186
    %vm197 = vcmp.eq.s32.totalorder %v23, 17
    %vm198 = vcmp.eq.s32.totalorder %v24, 17
    %vm199 = vcmp.eq.s32.totalorder %v25, 17
    %vm200 = vcmp.eq.s32.totalorder %v26, 17
    %s201 = sld [smem:[#allocation3 + $0x85]]
    %v202 = vstv %s201
    %v203 = vsel %vm197, %v202, %v193
    %v204 = vsel %vm198, %v202, %v194
    %v205 = vsel %vm199, %v202, %v195
    %v206 = vsel %vm200, %v202, %v196
    %vm207 = vcmp.eq.s32.totalorder %v23, 18
    %vm208 = vcmp.eq.s32.totalorder %v24, 18
    %vm209 = vcmp.eq.s32.totalorder %v25, 18
    %vm210 = vcmp.eq.s32.totalorder %v26, 18
    %s211 = sld [smem:[#allocation3 + $0x105]]
    %v212 = vstv %s211
    %v213 = vsel %vm207, %v212, %v203
    %v214 = vsel %vm208, %v212, %v204
    %v215 = vsel %vm209, %v212, %v205
    %v216 = vsel %vm210, %v212, %v206
    %vm217 = vcmp.eq.s32.totalorder %v23, 19
    %vm218 = vcmp.eq.s32.totalorder %v24, 19
    %vm219 = vcmp.eq.s32.totalorder %v25, 19
    %vm220 = vcmp.eq.s32.totalorder %v26, 19
    %s221 = sld [smem:[#allocation3 + $0x185]]
    %v222 = vstv %s221
    %v223 = vsel %vm217, %v222, %v213
    %v224 = vsel %vm218, %v222, %v214
    %v225 = vsel %vm219, %v222, %v215
    %v226 = vsel %vm220, %v222, %v216
    %vm227 = vcmp.eq.s32.totalorder %v23, 20
    %vm228 = vcmp.eq.s32.totalorder %v24, 20
    %vm229 = vcmp.eq.s32.totalorder %v25, 20
    %vm230 = vcmp.eq.s32.totalorder %v26, 20
    %s231 = sld [smem:[#allocation3 + $0x6]]
    %v232 = vstv %s231
    %v233 = vsel %vm227, %v232, %v223
    %v234 = vsel %vm228, %v232, %v224
    %v235 = vsel %vm229, %v232, %v225
    %v236 = vsel %vm230, %v232, %v226
    %vm237 = vcmp.eq.s32.totalorder %v23, 21
    %vm238 = vcmp.eq.s32.totalorder %v24, 21
    %vm239 = vcmp.eq.s32.totalorder %v25, 21
    %vm240 = vcmp.eq.s32.totalorder %v26, 21
    %s241 = sld [smem:[#allocation3 + $0x86]]
    %v242 = vstv %s241
    %v243 = vsel %vm237, %v242, %v233
    %v244 = vsel %vm238, %v242, %v234
    %v245 = vsel %vm239, %v242, %v235
    %v246 = vsel %vm240, %v242, %v236
    %vm247 = vcmp.eq.s32.totalorder %v23, 22
    %vm248 = vcmp.eq.s32.totalorder %v24, 22
    %vm249 = vcmp.eq.s32.totalorder %v25, 22
    %vm250 = vcmp.eq.s32.totalorder %v26, 22
    %s251 = sld [smem:[#allocation3 + $0x106]]
    %v252 = vstv %s251
    %v253 = vsel %vm247, %v252, %v243
    %v254 = vsel %vm248, %v252, %v244
    %v255 = vsel %vm249, %v252, %v245
    %v256 = vsel %vm250, %v252, %v246
    %vm257 = vcmp.eq.s32.totalorder %v23, 23
    %vm258 = vcmp.eq.s32.totalorder %v24, 23
    %vm259 = vcmp.eq.s32.totalorder %v25, 23
    %vm260 = vcmp.eq.s32.totalorder %v26, 23
    %s261 = sld [smem:[#allocation3 + $0x186]]
    %v262 = vstv %s261
    %v263 = vsel %vm257, %v262, %v253
    %v264 = vsel %vm258, %v262, %v254
    %v265 = vsel %vm259, %v262, %v255
    %v266 = vsel %vm260, %v262, %v256
    %vm267 = vcmp.eq.s32.totalorder %v23, 24
    %vm268 = vcmp.eq.s32.totalorder %v24, 24
    %vm269 = vcmp.eq.s32.totalorder %v25, 24
    %vm270 = vcmp.eq.s32.totalorder %v26, 24
    %s271 = sld [smem:[#allocation3 + $0x7]]
    %v272 = vstv %s271
    %v273 = vsel %vm267, %v272, %v263
    %v274 = vsel %vm268, %v272, %v264
    %v275 = vsel %vm269, %v272, %v265
    %v276 = vsel %vm270, %v272, %v266
    %vm277 = vcmp.eq.s32.totalorder %v23, 25
    %vm278 = vcmp.eq.s32.totalorder %v24, 25
    %vm279 = vcmp.eq.s32.totalorder %v25, 25
    %vm280 = vcmp.eq.s32.totalorder %v26, 25
    %s281 = sld [smem:[#allocation3 + $0x87]]
    %v282 = vstv %s281
    %v283 = vsel %vm277, %v282, %v273
    %v284 = vsel %vm278, %v282, %v274
    %v285 = vsel %vm279, %v282, %v275
    %v286 = vsel %vm280, %v282, %v276
    %vm287 = vcmp.eq.s32.totalorder %v23, 26
    %vm288 = vcmp.eq.s32.totalorder %v24, 26
    %vm289 = vcmp.eq.s32.totalorder %v25, 26
    %vm290 = vcmp.eq.s32.totalorder %v26, 26
    %s291 = sld [smem:[#allocation3 + $0x107]]
    %v292 = vstv %s291
    %v293 = vsel %vm287, %v292, %v283
    %v294 = vsel %vm288, %v292, %v284
    %v295 = vsel %vm289, %v292, %v285
    %v296 = vsel %vm290, %v292, %v286
    %vm297 = vcmp.eq.s32.totalorder %v23, 27
    %vm298 = vcmp.eq.s32.totalorder %v24, 27
    %vm299 = vcmp.eq.s32.totalorder %v25, 27
    %vm300 = vcmp.eq.s32.totalorder %v26, 27
    %s301 = sld [smem:[#allocation3 + $0x187]]
    %v302 = vstv %s301
    %v303 = vsel %vm297, %v302, %v293
    %v304 = vsel %vm298, %v302, %v294
    %v305 = vsel %vm299, %v302, %v295
    %v306 = vsel %vm300, %v302, %v296
    %vm307 = vcmp.eq.s32.totalorder %v23, 28
    %vm308 = vcmp.eq.s32.totalorder %v24, 28
    %vm309 = vcmp.eq.s32.totalorder %v25, 28
    %vm310 = vcmp.eq.s32.totalorder %v26, 28
    %s311 = sld [smem:[#allocation3 + $0x8]]
    %v312 = vstv %s311
    %v313 = vsel %vm307, %v312, %v303
    %v314 = vsel %vm308, %v312, %v304
    %v315 = vsel %vm309, %v312, %v305
    %v316 = vsel %vm310, %v312, %v306
    %vm317 = vcmp.eq.s32.totalorder %v23, 29
    %vm318 = vcmp.eq.s32.totalorder %v24, 29
    %vm319 = vcmp.eq.s32.totalorder %v25, 29
    %vm320 = vcmp.eq.s32.totalorder %v26, 29
    %s321 = sld [smem:[#allocation3 + $0x88]]
    %v322 = vstv %s321
    %v323 = vsel %vm317, %v322, %v313
    %v324 = vsel %vm318, %v322, %v314
    %v325 = vsel %vm319, %v322, %v315
    %v326 = vsel %vm320, %v322, %v316
    %vm327 = vcmp.eq.s32.totalorder %v23, 30
    %vm328 = vcmp.eq.s32.totalorder %v24, 30
    %vm329 = vcmp.eq.s32.totalorder %v25, 30
    %vm330 = vcmp.eq.s32.totalorder %v26, 30
    %s331 = sld [smem:[#allocation3 + $0x108]]
    %v332 = vstv %s331
    %v333 = vsel %vm327, %v332, %v323
    %v334 = vsel %vm328, %v332, %v324
    %v335 = vsel %vm329, %v332, %v325
    %v336 = vsel %vm330, %v332, %v326
    %vm337 = vcmp.eq.s32.totalorder %v23, 31
    %vm338 = vcmp.eq.s32.totalorder %v24, 31
    %vm339 = vcmp.eq.s32.totalorder %v25, 31
    %vm340 = vcmp.eq.s32.totalorder %v26, 31
    %s341 = sld [smem:[#allocation3 + $0x188]]
    %v342 = vstv %s341
    %v343 = vsel %vm337, %v342, %v333
    %v344 = vsel %vm338, %v342, %v334
    %v345 = vsel %vm339, %v342, %v335
    %v346 = vsel %vm340, %v342, %v336
    %v347 = vlaneseq
    %v348 = vand.u32 %v347, 127
    %vm349 = vcmp.eq.s32.totalorder %v348, %v343
    %vm350 = vcmp.eq.s32.totalorder %v348, %v344
    %vm351 = vcmp.eq.s32.totalorder %v348, %v345
    %vm352 = vcmp.eq.s32.totalorder %v348, %v346
    %v353 = vsel %vm349, 1, 0
    %v354 = vsel %vm350, 1, 0
    %v355 = vsel %vm351, 1, 0
    %v356 = vsel %vm352, 1, 0
    %v357 = vcvt.s32.f32 %v353
    %v358 = vcvt.s32.f32 %v354
    %v359 = vcvt.s32.f32 %v355
    %v360 = vcvt.s32.f32 %v356
    %v361 = vld [vmem:[%s1] sm:$0xff]
    %v362 = vld [vmem:[%s1 + $0x8] sm:$0xff]
    %v363 = vld [vmem:[%s1 + $0x10] sm:$0xff]
    %v364 = vld [vmem:[%s1 + $0x18] sm:$0xff]
    %v365 = vld [vmem:[%s1 + $0x20] sm:$0xff]
    %v366 = vld [vmem:[%s1 + $0x28] sm:$0xff]
    %v367 = vld [vmem:[%s1 + $0x30] sm:$0xff]
    %v368 = vld [vmem:[%s1 + $0x38] sm:$0xff]
    %vm369 = vcmask 523264
    %v371 = vsel %vm369, %v357, 0
    %v374 = vsel %vm369, %v358, 0
    %v377 = vsel %vm369, %v359, 0
    %v380 = vsel %vm369, %v360, 0
    %382 = vmatprep.subr.mxu0 0.0
    %383 = vmatpush1.msra.mxu0 0.0
    %384 = vmatprep.subr.mxu0 0.0
    %385 = vmatpush1.msra.mxu0 0.0
    %386 = vmatprep.subr.mxu0 0.0
    %387 = vmatpush1.msra.mxu0 0.0
    %388 = vmatprep.subr.mxu0 0.0
    %389 = vmatpush1.msra.mxu0 0.0
    %390 = vmatprep.subr.mxu0 0.0
    %391 = vmatpush1.msra.mxu0 0.0
    %392 = vmatprep.subr.mxu0 0.0
    %393 = vmatpush1.msra.mxu0 0.0
    %394 = vmatprep.subr.mxu0 0.0
    %395 = vmatpush1.msra.mxu0 0.0
    %396 = vmatprep.subr.mxu0 0.0
    %397 = vmatpush1.msra.mxu0 0.0
    %398 = vmatprep.subr.mxu0 0.0
    %399 = vmatpush1.msra.mxu0 %v368
    %400 = vmatprep.subr.mxu0 0.0
    %401 = vmatpush1.msra.mxu0 %v367
    %402 = vmatprep.subr.mxu0 0.0
    %403 = vmatpush1.msra.mxu0 %v366
    %404 = vmatprep.subr.mxu0 0.0
    %405 = vmatpush1.msra.mxu0 %v365
    %406 = vmatprep.subr.mxu0 0.0
    %407 = vmatpush1.msra.mxu0 %v364
    %408 = vmatprep.subr.mxu0 0.0
    %409 = vmatpush1.msra.mxu0 %v363
    %410 = vmatprep.subr.mxu0 0.0
    %411 = vmatpush1.msra.mxu0 %v362
    %412 = vmatprep.subr.mxu0 0.0
    %413 = vmatpush1.msra.mxu0 %v361
    %414 = vmatprep.subr.mxu0 0.0
    %415 = vmatpush2.msra.mxu0 0.0
    %416 = vmatprep.subr.mxu0 0.0
    %417 = vmatpush2.msra.mxu0 0.0
    %418 = vmatprep.subr.mxu0 0.0
    %419 = vmatpush2.msra.mxu0 0.0
    %420 = vmatprep.subr.mxu0 0.0
    %421 = vmatpush2.msra.mxu0 0.0
    %422 = vmatprep.subr.mxu0 0.0
    %423 = vmatpush2.msra.mxu0 0.0
    %424 = vmatprep.subr.mxu0 0.0
    %425 = vmatpush2.msra.mxu0 0.0
    %426 = vmatprep.subr.mxu0 0.0
    %427 = vmatpush2.msra.mxu0 0.0
    %428 = vmatprep.subr.mxu0 0.0
    %429 = vmatpush2.msra.mxu0 0.0
    %430 = vmatprep.subr.mxu0 0.0
    %431 = vmatpush2.msra.mxu0 0.0
    %432 = vmatprep.subr.mxu0 0.0
    %433 = vmatpush2.msra.mxu0 0.0
    %434 = vmatprep.subr.mxu0 0.0
    %435 = vmatpush2.msra.mxu0 0.0
    %436 = vmatprep.subr.mxu0 0.0
    %437 = vmatpush2.msra.mxu0 0.0
    %438 = vmatprep.subr.mxu0 0.0
    %439 = vmatpush2.msra.mxu0 0.0
    %440 = vmatprep.subr.mxu0 0.0
    %441 = vmatpush2.msra.mxu0 0.0
    %442 = vmatprep.subr.mxu0 0.0
    %443 = vmatpush2.msra.mxu0 0.0
    %444 = vmatprep.subr.mxu0 0.0
    %445 = vmatpush2.msra.mxu0 0.0
    %446 = vmatprep.mubr.f32.mxu0 0.0
    %447 = vmatmul.mubr.f32.gmra.mxu0 %v371
    %v448 = vpop.f32.mrf.mxu0
    %v449 = vadd.f32 0.0, %v448
    %v450 = vpop.f32.mrf.mxu0
    %451 = vmatprep.mubr.f32.mxu0 0.0
    %452 = vmatmul.mubr.f32.gmra.mxu0 %v374
    %v453 = vpop.f32.mrf.mxu0
    %v454 = vadd.f32 0.0, %v453
    %v455 = vpop.f32.mrf.mxu0
    %456 = vmatprep.mubr.f32.mxu0 0.0
    %457 = vmatmul.mubr.f32.gmra.mxu0 %v377
    %v458 = vpop.f32.mrf.mxu0
    %v459 = vadd.f32 0.0, %v458
    %v460 = vpop.f32.mrf.mxu0
    %461 = vmatprep.mubr.f32.mxu0 0.0
    %462 = vmatmul.mubr.f32.gmra.mxu0 %v380
    %v463 = vpop.f32.mrf.mxu0
    %v464 = vadd.f32 0.0, %v463
    %v465 = vpop.f32.mrf.mxu0
    %466 = vdwg.mxu0
    %v467 = vld [vmem:[%s2] sm:$0xff]
    %v468 = vld [vmem:[%s2 + $0x8] sm:$0xff]
    %v469 = vld [vmem:[%s2 + $0x10] sm:$0xff]
    %v470 = vld [vmem:[%s2 + $0x18] sm:$0xff]
    %v471 = vld [vmem:[%s2 + $0x20] sm:$0xff]
    %v472 = vld [vmem:[%s2 + $0x28] sm:$0xff]
    %v473 = vld [vmem:[%s2 + $0x30] sm:$0xff]
    %v474 = vld [vmem:[%s2 + $0x38] sm:$0xff]
    %v475 = vld [vmem:[%s3] sm:$0x3f]
    %v476 = vld [vmem:[%s3 + $0x8] sm:$0x3f]
    %v477 = vlaneseq
    %v478 = vshrl.u32 %v477, 7
    %v479 = vsub.s32 0, %v478
    %v480 = vrot.slane %v476, %v479
    %vm481 = vcmask 261120
    %v483 = vsel %vm481, %v449, 0
    %v486 = vsel %vm481, %v454, 0
    %v489 = vsel %vm481, %v459, 0
    %v492 = vsel %vm481, %v464, 0
    %494 = vmatprep.subr.mxu0 0.0
    %495 = vmatpush1.msra.mxu0 0.0
    %496 = vmatprep.subr.mxu0 0.0
    %497 = vmatpush1.msra.mxu0 0.0
    %498 = vmatprep.subr.mxu0 0.0
    %499 = vmatpush1.msra.mxu0 0.0
    %500 = vmatprep.subr.mxu0 0.0
    %501 = vmatpush1.msra.mxu0 0.0
    %502 = vmatprep.subr.mxu0 0.0
    %503 = vmatpush1.msra.mxu0 0.0
    %504 = vmatprep.subr.mxu0 0.0
    %505 = vmatpush1.msra.mxu0 0.0
    %506 = vmatprep.subr.mxu0 0.0
    %507 = vmatpush1.msra.mxu0 0.0
    %508 = vmatprep.subr.mxu0 0.0
    %509 = vmatpush1.msra.mxu0 0.0
    %510 = vmatprep.subr.mxu0 0.0
    %511 = vmatpush1.msra.mxu0 0.0
    %512 = vmatprep.subr.mxu0 0.0
    %513 = vmatpush1.msra.mxu0 0.0
    %514 = vmatprep.subr.mxu0 0.0
    %515 = vmatpush1.msra.mxu0 0.0
    %516 = vmatprep.subr.mxu0 0.0
    %517 = vmatpush1.msra.mxu0 0.0
    %518 = vmatprep.subr.mxu0 0.0
    %519 = vmatpush1.msra.mxu0 %v474
    %520 = vmatprep.subr.mxu0 0.0
    %521 = vmatpush1.msra.mxu0 %v472
    %522 = vmatprep.subr.mxu0 0.0
    %523 = vmatpush1.msra.mxu0 %v470
    %524 = vmatprep.subr.mxu0 0.0
    %525 = vmatpush1.msra.mxu0 %v468
    %526 = vmatprep.subr.mxu0 0.0
    %527 = vmatpush2.msra.mxu0 0.0
    %528 = vmatprep.subr.mxu0 0.0
    %529 = vmatpush2.msra.mxu0 0.0
    %530 = vmatprep.subr.mxu0 0.0
    %531 = vmatpush2.msra.mxu0 0.0
    %532 = vmatprep.subr.mxu0 0.0
    %533 = vmatpush2.msra.mxu0 0.0
    %534 = vmatprep.subr.mxu0 0.0
    %535 = vmatpush2.msra.mxu0 0.0
    %536 = vmatprep.subr.mxu0 0.0
    %537 = vmatpush2.msra.mxu0 0.0
    %538 = vmatprep.subr.mxu0 0.0
    %539 = vmatpush2.msra.mxu0 0.0
    %540 = vmatprep.subr.mxu0 0.0
    %541 = vmatpush2.msra.mxu0 0.0
    %542 = vmatprep.subr.mxu0 0.0
    %543 = vmatpush2.msra.mxu0 0.0
    %544 = vmatprep.subr.mxu0 0.0
    %545 = vmatpush2.msra.mxu0 0.0
    %546 = vmatprep.subr.mxu0 0.0
    %547 = vmatpush2.msra.mxu0 0.0
    %548 = vmatprep.subr.mxu0 0.0
    %549 = vmatpush2.msra.mxu0 0.0
    %550 = vmatprep.subr.mxu0 0.0
    %551 = vmatpush2.msra.mxu0 0.0
    %552 = vmatprep.subr.mxu0 0.0
    %553 = vmatpush2.msra.mxu0 0.0
    %554 = vmatprep.subr.mxu0 0.0
    %555 = vmatpush2.msra.mxu0 0.0
    %556 = vmatprep.subr.mxu0 0.0
    %557 = vmatpush2.msra.mxu0 0.0
    %558 = vmatprep.mubr.f32.mxu0 0.0
    %559 = vmatmul.mubr.f32.gmra.mxu0 %v483
    %v560 = vpop.f32.mrf.mxu0
    %v561 = vadd.f32 %v480, %v560
    %v562 = vpop.f32.mrf.mxu0
    %563 = vmatprep.mubr.f32.mxu0 0.0
    %564 = vmatmul.mubr.f32.gmra.mxu0 %v486
    %v565 = vpop.f32.mrf.mxu0
    %v566 = vadd.f32 %v480, %v565
    %v567 = vpop.f32.mrf.mxu0
    %568 = vmatprep.mubr.f32.mxu0 0.0
    %569 = vmatmul.mubr.f32.gmra.mxu0 %v489
    %v570 = vpop.f32.mrf.mxu0
    %v571 = vadd.f32 %v480, %v570
    %v572 = vpop.f32.mrf.mxu0
    %573 = vmatprep.mubr.f32.mxu0 0.0
    %574 = vmatmul.mubr.f32.gmra.mxu0 %v492
    %v575 = vpop.f32.mrf.mxu0
    %v576 = vadd.f32 %v480, %v575
    %v577 = vpop.f32.mrf.mxu0
    %578 = vdwg.mxu0
    %v579 = vtanh.pop %v561
    %v580 = vtanh.pop %v566
    %v581 = vtanh.pop %v571
    %v582 = vtanh.pop %v576
    %v583 = vlaneseq
    %v584 = vshrl.u32 %v583, 7
    %v585 = vsub.s32 0, %v584
    %v586 = vrot.slane %v475, %v585
    %v588 = vsel %vm481, %v579, 0
    %v591 = vsel %vm481, %v580, 0
    %v594 = vsel %vm481, %v581, 0
    %v597 = vsel %vm481, %v582, 0
    %599 = vmatprep.subr.mxu0 0.0
    %600 = vmatpush1.msra.mxu0 0.0
    %601 = vmatprep.subr.mxu0 0.0
    %602 = vmatpush1.msra.mxu0 0.0
    %603 = vmatprep.subr.mxu0 0.0
    %604 = vmatpush1.msra.mxu0 0.0
    %605 = vmatprep.subr.mxu0 0.0
    %606 = vmatpush1.msra.mxu0 0.0
    %607 = vmatprep.subr.mxu0 0.0
    %608 = vmatpush1.msra.mxu0 0.0
    %609 = vmatprep.subr.mxu0 0.0
    %610 = vmatpush1.msra.mxu0 0.0
    %611 = vmatprep.subr.mxu0 0.0
    %612 = vmatpush1.msra.mxu0 0.0
    %613 = vmatprep.subr.mxu0 0.0
    %614 = vmatpush1.msra.mxu0 0.0
    %615 = vmatprep.subr.mxu0 0.0
    %616 = vmatpush1.msra.mxu0 0.0
    %617 = vmatprep.subr.mxu0 0.0
    %618 = vmatpush1.msra.mxu0 0.0
    %619 = vmatprep.subr.mxu0 0.0
    %620 = vmatpush1.msra.mxu0 0.0
    %621 = vmatprep.subr.mxu0 0.0
    %622 = vmatpush1.msra.mxu0 0.0
    %623 = vmatprep.subr.mxu0 0.0
    %624 = vmatpush1.msra.mxu0 %v473
    %625 = vmatprep.subr.mxu0 0.0
    %626 = vmatpush1.msra.mxu0 %v471
    %627 = vmatprep.subr.mxu0 0.0
    %628 = vmatpush1.msra.mxu0 %v469
    %629 = vmatprep.subr.mxu0 0.0
    %630 = vmatpush1.msra.mxu0 %v467
    %631 = vmatprep.subr.mxu0 0.0
    %632 = vmatpush2.msra.mxu0 0.0
    %633 = vmatprep.subr.mxu0 0.0
    %634 = vmatpush2.msra.mxu0 0.0
    %635 = vmatprep.subr.mxu0 0.0
    %636 = vmatpush2.msra.mxu0 0.0
    %637 = vmatprep.subr.mxu0 0.0
    %638 = vmatpush2.msra.mxu0 0.0
    %639 = vmatprep.subr.mxu0 0.0
    %640 = vmatpush2.msra.mxu0 0.0
    %641 = vmatprep.subr.mxu0 0.0
    %642 = vmatpush2.msra.mxu0 0.0
    %643 = vmatprep.subr.mxu0 0.0
    %644 = vmatpush2.msra.mxu0 0.0
    %645 = vmatprep.subr.mxu0 0.0
    %646 = vmatpush2.msra.mxu0 0.0
    %647 = vmatprep.subr.mxu0 0.0
    %648 = vmatpush2.msra.mxu0 0.0
    %649 = vmatprep.subr.mxu0 0.0
    %650 = vmatpush2.msra.mxu0 0.0
    %651 = vmatprep.subr.mxu0 0.0
    %652 = vmatpush2.msra.mxu0 0.0
    %653 = vmatprep.subr.mxu0 0.0
    %654 = vmatpush2.msra.mxu0 0.0
    %655 = vmatprep.subr.mxu0 0.0
    %656 = vmatpush2.msra.mxu0 0.0
    %657 = vmatprep.subr.mxu0 0.0
    %658 = vmatpush2.msra.mxu0 0.0
    %659 = vmatprep.subr.mxu0 0.0
    %660 = vmatpush2.msra.mxu0 0.0
    %661 = vmatprep.subr.mxu0 0.0
    %662 = vmatpush2.msra.mxu0 0.0
    %663 = vmatprep.mubr.f32.mxu0 0.0
    %664 = vmatmul.mubr.f32.gmra.mxu0 %v588
    %v665 = vpop.f32.mrf.mxu0
    %v666 = vadd.f32 %v586, %v665
    %v667 = vpop.f32.mrf.mxu0
    %668 = vmatprep.mubr.f32.mxu0 0.0
    %669 = vmatmul.mubr.f32.gmra.mxu0 %v591
    %v670 = vpop.f32.mrf.mxu0
    %v671 = vadd.f32 %v586, %v670
    %v672 = vpop.f32.mrf.mxu0
    %673 = vmatprep.mubr.f32.mxu0 0.0
    %674 = vmatmul.mubr.f32.gmra.mxu0 %v594
    %v675 = vpop.f32.mrf.mxu0
    %v676 = vadd.f32 %v586, %v675
    %v677 = vpop.f32.mrf.mxu0
    %678 = vmatprep.mubr.f32.mxu0 0.0
    %679 = vmatmul.mubr.f32.gmra.mxu0 %v597
    %v680 = vpop.f32.mrf.mxu0
    %v681 = vadd.f32 %v586, %v680
    %v682 = vpop.f32.mrf.mxu0
    %683 = vdwg.mxu0
    %v684 = vxor.u32 %v666, 2147483648
    %v685 = vxor.u32 %v671, 2147483648
    %v686 = vxor.u32 %v676, 2147483648
    %v687 = vxor.u32 %v681, 2147483648
    %v688 = vmul.f32 %v684, 1.442695
    %v689 = vpow.pop %v688
    %v690 = vmul.f32 %v685, 1.442695
    %v691 = vpow.pop %v690
    %v692 = vmul.f32 %v686, 1.442695
    %v693 = vpow.pop %v692
    %v694 = vmul.f32 %v687, 1.442695
    %v695 = vpow.pop %v694
    %v696 = vadd.f32 %v689, 1.0
    %v697 = vadd.f32 %v691, 1.0
    %v698 = vadd.f32 %v693, 1.0
    %v699 = vadd.f32 %v695, 1.0
    %v700 = vrcp.pop %v696
    %v701 = vmul.f32 1.0, %v700
    %v702 = vrcp.pop %v697
    %v703 = vmul.f32 1.0, %v702
    %v704 = vrcp.pop %v698
    %v705 = vmul.f32 1.0, %v704
    %v706 = vrcp.pop %v699
    %v707 = vmul.f32 1.0, %v706
    %v708 = vtanh.pop %v666
    %v709 = vtanh.pop %v671
    %v710 = vtanh.pop %v676
    %v711 = vtanh.pop %v681
    %716 = vrot.lane.b32.xlu0 %v708, 64
    %v717 = vpop.permute.xlu0 %716
    %718 = vrot.lane.b32.xlu0 %v709, 64
    %v719 = vpop.permute.xlu0 %718
    %720 = vrot.lane.b32.xlu0 %v710, 64
    %v721 = vpop.permute.xlu0 %720
    %722 = vrot.lane.b32.xlu0 %v711, 64
    %v723 = vpop.permute.xlu0 %722
    %v728 = vmul.f32 %v701, %v717
    %v729 = vmul.f32 %v703, %v719
    %v730 = vmul.f32 %v705, %v721
    %v731 = vmul.f32 %v707, %v723
    %v732 = vtanh.pop %v728
    %v733 = vtanh.pop %v729
    %v734 = vtanh.pop %v730
    %v735 = vtanh.pop %v731
    %740 = vrot.lane.b32.xlu0 %v732, 96
    %v741 = vpop.permute.xlu0 %740
    %742 = vrot.lane.b32.xlu0 %v733, 96
    %v743 = vpop.permute.xlu0 %742
    %744 = vrot.lane.b32.xlu0 %v734, 96
    %v745 = vpop.permute.xlu0 %744
    %746 = vrot.lane.b32.xlu0 %v735, 96
    %v747 = vpop.permute.xlu0 %746
    %v752 = vmul.f32 %v701, %v741
    %v753 = vmul.f32 %v703, %v743
    %v754 = vmul.f32 %v705, %v745
    %v755 = vmul.f32 %v707, %v747
    %760 = vrot.lane.b32.xlu0 %v752, 32
    %v761 = vpop.permute.xlu0 %760
    %762 = vrot.lane.b32.xlu0 %v753, 32
    %v763 = vpop.permute.xlu0 %762
    %764 = vrot.lane.b32.xlu0 %v754, 32
    %v765 = vpop.permute.xlu0 %764
    %766 = vrot.lane.b32.xlu0 %v755, 32
    %v767 = vpop.permute.xlu0 %766
    %772 = vrot.lane.b32.xlu0 %v468, 96
    %v773 = vpop.permute.xlu0 %772
    %774 = vrot.lane.b32.xlu0 %v470, 96
    %v775 = vpop.permute.xlu0 %774
    %776 = vrot.lane.b32.xlu0 %v472, 96
    %v777 = vpop.permute.xlu0 %776
    %778 = vrot.lane.b32.xlu0 %v474, 96
    %v779 = vpop.permute.xlu0 %778
    %785 = vrot.lane.b32.xlu0 %v480, 96
    %v786 = vpop.permute.xlu0 %785
    %v788 = vsel %vm481, %v761, 0
    %v790 = vsel %vm481, %v763, 0
    %v792 = vsel %vm481, %v765, 0
    %v794 = vsel %vm481, %v767, 0
    %796 = vmatprep.subr.mxu0 0.0
    %797 = vmatpush1.msra.mxu0 0.0
    %798 = vmatprep.subr.mxu0 0.0
    %799 = vmatpush1.msra.mxu0 0.0
    %800 = vmatprep.subr.mxu0 0.0
    %801 = vmatpush1.msra.mxu0 0.0
    %802 = vmatprep.subr.mxu0 0.0
    %803 = vmatpush1.msra.mxu0 0.0
    %804 = vmatprep.subr.mxu0 0.0
    %805 = vmatpush1.msra.mxu0 0.0
    %806 = vmatprep.subr.mxu0 0.0
    %807 = vmatpush1.msra.mxu0 0.0
    %808 = vmatprep.subr.mxu0 0.0
    %809 = vmatpush1.msra.mxu0 0.0
    %810 = vmatprep.subr.mxu0 0.0
    %811 = vmatpush1.msra.mxu0 0.0
    %812 = vmatprep.subr.mxu0 0.0
    %813 = vmatpush1.msra.mxu0 0.0
    %814 = vmatprep.subr.mxu0 0.0
    %815 = vmatpush1.msra.mxu0 0.0
    %816 = vmatprep.subr.mxu0 0.0
    %817 = vmatpush1.msra.mxu0 0.0
    %818 = vmatprep.subr.mxu0 0.0
    %819 = vmatpush1.msra.mxu0 0.0
    %820 = vmatprep.subr.mxu0 0.0
    %821 = vmatpush1.msra.mxu0 %v779
    %822 = vmatprep.subr.mxu0 0.0
    %823 = vmatpush1.msra.mxu0 %v777
    %824 = vmatprep.subr.mxu0 0.0
    %825 = vmatpush1.msra.mxu0 %v775
    %826 = vmatprep.subr.mxu0 0.0
    %827 = vmatpush1.msra.mxu0 %v773
    %828 = vmatprep.subr.mxu0 0.0
    %829 = vmatpush2.msra.mxu0 0.0
    %830 = vmatprep.subr.mxu0 0.0
    %831 = vmatpush2.msra.mxu0 0.0
    %832 = vmatprep.subr.mxu0 0.0
    %833 = vmatpush2.msra.mxu0 0.0
    %834 = vmatprep.subr.mxu0 0.0
    %835 = vmatpush2.msra.mxu0 0.0
    %836 = vmatprep.subr.mxu0 0.0
    %837 = vmatpush2.msra.mxu0 0.0
    %838 = vmatprep.subr.mxu0 0.0
    %839 = vmatpush2.msra.mxu0 0.0
    %840 = vmatprep.subr.mxu0 0.0
    %841 = vmatpush2.msra.mxu0 0.0
    %842 = vmatprep.subr.mxu0 0.0
    %843 = vmatpush2.msra.mxu0 0.0
    %844 = vmatprep.subr.mxu0 0.0
    %845 = vmatpush2.msra.mxu0 0.0
    %846 = vmatprep.subr.mxu0 0.0
    %847 = vmatpush2.msra.mxu0 0.0
    %848 = vmatprep.subr.mxu0 0.0
    %849 = vmatpush2.msra.mxu0 0.0
    %850 = vmatprep.subr.mxu0 0.0
    %851 = vmatpush2.msra.mxu0 0.0
    %852 = vmatprep.subr.mxu0 0.0
    %853 = vmatpush2.msra.mxu0 0.0
    %854 = vmatprep.subr.mxu0 0.0
    %855 = vmatpush2.msra.mxu0 0.0
    %856 = vmatprep.subr.mxu0 0.0
    %857 = vmatpush2.msra.mxu0 0.0
    %858 = vmatprep.subr.mxu0 0.0
    %859 = vmatpush2.msra.mxu0 0.0
    %860 = vmatprep.mubr.f32.mxu0 0.0
    %861 = vmatmul.mubr.f32.gmra.mxu0 %v788
    %v862 = vpop.f32.mrf.mxu0
    %v863 = vadd.f32 %v786, %v862
    %v864 = vpop.f32.mrf.mxu0
    %865 = vmatprep.mubr.f32.mxu0 0.0
    %866 = vmatmul.mubr.f32.gmra.mxu0 %v790
    %v867 = vpop.f32.mrf.mxu0
    %v868 = vadd.f32 %v786, %v867
    %v869 = vpop.f32.mrf.mxu0
    %870 = vmatprep.mubr.f32.mxu0 0.0
    %871 = vmatmul.mubr.f32.gmra.mxu0 %v792
    %v872 = vpop.f32.mrf.mxu0
    %v873 = vadd.f32 %v786, %v872
    %v874 = vpop.f32.mrf.mxu0
    %875 = vmatprep.mubr.f32.mxu0 0.0
    %876 = vmatmul.mubr.f32.gmra.mxu0 %v794
    %v877 = vpop.f32.mrf.mxu0
    %v878 = vadd.f32 %v786, %v877
    %v879 = vpop.f32.mrf.mxu0
    %880 = vdwg.mxu0
    %vm881 = vcmp.eq.s32.totalorder %v348, 3
    %v882 = vsel %vm881, 0.0, -10000.0
    %v885 = vunpack.c.l.s4 1966171168
    %v886 = vunpack.c.0.s8 %v885
    %v887 = vlaneseq
    %v888 = vshrl.u32 %v887, 7
    %v889 = vsub.s32 %v886, %v888
    %v890 = vrot.slane %v882, %v889
    %v891 = vcombine.high %v890, %v890
    %v893 = vunpack.c.l.s4 1966171168
    %v894 = vunpack.c.0.s8 %v893
    %v895 = vlaneseq
    %v896 = vshrl.u32 %v895, 7
    %v897 = vsub.s32 %v894, %v896
    %v898 = vrot.slane %v890, %v897
    %v900 = vunpack.c.l.s4 1966171168
    %v901 = vunpack.c.0.s8 %v900
    %v902 = vlaneseq
    %v903 = vshrl.u32 %v902, 7
    %v904 = vsub.s32 %v901, %v903
    %v905 = vrot.slane %v891, %v904
    %v906 = vcombine.high %v898, %v898
    %v907 = vcombine.high %v905, %v905
    %v908 = vlaneseq
    %v909 = vshrl.u32 %v908, 7
    %v910 = vsub.s32 0, %v909
    %v911 = vrot.slane %v898, %v910
    %v912 = vlaneseq
    %v913 = vshrl.u32 %v912, 7
    %v914 = vsub.s32 0, %v913
    %v915 = vrot.slane %v905, %v914
    %v916 = vlaneseq
    %v917 = vshrl.u32 %v916, 7
    %v918 = vsub.s32 0, %v917
    %v919 = vrot.slane %v906, %v918
    %v920 = vlaneseq
    %v921 = vshrl.u32 %v920, 7
    %v922 = vsub.s32 0, %v921
    %v923 = vrot.slane %v907, %v922
    %v928 = vadd.f32 %v911, %v475
    %v929 = vadd.f32 %v915, %v475
    %v930 = vadd.f32 %v919, %v475
    %v931 = vadd.f32 %v923, %v475
    %vm932 = vcmask 37889
    %v933 = vsel %vm932, %v928, -inf
    %934 = vmax.xlane.f32.xlu0 %v933
    %v935 = vpop.xlane.xlu0 %934
    %v936 = vsel %vm932, %v929, -inf
    %937 = vmax.xlane.f32.xlu0 %v936
    %v938 = vpop.xlane.xlu0 %937
    %v939 = vsel %vm932, %v930, -inf
    %940 = vmax.xlane.f32.xlu0 %v939
    %v941 = vpop.xlane.xlu0 %940
    %v942 = vsel %vm932, %v931, -inf
    %943 = vmax.xlane.f32.xlu0 %v942
    %v944 = vpop.xlane.xlu0 %943
    %vm945 = vcmp.eq.f32.partialorder %v928, %v935
    %vm946 = vcmp.eq.f32.partialorder %v929, %v938
    %vm947 = vcmp.eq.f32.partialorder %v930, %v941
    %vm948 = vcmp.eq.f32.partialorder %v931, %v944
    %v949 = vsel %vm945, %v348, 5
    %v950 = vsel %vm946, %v348, 5
    %v951 = vsel %vm947, %v348, 5
    %v952 = vsel %vm948, %v348, 5
    %v953 = vsel %vm932, %v949, 2147483647
    %v954 = vand.u32 %v953, 65535
    %v955 = vshra.s32 %v953, 16
    %v956 = vcvt.s32.f32 %v954
    %v957 = vcvt.s32.f32 %v955
    %958 = vmin.xlane.f32.xlu0 %v957
    %v959 = vpop.xlane.xlu0 %958
    %vm960 = vcmp.eq.f32.partialorder %v957, %v959
    %v961 = vsel %vm960, %v956, inf
    %962 = vmin.xlane.f32.xlu0 %v961
    %v963 = vpop.xlane.xlu0 %962
    %v964 = vcvt.f32.s32 %v963
    %v965 = vcvt.f32.s32 %v959
    %v966 = vshll.u32 %v965, 16
    %v967 = vadd.s32 %v966, %v964
    %v968 = vsel %vm932, %v950, 2147483647
    %v969 = vand.u32 %v968, 65535
    %v970 = vshra.s32 %v968, 16
    %v971 = vcvt.s32.f32 %v969
    %v972 = vcvt.s32.f32 %v970
    %973 = vmin.xlane.f32.xlu0 %v972
    %v974 = vpop.xlane.xlu0 %973
    %vm975 = vcmp.eq.f32.partialorder %v972, %v974
    %v976 = vsel %vm975, %v971, inf
    %977 = vmin.xlane.f32.xlu0 %v976
    %v978 = vpop.xlane.xlu0 %977
    %v979 = vcvt.f32.s32 %v978
    %v980 = vcvt.f32.s32 %v974
    %v981 = vshll.u32 %v980, 16
    %v982 = vadd.s32 %v981, %v979
    %v983 = vsel %vm932, %v951, 2147483647
    %v984 = vand.u32 %v983, 65535
    %v985 = vshra.s32 %v983, 16
    %v986 = vcvt.s32.f32 %v984
    %v987 = vcvt.s32.f32 %v985
    %988 = vmin.xlane.f32.xlu0 %v987
    %v989 = vpop.xlane.xlu0 %988
    %vm990 = vcmp.eq.f32.partialorder %v987, %v989
    %v991 = vsel %vm990, %v986, inf
    %992 = vmin.xlane.f32.xlu0 %v991
    %v993 = vpop.xlane.xlu0 %992
    %v994 = vcvt.f32.s32 %v993
    %v995 = vcvt.f32.s32 %v989
    %v996 = vshll.u32 %v995, 16
    %v997 = vadd.s32 %v996, %v994
    %v998 = vsel %vm932, %v952, 2147483647
    %v999 = vand.u32 %v998, 65535
    %v1000 = vshra.s32 %v998, 16
    %v1001 = vcvt.s32.f32 %v999
    %v1002 = vcvt.s32.f32 %v1000
    %1003 = vmin.xlane.f32.xlu0 %v1002
    %v1004 = vpop.xlane.xlu0 %1003
    %vm1005 = vcmp.eq.f32.partialorder %v1002, %v1004
    %v1006 = vsel %vm1005, %v1001, inf
    %1007 = vmin.xlane.f32.xlu0 %v1006
    %v1008 = vpop.xlane.xlu0 %1007
    %v1009 = vcvt.f32.s32 %v1008
    %v1010 = vcvt.f32.s32 %v1004
    %v1011 = vshll.u32 %v1010, 16
    %v1012 = vadd.s32 %v1011, %v1009
    %v1014 = vlaneseq
    %v1015 = vshrl.u32 %v1014, 7
    %v1016 = vsub.s32 0, %v1015
    %v1017 = vrot.slane %v863, %v1016
    %s1019 = sor.u32 256, 255
    %1020 = vbcast.lane.b32.xlu0 %v1017, %s1019
    %v1021 = vpop.permute.xlu0 %1020
    %v1022 = vlaneseq
    %v1023 = vshrl.u32 %v1022, 7
    %v1024 = vsub.s32 1, %v1023
    %v1025 = vrot.slane %v863, %v1024
    %s1027 = sor.u32 256, 255
    %1028 = vbcast.lane.b32.xlu0 %v1025, %s1027
    %v1029 = vpop.permute.xlu0 %1028
    %v1030 = vlaneseq
    %v1031 = vshrl.u32 %v1030, 7
    %v1032 = vsub.s32 2, %v1031
    %v1033 = vrot.slane %v863, %v1032
    %s1035 = sor.u32 256, 255
    %1036 = vbcast.lane.b32.xlu0 %v1033, %s1035
    %v1037 = vpop.permute.xlu0 %1036
    %v1038 = vlaneseq
    %v1039 = vshrl.u32 %v1038, 7
    %v1040 = vsub.s32 3, %v1039
    %v1041 = vrot.slane %v863, %v1040
    %s1043 = sor.u32 256, 255
    %1044 = vbcast.lane.b32.xlu0 %v1041, %s1043
    %v1045 = vpop.permute.xlu0 %1044
    %v1050 = vadd.f32 %v935, %v1021
    %v1051 = vadd.f32 %v938, %v1029
    %v1052 = vadd.f32 %v941, %v1037
    %v1053 = vadd.f32 %v944, %v1045
    %v1055 = vlaneseq
    %v1056 = vshrl.u32 %v1055, 7
    %v1057 = vsub.s32 1, %v1056
    %v1058 = vrot.slane %v475, %v1057
    %s1060 = sor.u32 256, 255
    %1061 = vbcast.lane.b32.xlu0 %v1058, %s1060
    %v1062 = vpop.permute.xlu0 %1061
    %v1063 = vlaneseq
    %v1064 = vshrl.u32 %v1063, 7
    %v1065 = vsub.s32 2, %v1064
    %v1066 = vrot.slane %v475, %v1065
    %s1068 = sor.u32 256, 255
    %1069 = vbcast.lane.b32.xlu0 %v1066, %s1068
    %v1070 = vpop.permute.xlu0 %1069
    %v1071 = vlaneseq
    %v1072 = vshrl.u32 %v1071, 7
    %v1073 = vsub.s32 3, %v1072
    %v1074 = vrot.slane %v475, %v1073
    %s1076 = sor.u32 256, 255
    %1077 = vbcast.lane.b32.xlu0 %v1074, %s1076
    %v1078 = vpop.permute.xlu0 %1077
    %v1079 = vlaneseq
    %v1080 = vshrl.u32 %v1079, 7
    %v1081 = vsub.s32 4, %v1080
    %v1082 = vrot.slane %v475, %v1081
    %s1084 = sor.u32 256, 255
    %1085 = vbcast.lane.b32.xlu0 %v1082, %s1084
    %v1086 = vpop.permute.xlu0 %1085
    %v1087 = vlaneseq
    %v1088 = vshrl.u32 %v1087, 7
    %v1089 = vsub.s32 5, %v1088
    %v1090 = vrot.slane %v475, %v1089
    %s1092 = sor.u32 256, 255
    %1093 = vbcast.lane.b32.xlu0 %v1090, %s1092
    %v1094 = vpop.permute.xlu0 %1093
    %v1100 = vadd.f32 %v1050, %v1062
    %v1101 = vadd.f32 %v1050, %v1070
    %v1102 = vadd.f32 %v1050, %v1078
    %v1103 = vadd.f32 %v1050, %v1086
    %v1104 = vadd.f32 %v1050, %v1094
    %v1105 = vadd.f32 %v1051, %v1062
    %v1106 = vadd.f32 %v1051, %v1070
    %v1107 = vadd.f32 %v1051, %v1078
    %v1108 = vadd.f32 %v1051, %v1086
    %v1109 = vadd.f32 %v1051, %v1094
    %v1110 = vadd.f32 %v1052, %v1062
    %v1111 = vadd.f32 %v1052, %v1070
    %v1112 = vadd.f32 %v1052, %v1078
    %v1113 = vadd.f32 %v1052, %v1086
    %v1114 = vadd.f32 %v1052, %v1094
    %v1115 = vadd.f32 %v1053, %v1062
    %v1116 = vadd.f32 %v1053, %v1070
    %v1117 = vadd.f32 %v1053, %v1078
    %v1118 = vadd.f32 %v1053, %v1086
    %v1119 = vadd.f32 %v1053, %v1094
    %1140 = vset.pattern.permute.xlu0 0
    %1141 = vperm.xlu0 %1140, %v1100
    %v1142 = vpop.permute.xlu0 %1141
    %1143 = vset.pattern.permute.xlu0 0
    %1144 = vperm.xlu0 %1143, %v1101
    %v1145 = vpop.permute.xlu0 %1144
    %1146 = vset.pattern.permute.xlu0 0
    %1147 = vperm.xlu0 %1146, %v1102
    %v1148 = vpop.permute.xlu0 %1147
    %1149 = vset.pattern.permute.xlu0 0
    %1150 = vperm.xlu0 %1149, %v1103
    %v1151 = vpop.permute.xlu0 %1150
    %1152 = vset.pattern.permute.xlu0 0
    %1153 = vperm.xlu0 %1152, %v1104
    %v1154 = vpop.permute.xlu0 %1153
    %1155 = vset.pattern.permute.xlu0 0
    %1156 = vperm.xlu0 %1155, %v1105
    %v1157 = vpop.permute.xlu0 %1156
    %1158 = vset.pattern.permute.xlu0 0
    %1159 = vperm.xlu0 %1158, %v1106
    %v1160 = vpop.permute.xlu0 %1159
    %1161 = vset.pattern.permute.xlu0 0
    %1162 = vperm.xlu0 %1161, %v1107
    %v1163 = vpop.permute.xlu0 %1162
    %1164 = vset.pattern.permute.xlu0 0
    %1165 = vperm.xlu0 %1164, %v1108
    %v1166 = vpop.permute.xlu0 %1165
    %1167 = vset.pattern.permute.xlu0 0
    %1168 = vperm.xlu0 %1167, %v1109
    %v1169 = vpop.permute.xlu0 %1168
    %1170 = vset.pattern.permute.xlu0 0
    %1171 = vperm.xlu0 %1170, %v1110
    %v1172 = vpop.permute.xlu0 %1171
    %1173 = vset.pattern.permute.xlu0 0
    %1174 = vperm.xlu0 %1173, %v1111
    %v1175 = vpop.permute.xlu0 %1174
    %1176 = vset.pattern.permute.xlu0 0
    %1177 = vperm.xlu0 %1176, %v1112
    %v1178 = vpop.permute.xlu0 %1177
    %1179 = vset.pattern.permute.xlu0 0
    %1180 = vperm.xlu0 %1179, %v1113
    %v1181 = vpop.permute.xlu0 %1180
    %1182 = vset.pattern.permute.xlu0 0
    %1183 = vperm.xlu0 %1182, %v1114
    %v1184 = vpop.permute.xlu0 %1183
    %1185 = vset.pattern.permute.xlu0 0
    %1186 = vperm.xlu0 %1185, %v1115
    %v1187 = vpop.permute.xlu0 %1186
    %1188 = vset.pattern.permute.xlu0 0
    %1189 = vperm.xlu0 %1188, %v1116
    %v1190 = vpop.permute.xlu0 %1189
    %1191 = vset.pattern.permute.xlu0 0
    %1192 = vperm.xlu0 %1191, %v1117
    %v1193 = vpop.permute.xlu0 %1192
    %1194 = vset.pattern.permute.xlu0 0
    %1195 = vperm.xlu0 %1194, %v1118
    %v1196 = vpop.permute.xlu0 %1195
    %1197 = vset.pattern.permute.xlu0 0
    %1198 = vperm.xlu0 %1197, %v1119
    %v1199 = vpop.permute.xlu0 %1198
    %v1200 = vlaneseq
    %v1201 = vshrl.u32 %v1200, 7
    %v1202 = vsub.s32 %v348, %v1201
    %v1203 = vrot.slane %v1142, %v1202
    %v1204 = vlaneseq
    %v1205 = vshrl.u32 %v1204, 7
    %v1206 = vsub.s32 %v348, %v1205
    %v1207 = vrot.slane %v1145, %v1206
    %v1208 = vlaneseq
    %v1209 = vshrl.u32 %v1208, 7
    %v1210 = vsub.s32 %v348, %v1209
    %v1211 = vrot.slane %v1148, %v1210
    %v1212 = vlaneseq
    %v1213 = vshrl.u32 %v1212, 7
    %v1214 = vsub.s32 %v348, %v1213
    %v1215 = vrot.slane %v1151, %v1214
    %v1216 = vlaneseq
    %v1217 = vshrl.u32 %v1216, 7
    %v1218 = vsub.s32 %v348, %v1217
    %v1219 = vrot.slane %v1154, %v1218
    %v1220 = vlaneseq
    %v1221 = vshrl.u32 %v1220, 7
    %v1222 = vsub.s32 %v348, %v1221
    %v1223 = vrot.slane %v1157, %v1222
    %v1224 = vlaneseq
    %v1225 = vshrl.u32 %v1224, 7
    %v1226 = vsub.s32 %v348, %v1225
    %v1227 = vrot.slane %v1160, %v1226
    %v1228 = vlaneseq
    %v1229 = vshrl.u32 %v1228, 7
    %v1230 = vsub.s32 %v348, %v1229
    %v1231 = vrot.slane %v1163, %v1230
    %v1232 = vlaneseq
    %v1233 = vshrl.u32 %v1232, 7
    %v1234 = vsub.s32 %v348, %v1233
    %v1235 = vrot.slane %v1166, %v1234
    %v1236 = vlaneseq
    %v1237 = vshrl.u32 %v1236, 7
    %v1238 = vsub.s32 %v348, %v1237
    %v1239 = vrot.slane %v1169, %v1238
    %v1240 = vlaneseq
    %v1241 = vshrl.u32 %v1240, 7
    %v1242 = vsub.s32 %v348, %v1241
    %v1243 = vrot.slane %v1172, %v1242
    %v1244 = vlaneseq
    %v1245 = vshrl.u32 %v1244, 7
    %v1246 = vsub.s32 %v348, %v1245
    %v1247 = vrot.slane %v1175, %v1246
    %v1248 = vlaneseq
    %v1249 = vshrl.u32 %v1248, 7
    %v1250 = vsub.s32 %v348, %v1249
    %v1251 = vrot.slane %v1178, %v1250
    %v1252 = vlaneseq
    %v1253 = vshrl.u32 %v1252, 7
    %v1254 = vsub.s32 %v348, %v1253
    %v1255 = vrot.slane %v1181, %v1254
    %v1256 = vlaneseq
    %v1257 = vshrl.u32 %v1256, 7
    %v1258 = vsub.s32 %v348, %v1257
    %v1259 = vrot.slane %v1184, %v1258
    %v1260 = vlaneseq
    %v1261 = vshrl.u32 %v1260, 7
    %v1262 = vsub.s32 %v348, %v1261
    %v1263 = vrot.slane %v1187, %v1262
    %v1264 = vlaneseq
    %v1265 = vshrl.u32 %v1264, 7
    %v1266 = vsub.s32 %v348, %v1265
    %v1267 = vrot.slane %v1190, %v1266
    %v1268 = vlaneseq
    %v1269 = vshrl.u32 %v1268, 7
    %v1270 = vsub.s32 %v348, %v1269
    %v1271 = vrot.slane %v1193, %v1270
    %v1272 = vlaneseq
    %v1273 = vshrl.u32 %v1272, 7
    %v1274 = vsub.s32 %v348, %v1273
    %v1275 = vrot.slane %v1196, %v1274
    %v1276 = vlaneseq
    %v1277 = vshrl.u32 %v1276, 7
    %v1278 = vsub.s32 %v348, %v1277
    %v1279 = vrot.slane %v1199, %v1278
    %vm1280 = vcmask 1041409
    %v1281 = vsel %vm1280, %v1207, %v1203
    %vm1282 = vcmask 1042434
    %v1283 = vsel %vm1282, %v1211, %v1281
    %vm1284 = vcmask 1043459
    %v1285 = vsel %vm1284, %v1215, %v1283
    %vm1286 = vcmask 1044484
    %v1287 = vsel %vm1286, %v1219, %v1285
    %v1288 = vsel %vm1280, %v1227, %v1223
    %v1289 = vsel %vm1282, %v1231, %v1288
    %v1290 = vsel %vm1284, %v1235, %v1289
    %v1291 = vsel %vm1286, %v1239, %v1290
    %v1292 = vsel %vm1280, %v1247, %v1243
    %v1293 = vsel %vm1282, %v1251, %v1292
    %v1294 = vsel %vm1284, %v1255, %v1293
    %v1295 = vsel %vm1286, %v1259, %v1294
    %v1296 = vsel %vm1280, %v1267, %v1263
    %v1297 = vsel %vm1282, %v1271, %v1296
    %v1298 = vsel %vm1284, %v1275, %v1297
    %v1299 = vsel %vm1286, %v1279, %v1298
    %vm1304 = vcmask 45064
    %v1305 = vsel %vm1304, %v1287, -inf
    %1306 = vmax.xlane.f32.xlu0 %v1305
    %v1307 = vpop.xlane.xlu0 %1306
    %v1308 = vsel %vm1304, %v1291, -inf
    %1309 = vmax.xlane.f32.xlu0 %v1308
    %v1310 = vpop.xlane.xlu0 %1309
    %v1311 = vsel %vm1304, %v1295, -inf
    %1312 = vmax.xlane.f32.xlu0 %v1311
    %v1313 = vpop.xlane.xlu0 %1312
    %v1314 = vsel %vm1304, %v1299, -inf
    %1315 = vmax.xlane.f32.xlu0 %v1314
    %v1316 = vpop.xlane.xlu0 %1315
    %v1321 = vlaneseq
    %v1322 = vshrl.u32 %v1321, 7
    %v1323 = vsub.s32 0, %v1322
    %v1324 = vrot.slane %v1307, %v1323
    %v1325 = vlaneseq
    %v1326 = vshrl.u32 %v1325, 7
    %v1327 = vsub.s32 1, %v1326
    %v1328 = vrot.slane %v1307, %v1327
    %v1329 = vlaneseq
    %v1330 = vshrl.u32 %v1329, 7
    %v1331 = vsub.s32 2, %v1330
    %v1332 = vrot.slane %v1307, %v1331
    %v1333 = vlaneseq
    %v1334 = vshrl.u32 %v1333, 7
    %v1335 = vsub.s32 3, %v1334
    %v1336 = vrot.slane %v1307, %v1335
    %v1337 = vlaneseq
    %v1338 = vshrl.u32 %v1337, 7
    %v1339 = vsub.s32 4, %v1338
    %v1340 = vrot.slane %v1307, %v1339
    %v1341 = vlaneseq
    %v1342 = vshrl.u32 %v1341, 7
    %v1343 = vsub.s32 0, %v1342
    %v1344 = vrot.slane %v1310, %v1343
    %v1345 = vlaneseq
    %v1346 = vshrl.u32 %v1345, 7
    %v1347 = vsub.s32 1, %v1346
    %v1348 = vrot.slane %v1310, %v1347
    %v1349 = vlaneseq
    %v1350 = vshrl.u32 %v1349, 7
    %v1351 = vsub.s32 2, %v1350
    %v1352 = vrot.slane %v1310, %v1351
    %v1353 = vlaneseq
    %v1354 = vshrl.u32 %v1353, 7
    %v1355 = vsub.s32 3, %v1354
    %v1356 = vrot.slane %v1310, %v1355
    %v1357 = vlaneseq
    %v1358 = vshrl.u32 %v1357, 7
    %v1359 = vsub.s32 4, %v1358
    %v1360 = vrot.slane %v1310, %v1359
    %v1361 = vlaneseq
    %v1362 = vshrl.u32 %v1361, 7
    %v1363 = vsub.s32 0, %v1362
    %v1364 = vrot.slane %v1313, %v1363
    %v1365 = vlaneseq
    %v1366 = vshrl.u32 %v1365, 7
    %v1367 = vsub.s32 1, %v1366
    %v1368 = vrot.slane %v1313, %v1367
    %v1369 = vlaneseq
    %v1370 = vshrl.u32 %v1369, 7
    %v1371 = vsub.s32 2, %v1370
    %v1372 = vrot.slane %v1313, %v1371
    %v1373 = vlaneseq
    %v1374 = vshrl.u32 %v1373, 7
    %v1375 = vsub.s32 3, %v1374
    %v1376 = vrot.slane %v1313, %v1375
    %v1377 = vlaneseq
    %v1378 = vshrl.u32 %v1377, 7
    %v1379 = vsub.s32 4, %v1378
    %v1380 = vrot.slane %v1313, %v1379
    %v1381 = vlaneseq
    %v1382 = vshrl.u32 %v1381, 7
    %v1383 = vsub.s32 0, %v1382
    %v1384 = vrot.slane %v1316, %v1383
    %v1385 = vlaneseq
    %v1386 = vshrl.u32 %v1385, 7
    %v1387 = vsub.s32 1, %v1386
    %v1388 = vrot.slane %v1316, %v1387
    %v1389 = vlaneseq
    %v1390 = vshrl.u32 %v1389, 7
    %v1391 = vsub.s32 2, %v1390
    %v1392 = vrot.slane %v1316, %v1391
    %v1393 = vlaneseq
    %v1394 = vshrl.u32 %v1393, 7
    %v1395 = vsub.s32 3, %v1394
    %v1396 = vrot.slane %v1316, %v1395
    %v1397 = vlaneseq
    %v1398 = vshrl.u32 %v1397, 7
    %v1399 = vsub.s32 4, %v1398
    %v1400 = vrot.slane %v1316, %v1399
    %vm1421 = vcmp.eq.f32.partialorder %v1100, %v1324
    %vm1422 = vcmp.eq.f32.partialorder %v1101, %v1328
    %vm1423 = vcmp.eq.f32.partialorder %v1102, %v1332
    %vm1424 = vcmp.eq.f32.partialorder %v1103, %v1336
    %vm1425 = vcmp.eq.f32.partialorder %v1104, %v1340
    %vm1426 = vcmp.eq.f32.partialorder %v1105, %v1344
    %vm1427 = vcmp.eq.f32.partialorder %v1106, %v1348
    %vm1428 = vcmp.eq.f32.partialorder %v1107, %v1352
    %vm1429 = vcmp.eq.f32.partialorder %v1108, %v1356
    %vm1430 = vcmp.eq.f32.partialorder %v1109, %v1360
    %vm1431 = vcmp.eq.f32.partialorder %v1110, %v1364
    %vm1432 = vcmp.eq.f32.partialorder %v1111, %v1368
    %vm1433 = vcmp.eq.f32.partialorder %v1112, %v1372
    %vm1434 = vcmp.eq.f32.partialorder %v1113, %v1376
    %vm1435 = vcmp.eq.f32.partialorder %v1114, %v1380
    %vm1436 = vcmp.eq.f32.partialorder %v1115, %v1384
    %vm1437 = vcmp.eq.f32.partialorder %v1116, %v1388
    %vm1438 = vcmp.eq.f32.partialorder %v1117, %v1392
    %vm1439 = vcmp.eq.f32.partialorder %v1118, %v1396
    %vm1440 = vcmp.eq.f32.partialorder %v1119, %v1400
    %s1442 = sor.u32 256, 255
    %1443 = vbcast.lane.b32.xlu0 %v348, %s1442
    %v1444 = vpop.permute.xlu0 %1443
    %v1445 = vsel %vm1421, %v1444, 5
    %v1446 = vsel %vm1422, %v1444, 5
    %v1447 = vsel %vm1423, %v1444, 5
    %v1448 = vsel %vm1424, %v1444, 5
    %v1449 = vsel %vm1425, %v1444, 5
    %v1450 = vsel %vm1426, %v1444, 5
    %v1451 = vsel %vm1427, %v1444, 5
    %v1452 = vsel %vm1428, %v1444, 5
    %v1453 = vsel %vm1429, %v1444, 5
    %v1454 = vsel %vm1430, %v1444, 5
    %v1455 = vsel %vm1431, %v1444, 5
    %v1456 = vsel %vm1432, %v1444, 5
    %v1457 = vsel %vm1433, %v1444, 5
    %v1458 = vsel %vm1434, %v1444, 5
    %v1459 = vsel %vm1435, %v1444, 5
    %v1460 = vsel %vm1436, %v1444, 5
    %v1461 = vsel %vm1437, %v1444, 5
    %v1462 = vsel %vm1438, %v1444, 5
    %v1463 = vsel %vm1439, %v1444, 5
    %v1464 = vsel %vm1440, %v1444, 5
    %1465 = vset.pattern.permute.xlu0 0
    %1466 = vperm.xlu0 %1465, %v1445
    %v1467 = vpop.permute.xlu0 %1466
    %1468 = vset.pattern.permute.xlu0 0
    %1469 = vperm.xlu0 %1468, %v1446
    %v1470 = vpop.permute.xlu0 %1469
    %1471 = vset.pattern.permute.xlu0 0
    %1472 = vperm.xlu0 %1471, %v1447
    %v1473 = vpop.permute.xlu0 %1472
    %1474 = vset.pattern.permute.xlu0 0
    %1475 = vperm.xlu0 %1474, %v1448
    %v1476 = vpop.permute.xlu0 %1475
    %1477 = vset.pattern.permute.xlu0 0
    %1478 = vperm.xlu0 %1477, %v1449
    %v1479 = vpop.permute.xlu0 %1478
    %1480 = vset.pattern.permute.xlu0 0
    %1481 = vperm.xlu0 %1480, %v1450
    %v1482 = vpop.permute.xlu0 %1481
    %1483 = vset.pattern.permute.xlu0 0
    %1484 = vperm.xlu0 %1483, %v1451
    %v1485 = vpop.permute.xlu0 %1484
    %1486 = vset.pattern.permute.xlu0 0
    %1487 = vperm.xlu0 %1486, %v1452
    %v1488 = vpop.permute.xlu0 %1487
    %1489 = vset.pattern.permute.xlu0 0
    %1490 = vperm.xlu0 %1489, %v1453
    %v1491 = vpop.permute.xlu0 %1490
    %1492 = vset.pattern.permute.xlu0 0
    %1493 = vperm.xlu0 %1492, %v1454
    %v1494 = vpop.permute.xlu0 %1493
    %1495 = vset.pattern.permute.xlu0 0
    %1496 = vperm.xlu0 %1495, %v1455
    %v1497 = vpop.permute.xlu0 %1496
    %1498 = vset.pattern.permute.xlu0 0
    %1499 = vperm.xlu0 %1498, %v1456
    %v1500 = vpop.permute.xlu0 %1499
    %1501 = vset.pattern.permute.xlu0 0
    %1502 = vperm.xlu0 %1501, %v1457
    %v1503 = vpop.permute.xlu0 %1502
    %1504 = vset.pattern.permute.xlu0 0
    %1505 = vperm.xlu0 %1504, %v1458
    %v1506 = vpop.permute.xlu0 %1505
    %1507 = vset.pattern.permute.xlu0 0
    %1508 = vperm.xlu0 %1507, %v1459
    %v1509 = vpop.permute.xlu0 %1508
    %1510 = vset.pattern.permute.xlu0 0
    %1511 = vperm.xlu0 %1510, %v1460
    %v1512 = vpop.permute.xlu0 %1511
    %1513 = vset.pattern.permute.xlu0 0
    %1514 = vperm.xlu0 %1513, %v1461
    %v1515 = vpop.permute.xlu0 %1514
    %1516 = vset.pattern.permute.xlu0 0
    %1517 = vperm.xlu0 %1516, %v1462
    %v1518 = vpop.permute.xlu0 %1517
    %1519 = vset.pattern.permute.xlu0 0
    %1520 = vperm.xlu0 %1519, %v1463
    %v1521 = vpop.permute.xlu0 %1520
    %1522 = vset.pattern.permute.xlu0 0
    %1523 = vperm.xlu0 %1522, %v1464
    %v1524 = vpop.permute.xlu0 %1523
    %v1525 = vlaneseq
    %v1526 = vshrl.u32 %v1525, 7
    %v1527 = vsub.s32 %v348, %v1526
    %v1528 = vrot.slane %v1467, %v1527
    %v1529 = vlaneseq
    %v1530 = vshrl.u32 %v1529, 7
    %v1531 = vsub.s32 %v348, %v1530
    %v1532 = vrot.slane %v1470, %v1531
    %v1533 = vlaneseq
    %v1534 = vshrl.u32 %v1533, 7
    %v1535 = vsub.s32 %v348, %v1534
    %v1536 = vrot.slane %v1473, %v1535
    %v1537 = vlaneseq
    %v1538 = vshrl.u32 %v1537, 7
    %v1539 = vsub.s32 %v348, %v1538
    %v1540 = vrot.slane %v1476, %v1539
    %v1541 = vlaneseq
    %v1542 = vshrl.u32 %v1541, 7
    %v1543 = vsub.s32 %v348, %v1542
    %v1544 = vrot.slane %v1479, %v1543
    %v1545 = vlaneseq
    %v1546 = vshrl.u32 %v1545, 7
    %v1547 = vsub.s32 %v348, %v1546
    %v1548 = vrot.slane %v1482, %v1547
    %v1549 = vlaneseq
    %v1550 = vshrl.u32 %v1549, 7
    %v1551 = vsub.s32 %v348, %v1550
    %v1552 = vrot.slane %v1485, %v1551
    %v1553 = vlaneseq
    %v1554 = vshrl.u32 %v1553, 7
    %v1555 = vsub.s32 %v348, %v1554
    %v1556 = vrot.slane %v1488, %v1555
    %v1557 = vlaneseq
    %v1558 = vshrl.u32 %v1557, 7
    %v1559 = vsub.s32 %v348, %v1558
    %v1560 = vrot.slane %v1491, %v1559
    %v1561 = vlaneseq
    %v1562 = vshrl.u32 %v1561, 7
    %v1563 = vsub.s32 %v348, %v1562
    %v1564 = vrot.slane %v1494, %v1563
    %v1565 = vlaneseq
    %v1566 = vshrl.u32 %v1565, 7
    %v1567 = vsub.s32 %v348, %v1566
    %v1568 = vrot.slane %v1497, %v1567
    %v1569 = vlaneseq
    %v1570 = vshrl.u32 %v1569, 7
    %v1571 = vsub.s32 %v348, %v1570
    %v1572 = vrot.slane %v1500, %v1571
    %v1573 = vlaneseq
    %v1574 = vshrl.u32 %v1573, 7
    %v1575 = vsub.s32 %v348, %v1574
    %v1576 = vrot.slane %v1503, %v1575
    %v1577 = vlaneseq
    %v1578 = vshrl.u32 %v1577, 7
    %v1579 = vsub.s32 %v348, %v1578
    %v1580 = vrot.slane %v1506, %v1579
    %v1581 = vlaneseq
    %v1582 = vshrl.u32 %v1581, 7
    %v1583 = vsub.s32 %v348, %v1582
    %v1584 = vrot.slane %v1509, %v1583
    %v1585 = vlaneseq
    %v1586 = vshrl.u32 %v1585, 7
    %v1587 = vsub.s32 %v348, %v1586
    %v1588 = vrot.slane %v1512, %v1587
    %v1589 = vlaneseq
    %v1590 = vshrl.u32 %v1589, 7
    %v1591 = vsub.s32 %v348, %v1590
    %v1592 = vrot.slane %v1515, %v1591
    %v1593 = vlaneseq
    %v1594 = vshrl.u32 %v1593, 7
    %v1595 = vsub.s32 %v348, %v1594
    %v1596 = vrot.slane %v1518, %v1595
    %v1597 = vlaneseq
    %v1598 = vshrl.u32 %v1597, 7
    %v1599 = vsub.s32 %v348, %v1598
    %v1600 = vrot.slane %v1521, %v1599
    %v1601 = vlaneseq
    %v1602 = vshrl.u32 %v1601, 7
    %v1603 = vsub.s32 %v348, %v1602
    %v1604 = vrot.slane %v1524, %v1603
    %v1605 = vsel %vm1280, %v1532, %v1528
    %v1606 = vsel %vm1282, %v1536, %v1605
    %v1607 = vsel %vm1284, %v1540, %v1606
    %v1608 = vsel %vm1286, %v1544, %v1607
    %v1609 = vsel %vm1280, %v1552, %v1548
    %v1610 = vsel %vm1282, %v1556, %v1609
    %v1611 = vsel %vm1284, %v1560, %v1610
    %v1612 = vsel %vm1286, %v1564, %v1611
    %v1613 = vsel %vm1280, %v1572, %v1568
    %v1614 = vsel %vm1282, %v1576, %v1613
    %v1615 = vsel %vm1284, %v1580, %v1614
    %v1616 = vsel %vm1286, %v1584, %v1615
    %v1617 = vsel %vm1280, %v1592, %v1588
    %v1618 = vsel %vm1282, %v1596, %v1617
    %v1619 = vsel %vm1284, %v1600, %v1618
    %v1620 = vsel %vm1286, %v1604, %v1619
    %v1621 = vsel %vm1304, %v1608, 2147483647
    %v1622 = vand.u32 %v1621, 65535
    %v1623 = vshra.s32 %v1621, 16
    %v1624 = vcvt.s32.f32 %v1622
    %v1625 = vcvt.s32.f32 %v1623
    %1626 = vmin.xlane.f32.xlu0 %v1625
    %v1627 = vpop.xlane.xlu0 %1626
    %vm1628 = vcmp.eq.f32.partialorder %v1625, %v1627
    %v1629 = vsel %vm1628, %v1624, inf
    %1630 = vmin.xlane.f32.xlu0 %v1629
    %v1631 = vpop.xlane.xlu0 %1630
    %v1632 = vcvt.f32.s32 %v1631
    %v1633 = vcvt.f32.s32 %v1627
    %v1634 = vshll.u32 %v1633, 16
    %v1635 = vadd.s32 %v1634, %v1632
    %v1636 = vsel %vm1304, %v1612, 2147483647
    %v1637 = vand.u32 %v1636, 65535
    %v1638 = vshra.s32 %v1636, 16
    %v1639 = vcvt.s32.f32 %v1637
    %v1640 = vcvt.s32.f32 %v1638
    %1641 = vmin.xlane.f32.xlu0 %v1640
    %v1642 = vpop.xlane.xlu0 %1641
    %vm1643 = vcmp.eq.f32.partialorder %v1640, %v1642
    %v1644 = vsel %vm1643, %v1639, inf
    %1645 = vmin.xlane.f32.xlu0 %v1644
    %v1646 = vpop.xlane.xlu0 %1645
    %v1647 = vcvt.f32.s32 %v1646
    %v1648 = vcvt.f32.s32 %v1642
    %v1649 = vshll.u32 %v1648, 16
    %v1650 = vadd.s32 %v1649, %v1647
    %v1651 = vsel %vm1304, %v1616, 2147483647
    %v1652 = vand.u32 %v1651, 65535
    %v1653 = vshra.s32 %v1651, 16
    %v1654 = vcvt.s32.f32 %v1652
    %v1655 = vcvt.s32.f32 %v1653
    %1656 = vmin.xlane.f32.xlu0 %v1655
    %v1657 = vpop.xlane.xlu0 %1656
    %vm1658 = vcmp.eq.f32.partialorder %v1655, %v1657
    %v1659 = vsel %vm1658, %v1654, inf
    %1660 = vmin.xlane.f32.xlu0 %v1659
    %v1661 = vpop.xlane.xlu0 %1660
    %v1662 = vcvt.f32.s32 %v1661
    %v1663 = vcvt.f32.s32 %v1657
    %v1664 = vshll.u32 %v1663, 16
    %v1665 = vadd.s32 %v1664, %v1662
    %v1666 = vsel %vm1304, %v1620, 2147483647
    %v1667 = vand.u32 %v1666, 65535
    %v1668 = vshra.s32 %v1666, 16
    %v1669 = vcvt.s32.f32 %v1667
    %v1670 = vcvt.s32.f32 %v1668
    %1671 = vmin.xlane.f32.xlu0 %v1670
    %v1672 = vpop.xlane.xlu0 %1671
    %vm1673 = vcmp.eq.f32.partialorder %v1670, %v1672
    %v1674 = vsel %vm1673, %v1669, inf
    %1675 = vmin.xlane.f32.xlu0 %v1674
    %v1676 = vpop.xlane.xlu0 %1675
    %v1677 = vcvt.f32.s32 %v1676
    %v1678 = vcvt.f32.s32 %v1672
    %v1679 = vshll.u32 %v1678, 16
    %v1680 = vadd.s32 %v1679, %v1677
    %v1681 = vlaneseq
    %v1682 = vshrl.u32 %v1681, 7
    %v1683 = vsub.s32 4, %v1682
    %v1684 = vrot.slane %v863, %v1683
    %1686 = vbcast.lane.b32.xlu0 %v1684, 256
    %v1687 = vpop.permute.xlu0 %1686
    %v1688 = vlaneseq
    %v1689 = vshrl.u32 %v1688, 7
    %v1690 = vsub.s32 5, %v1689
    %v1691 = vrot.slane %v863, %v1690
    %1693 = vbcast.lane.b32.xlu0 %v1691, 256
    %v1694 = vpop.permute.xlu0 %1693
    %v1695 = vlaneseq
    %v1696 = vshrl.u32 %v1695, 7
    %v1697 = vsub.s32 6, %v1696
    %v1698 = vrot.slane %v863, %v1697
    %1700 = vbcast.lane.b32.xlu0 %v1698, 256
    %v1701 = vpop.permute.xlu0 %1700
    %v1702 = vlaneseq
    %v1703 = vshrl.u32 %v1702, 7
    %v1704 = vsub.s32 7, %v1703
    %v1705 = vrot.slane %v863, %v1704
    %1707 = vbcast.lane.b32.xlu0 %v1705, 256
    %v1708 = vpop.permute.xlu0 %1707
    %v1713 = vadd.f32 %v1307, %v1687
    %v1714 = vadd.f32 %v1310, %v1694
    %v1715 = vadd.f32 %v1313, %v1701
    %v1716 = vadd.f32 %v1316, %v1708
    %1718 = vbcast.lane.b32.xlu0 %v1058, 256
    %v1719 = vpop.permute.xlu0 %1718
    %1721 = vbcast.lane.b32.xlu0 %v1066, 256
    %v1722 = vpop.permute.xlu0 %1721
    %1724 = vbcast.lane.b32.xlu0 %v1074, 256
    %v1725 = vpop.permute.xlu0 %1724
    %1727 = vbcast.lane.b32.xlu0 %v1082, 256
    %v1728 = vpop.permute.xlu0 %1727
    %1730 = vbcast.lane.b32.xlu0 %v1090, 256
    %v1731 = vpop.permute.xlu0 %1730
    %v1737 = vadd.f32 %v1713, %v1719
    %v1738 = vadd.f32 %v1713, %v1722
    %v1739 = vadd.f32 %v1713, %v1725
    %v1740 = vadd.f32 %v1713, %v1728
    %v1741 = vadd.f32 %v1713, %v1731
    %v1742 = vadd.f32 %v1714, %v1719
    %v1743 = vadd.f32 %v1714, %v1722
    %v1744 = vadd.f32 %v1714, %v1725
    %v1745 = vadd.f32 %v1714, %v1728
    %v1746 = vadd.f32 %v1714, %v1731
    %v1747 = vadd.f32 %v1715, %v1719
    %v1748 = vadd.f32 %v1715, %v1722
    %v1749 = vadd.f32 %v1715, %v1725
    %v1750 = vadd.f32 %v1715, %v1728
    %v1751 = vadd.f32 %v1715, %v1731
    %v1752 = vadd.f32 %v1716, %v1719
    %v1753 = vadd.f32 %v1716, %v1722
    %v1754 = vadd.f32 %v1716, %v1725
    %v1755 = vadd.f32 %v1716, %v1728
    %v1756 = vadd.f32 %v1716, %v1731
    %1777 = vset.pattern.permute.xlu0 0
    %1778 = vperm.xlu0 %1777, %v1737
    %v1779 = vpop.permute.xlu0 %1778
    %1780 = vset.pattern.permute.xlu0 0
    %1781 = vperm.xlu0 %1780, %v1738
    %v1782 = vpop.permute.xlu0 %1781
    %1783 = vset.pattern.permute.xlu0 0
    %1784 = vperm.xlu0 %1783, %v1739
    %v1785 = vpop.permute.xlu0 %1784
    %1786 = vset.pattern.permute.xlu0 0
    %1787 = vperm.xlu0 %1786, %v1740
    %v1788 = vpop.permute.xlu0 %1787
    %1789 = vset.pattern.permute.xlu0 0
    %1790 = vperm.xlu0 %1789, %v1741
    %v1791 = vpop.permute.xlu0 %1790
    %1792 = vset.pattern.permute.xlu0 0
    %1793 = vperm.xlu0 %1792, %v1742
    %v1794 = vpop.permute.xlu0 %1793
    %1795 = vset.pattern.permute.xlu0 0
    %1796 = vperm.xlu0 %1795, %v1743
    %v1797 = vpop.permute.xlu0 %1796
    %1798 = vset.pattern.permute.xlu0 0
    %1799 = vperm.xlu0 %1798, %v1744
    %v1800 = vpop.permute.xlu0 %1799
    %1801 = vset.pattern.permute.xlu0 0
    %1802 = vperm.xlu0 %1801, %v1745
    %v1803 = vpop.permute.xlu0 %1802
    %1804 = vset.pattern.permute.xlu0 0
    %1805 = vperm.xlu0 %1804, %v1746
    %v1806 = vpop.permute.xlu0 %1805
    %1807 = vset.pattern.permute.xlu0 0
    %1808 = vperm.xlu0 %1807, %v1747
    %v1809 = vpop.permute.xlu0 %1808
    %1810 = vset.pattern.permute.xlu0 0
    %1811 = vperm.xlu0 %1810, %v1748
    %v1812 = vpop.permute.xlu0 %1811
    %1813 = vset.pattern.permute.xlu0 0
    %1814 = vperm.xlu0 %1813, %v1749
    %v1815 = vpop.permute.xlu0 %1814
    %1816 = vset.pattern.permute.xlu0 0
    %1817 = vperm.xlu0 %1816, %v1750
    %v1818 = vpop.permute.xlu0 %1817
    %1819 = vset.pattern.permute.xlu0 0
    %1820 = vperm.xlu0 %1819, %v1751
    %v1821 = vpop.permute.xlu0 %1820
    %1822 = vset.pattern.permute.xlu0 0
    %1823 = vperm.xlu0 %1822, %v1752
    %v1824 = vpop.permute.xlu0 %1823
    %1825 = vset.pattern.permute.xlu0 0
    %1826 = vperm.xlu0 %1825, %v1753
    %v1827 = vpop.permute.xlu0 %1826
    %1828 = vset.pattern.permute.xlu0 0
    %1829 = vperm.xlu0 %1828, %v1754
    %v1830 = vpop.permute.xlu0 %1829
    %1831 = vset.pattern.permute.xlu0 0
    %1832 = vperm.xlu0 %1831, %v1755
    %v1833 = vpop.permute.xlu0 %1832
    %1834 = vset.pattern.permute.xlu0 0
    %1835 = vperm.xlu0 %1834, %v1756
    %v1836 = vpop.permute.xlu0 %1835
    %v1837 = vlaneseq
    %v1838 = vshrl.u32 %v1837, 7
    %v1839 = vsub.s32 %v348, %v1838
    %v1840 = vrot.slane %v1779, %v1839
    %v1841 = vlaneseq
    %v1842 = vshrl.u32 %v1841, 7
    %v1843 = vsub.s32 %v348, %v1842
    %v1844 = vrot.slane %v1782, %v1843
    %v1845 = vlaneseq
    %v1846 = vshrl.u32 %v1845, 7
    %v1847 = vsub.s32 %v348, %v1846
    %v1848 = vrot.slane %v1785, %v1847
    %v1849 = vlaneseq
    %v1850 = vshrl.u32 %v1849, 7
    %v1851 = vsub.s32 %v348, %v1850
    %v1852 = vrot.slane %v1788, %v1851
    %v1853 = vlaneseq
    %v1854 = vshrl.u32 %v1853, 7
    %v1855 = vsub.s32 %v348, %v1854
    %v1856 = vrot.slane %v1791, %v1855
    %v1857 = vlaneseq
    %v1858 = vshrl.u32 %v1857, 7
    %v1859 = vsub.s32 %v348, %v1858
    %v1860 = vrot.slane %v1794, %v1859
    %v1861 = vlaneseq
    %v1862 = vshrl.u32 %v1861, 7
    %v1863 = vsub.s32 %v348, %v1862
    %v1864 = vrot.slane %v1797, %v1863
    %v1865 = vlaneseq
    %v1866 = vshrl.u32 %v1865, 7
    %v1867 = vsub.s32 %v348, %v1866
    %v1868 = vrot.slane %v1800, %v1867
    %v1869 = vlaneseq
    %v1870 = vshrl.u32 %v1869, 7
    %v1871 = vsub.s32 %v348, %v1870
    %v1872 = vrot.slane %v1803, %v1871
    %v1873 = vlaneseq
    %v1874 = vshrl.u32 %v1873, 7
    %v1875 = vsub.s32 %v348, %v1874
    %v1876 = vrot.slane %v1806, %v1875
    %v1877 = vlaneseq
    %v1878 = vshrl.u32 %v1877, 7
    %v1879 = vsub.s32 %v348, %v1878
    %v1880 = vrot.slane %v1809, %v1879
    %v1881 = vlaneseq
    %v1882 = vshrl.u32 %v1881, 7
    %v1883 = vsub.s32 %v348, %v1882
    %v1884 = vrot.slane %v1812, %v1883
    %v1885 = vlaneseq
    %v1886 = vshrl.u32 %v1885, 7
    %v1887 = vsub.s32 %v348, %v1886
    %v1888 = vrot.slane %v1815, %v1887
    %v1889 = vlaneseq
    %v1890 = vshrl.u32 %v1889, 7
    %v1891 = vsub.s32 %v348, %v1890
    %v1892 = vrot.slane %v1818, %v1891
    %v1893 = vlaneseq
    %v1894 = vshrl.u32 %v1893, 7
    %v1895 = vsub.s32 %v348, %v1894
    %v1896 = vrot.slane %v1821, %v1895
    %v1897 = vlaneseq
    %v1898 = vshrl.u32 %v1897, 7
    %v1899 = vsub.s32 %v348, %v1898
    %v1900 = vrot.slane %v1824, %v1899
    %v1901 = vlaneseq
    %v1902 = vshrl.u32 %v1901, 7
    %v1903 = vsub.s32 %v348, %v1902
    %v1904 = vrot.slane %v1827, %v1903
    %v1905 = vlaneseq
    %v1906 = vshrl.u32 %v1905, 7
    %v1907 = vsub.s32 %v348, %v1906
    %v1908 = vrot.slane %v1830, %v1907
    %v1909 = vlaneseq
    %v1910 = vshrl.u32 %v1909, 7
    %v1911 = vsub.s32 %v348, %v1910
    %v1912 = vrot.slane %v1833, %v1911
    %v1913 = vlaneseq
    %v1914 = vshrl.u32 %v1913, 7
    %v1915 = vsub.s32 %v348, %v1914
    %v1916 = vrot.slane %v1836, %v1915
    %v1917 = vsel %vm1280, %v1844, %v1840
    %v1918 = vsel %vm1282, %v1848, %v1917
    %v1919 = vsel %vm1284, %v1852, %v1918
    %v1920 = vsel %vm1286, %v1856, %v1919
    %v1921 = vsel %vm1280, %v1864, %v1860
    %v1922 = vsel %vm1282, %v1868, %v1921
    %v1923 = vsel %vm1284, %v1872, %v1922
    %v1924 = vsel %vm1286, %v1876, %v1923
    %v1925 = vsel %vm1280, %v1884, %v1880
    %v1926 = vsel %vm1282, %v1888, %v1925
    %v1927 = vsel %vm1284, %v1892, %v1926
    %v1928 = vsel %vm1286, %v1896, %v1927
    %v1929 = vsel %vm1280, %v1904, %v1900
    %v1930 = vsel %vm1282, %v1908, %v1929
    %v1931 = vsel %vm1284, %v1912, %v1930
    %v1932 = vsel %vm1286, %v1916, %v1931
    %vm1937 = vcmask 36864
    %v1938 = vsel %vm1937, %v1920, -inf
    %1939 = vmax.xlane.f32.xlu0 %v1938
    %v1940 = vpop.xlane.xlu0 %1939
    %v1941 = vsel %vm1937, %v1924, -inf
    %1942 = vmax.xlane.f32.xlu0 %v1941
    %v1943 = vpop.xlane.xlu0 %1942
    %v1944 = vsel %vm1937, %v1928, -inf
    %1945 = vmax.xlane.f32.xlu0 %v1944
    %v1946 = vpop.xlane.xlu0 %1945
    %v1947 = vsel %vm1937, %v1932, -inf
    %1948 = vmax.xlane.f32.xlu0 %v1947
    %v1949 = vpop.xlane.xlu0 %1948
    %v1954 = vlaneseq
    %v1955 = vshrl.u32 %v1954, 7
    %v1956 = vsub.s32 0, %v1955
    %v1957 = vrot.slane %v1940, %v1956
    %v1958 = vlaneseq
    %v1959 = vshrl.u32 %v1958, 7
    %v1960 = vsub.s32 1, %v1959
    %v1961 = vrot.slane %v1940, %v1960
    %v1962 = vlaneseq
    %v1963 = vshrl.u32 %v1962, 7
    %v1964 = vsub.s32 2, %v1963
    %v1965 = vrot.slane %v1940, %v1964
    %v1966 = vlaneseq
    %v1967 = vshrl.u32 %v1966, 7
    %v1968 = vsub.s32 3, %v1967
    %v1969 = vrot.slane %v1940, %v1968
    %v1970 = vlaneseq
    %v1971 = vshrl.u32 %v1970, 7
    %v1972 = vsub.s32 4, %v1971
    %v1973 = vrot.slane %v1940, %v1972
    %v1974 = vlaneseq
    %v1975 = vshrl.u32 %v1974, 7
    %v1976 = vsub.s32 0, %v1975
    %v1977 = vrot.slane %v1943, %v1976
    %v1978 = vlaneseq
    %v1979 = vshrl.u32 %v1978, 7
    %v1980 = vsub.s32 1, %v1979
    %v1981 = vrot.slane %v1943, %v1980
    %v1982 = vlaneseq
    %v1983 = vshrl.u32 %v1982, 7
    %v1984 = vsub.s32 2, %v1983
    %v1985 = vrot.slane %v1943, %v1984
    %v1986 = vlaneseq
    %v1987 = vshrl.u32 %v1986, 7
    %v1988 = vsub.s32 3, %v1987
    %v1989 = vrot.slane %v1943, %v1988
    %v1990 = vlaneseq
    %v1991 = vshrl.u32 %v1990, 7
    %v1992 = vsub.s32 4, %v1991
    %v1993 = vrot.slane %v1943, %v1992
    %v1994 = vlaneseq
    %v1995 = vshrl.u32 %v1994, 7
    %v1996 = vsub.s32 0, %v1995
    %v1997 = vrot.slane %v1946, %v1996
    %v1998 = vlaneseq
    %v1999 = vshrl.u32 %v1998, 7
    %v2000 = vsub.s32 1, %v1999
    %v2001 = vrot.slane %v1946, %v2000
    %v2002 = vlaneseq
    %v2003 = vshrl.u32 %v2002, 7
    %v2004 = vsub.s32 2, %v2003
    %v2005 = vrot.slane %v1946, %v2004
    %v2006 = vlaneseq
    %v2007 = vshrl.u32 %v2006, 7
    %v2008 = vsub.s32 3, %v2007
    %v2009 = vrot.slane %v1946, %v2008
    %v2010 = vlaneseq
    %v2011 = vshrl.u32 %v2010, 7
    %v2012 = vsub.s32 4, %v2011
    %v2013 = vrot.slane %v1946, %v2012
    %v2014 = vlaneseq
    %v2015 = vshrl.u32 %v2014, 7
    %v2016 = vsub.s32 0, %v2015
    %v2017 = vrot.slane %v1949, %v2016
    %v2018 = vlaneseq
    %v2019 = vshrl.u32 %v2018, 7
    %v2020 = vsub.s32 1, %v2019
    %v2021 = vrot.slane %v1949, %v2020
    %v2022 = vlaneseq
    %v2023 = vshrl.u32 %v2022, 7
    %v2024 = vsub.s32 2, %v2023
    %v2025 = vrot.slane %v1949, %v2024
    %v2026 = vlaneseq
    %v2027 = vshrl.u32 %v2026, 7
    %v2028 = vsub.s32 3, %v2027
    %v2029 = vrot.slane %v1949, %v2028
    %v2030 = vlaneseq
    %v2031 = vshrl.u32 %v2030, 7
    %v2032 = vsub.s32 4, %v2031
    %v2033 = vrot.slane %v1949, %v2032
    %vm2054 = vcmp.eq.f32.partialorder %v1737, %v1957
    %vm2055 = vcmp.eq.f32.partialorder %v1738, %v1961
    %vm2056 = vcmp.eq.f32.partialorder %v1739, %v1965
    %vm2057 = vcmp.eq.f32.partialorder %v1740, %v1969
    %vm2058 = vcmp.eq.f32.partialorder %v1741, %v1973
    %vm2059 = vcmp.eq.f32.partialorder %v1742, %v1977
    %vm2060 = vcmp.eq.f32.partialorder %v1743, %v1981
    %vm2061 = vcmp.eq.f32.partialorder %v1744, %v1985
    %vm2062 = vcmp.eq.f32.partialorder %v1745, %v1989
    %vm2063 = vcmp.eq.f32.partialorder %v1746, %v1993
    %vm2064 = vcmp.eq.f32.partialorder %v1747, %v1997
    %vm2065 = vcmp.eq.f32.partialorder %v1748, %v2001
    %vm2066 = vcmp.eq.f32.partialorder %v1749, %v2005
    %vm2067 = vcmp.eq.f32.partialorder %v1750, %v2009
    %vm2068 = vcmp.eq.f32.partialorder %v1751, %v2013
    %vm2069 = vcmp.eq.f32.partialorder %v1752, %v2017
    %vm2070 = vcmp.eq.f32.partialorder %v1753, %v2021
    %vm2071 = vcmp.eq.f32.partialorder %v1754, %v2025
    %vm2072 = vcmp.eq.f32.partialorder %v1755, %v2029
    %vm2073 = vcmp.eq.f32.partialorder %v1756, %v2033
    %2075 = vbcast.lane.b32.xlu0 %v348, 256
    %v2076 = vpop.permute.xlu0 %2075
    %v2077 = vsel %vm2054, %v2076, 5
    %v2078 = vsel %vm2055, %v2076, 5
    %v2079 = vsel %vm2056, %v2076, 5
    %v2080 = vsel %vm2057, %v2076, 5
    %v2081 = vsel %vm2058, %v2076, 5
    %v2082 = vsel %vm2059, %v2076, 5
    %v2083 = vsel %vm2060, %v2076, 5
    %v2084 = vsel %vm2061, %v2076, 5
    %v2085 = vsel %vm2062, %v2076, 5
    %v2086 = vsel %vm2063, %v2076, 5
    %v2087 = vsel %vm2064, %v2076, 5
    %v2088 = vsel %vm2065, %v2076, 5
    %v2089 = vsel %vm2066, %v2076, 5
    %v2090 = vsel %vm2067, %v2076, 5
    %v2091 = vsel %vm2068, %v2076, 5
    %v2092 = vsel %vm2069, %v2076, 5
    %v2093 = vsel %vm2070, %v2076, 5
    %v2094 = vsel %vm2071, %v2076, 5
    %v2095 = vsel %vm2072, %v2076, 5
    %v2096 = vsel %vm2073, %v2076, 5
    %2097 = vset.pattern.permute.xlu0 0
    %2098 = vperm.xlu0 %2097, %v2077
    %v2099 = vpop.permute.xlu0 %2098
    %2100 = vset.pattern.permute.xlu0 0
    %2101 = vperm.xlu0 %2100, %v2078
    %v2102 = vpop.permute.xlu0 %2101
    %2103 = vset.pattern.permute.xlu0 0
    %2104 = vperm.xlu0 %2103, %v2079
    %v2105 = vpop.permute.xlu0 %2104
    %2106 = vset.pattern.permute.xlu0 0
    %2107 = vperm.xlu0 %2106, %v2080
    %v2108 = vpop.permute.xlu0 %2107
    %2109 = vset.pattern.permute.xlu0 0
    %2110 = vperm.xlu0 %2109, %v2081
    %v2111 = vpop.permute.xlu0 %2110
    %2112 = vset.pattern.permute.xlu0 0
    %2113 = vperm.xlu0 %2112, %v2082
    %v2114 = vpop.permute.xlu0 %2113
    %2115 = vset.pattern.permute.xlu0 0
    %2116 = vperm.xlu0 %2115, %v2083
    %v2117 = vpop.permute.xlu0 %2116
    %2118 = vset.pattern.permute.xlu0 0
    %2119 = vperm.xlu0 %2118, %v2084
    %v2120 = vpop.permute.xlu0 %2119
    %2121 = vset.pattern.permute.xlu0 0
    %2122 = vperm.xlu0 %2121, %v2085
    %v2123 = vpop.permute.xlu0 %2122
    %2124 = vset.pattern.permute.xlu0 0
    %2125 = vperm.xlu0 %2124, %v2086
    %v2126 = vpop.permute.xlu0 %2125
    %2127 = vset.pattern.permute.xlu0 0
    %2128 = vperm.xlu0 %2127, %v2087
    %v2129 = vpop.permute.xlu0 %2128
    %2130 = vset.pattern.permute.xlu0 0
    %2131 = vperm.xlu0 %2130, %v2088
    %v2132 = vpop.permute.xlu0 %2131
    %2133 = vset.pattern.permute.xlu0 0
    %2134 = vperm.xlu0 %2133, %v2089
    %v2135 = vpop.permute.xlu0 %2134
    %2136 = vset.pattern.permute.xlu0 0
    %2137 = vperm.xlu0 %2136, %v2090
    %v2138 = vpop.permute.xlu0 %2137
    %2139 = vset.pattern.permute.xlu0 0
    %2140 = vperm.xlu0 %2139, %v2091
    %v2141 = vpop.permute.xlu0 %2140
    %2142 = vset.pattern.permute.xlu0 0
    %2143 = vperm.xlu0 %2142, %v2092
    %v2144 = vpop.permute.xlu0 %2143
    %2145 = vset.pattern.permute.xlu0 0
    %2146 = vperm.xlu0 %2145, %v2093
    %v2147 = vpop.permute.xlu0 %2146
    %2148 = vset.pattern.permute.xlu0 0
    %2149 = vperm.xlu0 %2148, %v2094
    %v2150 = vpop.permute.xlu0 %2149
    %2151 = vset.pattern.permute.xlu0 0
    %2152 = vperm.xlu0 %2151, %v2095
    %v2153 = vpop.permute.xlu0 %2152
    %2154 = vset.pattern.permute.xlu0 0
    %2155 = vperm.xlu0 %2154, %v2096
    %v2156 = vpop.permute.xlu0 %2155
    %v2157 = vlaneseq
    %v2158 = vshrl.u32 %v2157, 7
    %v2159 = vsub.s32 %v348, %v2158
    %v2160 = vrot.slane %v2099, %v2159
    %v2161 = vlaneseq
    %v2162 = vshrl.u32 %v2161, 7
    %v2163 = vsub.s32 %v348, %v2162
    %v2164 = vrot.slane %v2102, %v2163
    %v2165 = vlaneseq
    %v2166 = vshrl.u32 %v2165, 7
    %v2167 = vsub.s32 %v348, %v2166
    %v2168 = vrot.slane %v2105, %v2167
    %v2169 = vlaneseq
    %v2170 = vshrl.u32 %v2169, 7
    %v2171 = vsub.s32 %v348, %v2170
    %v2172 = vrot.slane %v2108, %v2171
    %v2173 = vlaneseq
    %v2174 = vshrl.u32 %v2173, 7
    %v2175 = vsub.s32 %v348, %v2174
    %v2176 = vrot.slane %v2111, %v2175
    %v2177 = vlaneseq
    %v2178 = vshrl.u32 %v2177, 7
    %v2179 = vsub.s32 %v348, %v2178
    %v2180 = vrot.slane %v2114, %v2179
    %v2181 = vlaneseq
    %v2182 = vshrl.u32 %v2181, 7
    %v2183 = vsub.s32 %v348, %v2182
    %v2184 = vrot.slane %v2117, %v2183
    %v2185 = vlaneseq
    %v2186 = vshrl.u32 %v2185, 7
    %v2187 = vsub.s32 %v348, %v2186
    %v2188 = vrot.slane %v2120, %v2187
    %v2189 = vlaneseq
    %v2190 = vshrl.u32 %v2189, 7
    %v2191 = vsub.s32 %v348, %v2190
    %v2192 = vrot.slane %v2123, %v2191
    %v2193 = vlaneseq
    %v2194 = vshrl.u32 %v2193, 7
    %v2195 = vsub.s32 %v348, %v2194
    %v2196 = vrot.slane %v2126, %v2195
    %v2197 = vlaneseq
    %v2198 = vshrl.u32 %v2197, 7
    %v2199 = vsub.s32 %v348, %v2198
    %v2200 = vrot.slane %v2129, %v2199
    %v2201 = vlaneseq
    %v2202 = vshrl.u32 %v2201, 7
    %v2203 = vsub.s32 %v348, %v2202
    %v2204 = vrot.slane %v2132, %v2203
    %v2205 = vlaneseq
    %v2206 = vshrl.u32 %v2205, 7
    %v2207 = vsub.s32 %v348, %v2206
    %v2208 = vrot.slane %v2135, %v2207
    %v2209 = vlaneseq
    %v2210 = vshrl.u32 %v2209, 7
    %v2211 = vsub.s32 %v348, %v2210
    %v2212 = vrot.slane %v2138, %v2211
    %v2213 = vlaneseq
    %v2214 = vshrl.u32 %v2213, 7
    %v2215 = vsub.s32 %v348, %v2214
    %v2216 = vrot.slane %v2141, %v2215
    %v2217 = vlaneseq
    %v2218 = vshrl.u32 %v2217, 7
    %v2219 = vsub.s32 %v348, %v2218
    %v2220 = vrot.slane %v2144, %v2219
    %v2221 = vlaneseq
    %v2222 = vshrl.u32 %v2221, 7
    %v2223 = vsub.s32 %v348, %v2222
    %v2224 = vrot.slane %v2147, %v2223
    %v2225 = vlaneseq
    %v2226 = vshrl.u32 %v2225, 7
    %v2227 = vsub.s32 %v348, %v2226
    %v2228 = vrot.slane %v2150, %v2227
    %v2229 = vlaneseq
    %v2230 = vshrl.u32 %v2229, 7
    %v2231 = vsub.s32 %v348, %v2230
    %v2232 = vrot.slane %v2153, %v2231
    %v2233 = vlaneseq
    %v2234 = vshrl.u32 %v2233, 7
    %v2235 = vsub.s32 %v348, %v2234
    %v2236 = vrot.slane %v2156, %v2235
    %v2237 = vsel %vm1280, %v2164, %v2160
    %v2238 = vsel %vm1282, %v2168, %v2237
    %v2239 = vsel %vm1284, %v2172, %v2238
    %v2240 = vsel %vm1286, %v2176, %v2239
    %v2241 = vsel %vm1280, %v2184, %v2180
    %v2242 = vsel %vm1282, %v2188, %v2241
    %v2243 = vsel %vm1284, %v2192, %v2242
    %v2244 = vsel %vm1286, %v2196, %v2243
    %v2245 = vsel %vm1280, %v2204, %v2200
    %v2246 = vsel %vm1282, %v2208, %v2245
    %v2247 = vsel %vm1284, %v2212, %v2246
    %v2248 = vsel %vm1286, %v2216, %v2247
    %v2249 = vsel %vm1280, %v2224, %v2220
    %v2250 = vsel %vm1282, %v2228, %v2249
    %v2251 = vsel %vm1284, %v2232, %v2250
    %v2252 = vsel %vm1286, %v2236, %v2251
    %v2253 = vsel %vm1937, %v2240, 2147483647
    %v2254 = vand.u32 %v2253, 65535
    %v2255 = vshra.s32 %v2253, 16
    %v2256 = vcvt.s32.f32 %v2254
    %v2257 = vcvt.s32.f32 %v2255
    %2258 = vmin.xlane.f32.xlu0 %v2257
    %v2259 = vpop.xlane.xlu0 %2258
    %vm2260 = vcmp.eq.f32.partialorder %v2257, %v2259
    %v2261 = vsel %vm2260, %v2256, inf
    %2262 = vmin.xlane.f32.xlu0 %v2261
    %v2263 = vpop.xlane.xlu0 %2262
    %v2264 = vcvt.f32.s32 %v2263
    %v2265 = vcvt.f32.s32 %v2259
    %v2266 = vshll.u32 %v2265, 16
    %v2267 = vadd.s32 %v2266, %v2264
    %v2268 = vsel %vm1937, %v2244, 2147483647
    %v2269 = vand.u32 %v2268, 65535
    %v2270 = vshra.s32 %v2268, 16
    %v2271 = vcvt.s32.f32 %v2269
    %v2272 = vcvt.s32.f32 %v2270
    %2273 = vmin.xlane.f32.xlu0 %v2272
    %v2274 = vpop.xlane.xlu0 %2273
    %vm2275 = vcmp.eq.f32.partialorder %v2272, %v2274
    %v2276 = vsel %vm2275, %v2271, inf
    %2277 = vmin.xlane.f32.xlu0 %v2276
    %v2278 = vpop.xlane.xlu0 %2277
    %v2279 = vcvt.f32.s32 %v2278
    %v2280 = vcvt.f32.s32 %v2274
    %v2281 = vshll.u32 %v2280, 16
    %v2282 = vadd.s32 %v2281, %v2279
    %v2283 = vsel %vm1937, %v2248, 2147483647
    %v2284 = vand.u32 %v2283, 65535
    %v2285 = vshra.s32 %v2283, 16
    %v2286 = vcvt.s32.f32 %v2284
    %v2287 = vcvt.s32.f32 %v2285
    %2288 = vmin.xlane.f32.xlu0 %v2287
    %v2289 = vpop.xlane.xlu0 %2288
    %vm2290 = vcmp.eq.f32.partialorder %v2287, %v2289
    %v2291 = vsel %vm2290, %v2286, inf
    %2292 = vmin.xlane.f32.xlu0 %v2291
    %v2293 = vpop.xlane.xlu0 %2292
    %v2294 = vcvt.f32.s32 %v2293
    %v2295 = vcvt.f32.s32 %v2289
    %v2296 = vshll.u32 %v2295, 16
    %v2297 = vadd.s32 %v2296, %v2294
    %v2298 = vsel %vm1937, %v2252, 2147483647
    %v2299 = vand.u32 %v2298, 65535
    %v2300 = vshra.s32 %v2298, 16
    %v2301 = vcvt.s32.f32 %v2299
    %v2302 = vcvt.s32.f32 %v2300
    %2303 = vmin.xlane.f32.xlu0 %v2302
    %v2304 = vpop.xlane.xlu0 %2303
    %vm2305 = vcmp.eq.f32.partialorder %v2302, %v2304
    %v2306 = vsel %vm2305, %v2301, inf
    %2307 = vmin.xlane.f32.xlu0 %v2306
    %v2308 = vpop.xlane.xlu0 %2307
    %v2309 = vcvt.f32.s32 %v2308
    %v2310 = vcvt.f32.s32 %v2304
    %v2311 = vshll.u32 %v2310, 16
    %v2312 = vadd.s32 %v2311, %v2309
    %v2314 = vlaneseq
    %v2315 = vshrl.u32 %v2314, 7
    %v2316 = vsub.s32 0, %v2315
    %v2317 = vrot.slane %v868, %v2316
    %2319 = vbcast.lane.b32.xlu0 %v2317, 256
    %v2320 = vpop.permute.xlu0 %2319
    %v2321 = vlaneseq
    %v2322 = vshrl.u32 %v2321, 7
    %v2323 = vsub.s32 1, %v2322
    %v2324 = vrot.slane %v868, %v2323
    %2326 = vbcast.lane.b32.xlu0 %v2324, 256
    %v2327 = vpop.permute.xlu0 %2326
    %v2328 = vlaneseq
    %v2329 = vshrl.u32 %v2328, 7
    %v2330 = vsub.s32 2, %v2329
    %v2331 = vrot.slane %v868, %v2330
    %2333 = vbcast.lane.b32.xlu0 %v2331, 256
    %v2334 = vpop.permute.xlu0 %2333
    %v2335 = vlaneseq
    %v2336 = vshrl.u32 %v2335, 7
    %v2337 = vsub.s32 3, %v2336
    %v2338 = vrot.slane %v868, %v2337
    %2340 = vbcast.lane.b32.xlu0 %v2338, 256
    %v2341 = vpop.permute.xlu0 %2340
    %v2346 = vadd.f32 %v1940, %v2320
    %v2347 = vadd.f32 %v1943, %v2327
    %v2348 = vadd.f32 %v1946, %v2334
    %v2349 = vadd.f32 %v1949, %v2341
    %v2350 = vadd.f32 %v2346, %v1719
    %v2351 = vadd.f32 %v2346, %v1722
    %v2352 = vadd.f32 %v2346, %v1725
    %v2353 = vadd.f32 %v2346, %v1728
    %v2354 = vadd.f32 %v2346, %v1731
    %v2355 = vadd.f32 %v2347, %v1719
    %v2356 = vadd.f32 %v2347, %v1722
    %v2357 = vadd.f32 %v2347, %v1725
    %v2358 = vadd.f32 %v2347, %v1728
    %v2359 = vadd.f32 %v2347, %v1731
    %v2360 = vadd.f32 %v2348, %v1719
    %v2361 = vadd.f32 %v2348, %v1722
    %v2362 = vadd.f32 %v2348, %v1725
    %v2363 = vadd.f32 %v2348, %v1728
    %v2364 = vadd.f32 %v2348, %v1731
    %v2365 = vadd.f32 %v2349, %v1719
    %v2366 = vadd.f32 %v2349, %v1722
    %v2367 = vadd.f32 %v2349, %v1725
    %v2368 = vadd.f32 %v2349, %v1728
    %v2369 = vadd.f32 %v2349, %v1731
    %2390 = vset.pattern.permute.xlu0 0
    %2391 = vperm.xlu0 %2390, %v2350
    %v2392 = vpop.permute.xlu0 %2391
    %2393 = vset.pattern.permute.xlu0 0
    %2394 = vperm.xlu0 %2393, %v2351
    %v2395 = vpop.permute.xlu0 %2394
    %2396 = vset.pattern.permute.xlu0 0
    %2397 = vperm.xlu0 %2396, %v2352
    %v2398 = vpop.permute.xlu0 %2397
    %2399 = vset.pattern.permute.xlu0 0
    %2400 = vperm.xlu0 %2399, %v2353
    %v2401 = vpop.permute.xlu0 %2400
    %2402 = vset.pattern.permute.xlu0 0
    %2403 = vperm.xlu0 %2402, %v2354
    %v2404 = vpop.permute.xlu0 %2403
    %2405 = vset.pattern.permute.xlu0 0
    %2406 = vperm.xlu0 %2405, %v2355
    %v2407 = vpop.permute.xlu0 %2406
    %2408 = vset.pattern.permute.xlu0 0
    %2409 = vperm.xlu0 %2408, %v2356
    %v2410 = vpop.permute.xlu0 %2409
    %2411 = vset.pattern.permute.xlu0 0
    %2412 = vperm.xlu0 %2411, %v2357
    %v2413 = vpop.permute.xlu0 %2412
    %2414 = vset.pattern.permute.xlu0 0
    %2415 = vperm.xlu0 %2414, %v2358
    %v2416 = vpop.permute.xlu0 %2415
    %2417 = vset.pattern.permute.xlu0 0
    %2418 = vperm.xlu0 %2417, %v2359
    %v2419 = vpop.permute.xlu0 %2418
    %2420 = vset.pattern.permute.xlu0 0
    %2421 = vperm.xlu0 %2420, %v2360
    %v2422 = vpop.permute.xlu0 %2421
    %2423 = vset.pattern.permute.xlu0 0
    %2424 = vperm.xlu0 %2423, %v2361
    %v2425 = vpop.permute.xlu0 %2424
    %2426 = vset.pattern.permute.xlu0 0
    %2427 = vperm.xlu0 %2426, %v2362
    %v2428 = vpop.permute.xlu0 %2427
    %2429 = vset.pattern.permute.xlu0 0
    %2430 = vperm.xlu0 %2429, %v2363
    %v2431 = vpop.permute.xlu0 %2430
    %2432 = vset.pattern.permute.xlu0 0
    %2433 = vperm.xlu0 %2432, %v2364
    %v2434 = vpop.permute.xlu0 %2433
    %2435 = vset.pattern.permute.xlu0 0
    %2436 = vperm.xlu0 %2435, %v2365
    %v2437 = vpop.permute.xlu0 %2436
    %2438 = vset.pattern.permute.xlu0 0
    %2439 = vperm.xlu0 %2438, %v2366
    %v2440 = vpop.permute.xlu0 %2439
    %2441 = vset.pattern.permute.xlu0 0
    %2442 = vperm.xlu0 %2441, %v2367
    %v2443 = vpop.permute.xlu0 %2442
    %2444 = vset.pattern.permute.xlu0 0
    %2445 = vperm.xlu0 %2444, %v2368
    %v2446 = vpop.permute.xlu0 %2445
    %2447 = vset.pattern.permute.xlu0 0
    %2448 = vperm.xlu0 %2447, %v2369
    %v2449 = vpop.permute.xlu0 %2448
    %v2450 = vlaneseq
    %v2451 = vshrl.u32 %v2450, 7
    %v2452 = vsub.s32 %v348, %v2451
    %v2453 = vrot.slane %v2392, %v2452
    %v2454 = vlaneseq
    %v2455 = vshrl.u32 %v2454, 7
    %v2456 = vsub.s32 %v348, %v2455
    %v2457 = vrot.slane %v2395, %v2456
    %v2458 = vlaneseq
    %v2459 = vshrl.u32 %v2458, 7
    %v2460 = vsub.s32 %v348, %v2459
    %v2461 = vrot.slane %v2398, %v2460
    %v2462 = vlaneseq
    %v2463 = vshrl.u32 %v2462, 7
    %v2464 = vsub.s32 %v348, %v2463
    %v2465 = vrot.slane %v2401, %v2464
    %v2466 = vlaneseq
    %v2467 = vshrl.u32 %v2466, 7
    %v2468 = vsub.s32 %v348, %v2467
    %v2469 = vrot.slane %v2404, %v2468
    %v2470 = vlaneseq
    %v2471 = vshrl.u32 %v2470, 7
    %v2472 = vsub.s32 %v348, %v2471
    %v2473 = vrot.slane %v2407, %v2472
    %v2474 = vlaneseq
    %v2475 = vshrl.u32 %v2474, 7
    %v2476 = vsub.s32 %v348, %v2475
    %v2477 = vrot.slane %v2410, %v2476
    %v2478 = vlaneseq
    %v2479 = vshrl.u32 %v2478, 7
    %v2480 = vsub.s32 %v348, %v2479
    %v2481 = vrot.slane %v2413, %v2480
    %v2482 = vlaneseq
    %v2483 = vshrl.u32 %v2482, 7
    %v2484 = vsub.s32 %v348, %v2483
    %v2485 = vrot.slane %v2416, %v2484
    %v2486 = vlaneseq
    %v2487 = vshrl.u32 %v2486, 7
    %v2488 = vsub.s32 %v348, %v2487
    %v2489 = vrot.slane %v2419, %v2488
    %v2490 = vlaneseq
    %v2491 = vshrl.u32 %v2490, 7
    %v2492 = vsub.s32 %v348, %v2491
    %v2493 = vrot.slane %v2422, %v2492
    %v2494 = vlaneseq
    %v2495 = vshrl.u32 %v2494, 7
    %v2496 = vsub.s32 %v348, %v2495
    %v2497 = vrot.slane %v2425, %v2496
    %v2498 = vlaneseq
    %v2499 = vshrl.u32 %v2498, 7
    %v2500 = vsub.s32 %v348, %v2499
    %v2501 = vrot.slane %v2428, %v2500
    %v2502 = vlaneseq
    %v2503 = vshrl.u32 %v2502, 7
    %v2504 = vsub.s32 %v348, %v2503
    %v2505 = vrot.slane %v2431, %v2504
    %v2506 = vlaneseq
    %v2507 = vshrl.u32 %v2506, 7
    %v2508 = vsub.s32 %v348, %v2507
    %v2509 = vrot.slane %v2434, %v2508
    %v2510 = vlaneseq
    %v2511 = vshrl.u32 %v2510, 7
    %v2512 = vsub.s32 %v348, %v2511
    %v2513 = vrot.slane %v2437, %v2512
    %v2514 = vlaneseq
    %v2515 = vshrl.u32 %v2514, 7
    %v2516 = vsub.s32 %v348, %v2515
    %v2517 = vrot.slane %v2440, %v2516
    %v2518 = vlaneseq
    %v2519 = vshrl.u32 %v2518, 7
    %v2520 = vsub.s32 %v348, %v2519
    %v2521 = vrot.slane %v2443, %v2520
    %v2522 = vlaneseq
    %v2523 = vshrl.u32 %v2522, 7
    %v2524 = vsub.s32 %v348, %v2523
    %v2525 = vrot.slane %v2446, %v2524
    %v2526 = vlaneseq
    %v2527 = vshrl.u32 %v2526, 7
    %v2528 = vsub.s32 %v348, %v2527
    %v2529 = vrot.slane %v2449, %v2528
    %v2530 = vsel %vm1280, %v2457, %v2453
    %v2531 = vsel %vm1282, %v2461, %v2530
    %v2532 = vsel %vm1284, %v2465, %v2531
    %v2533 = vsel %vm1286, %v2469, %v2532
    %v2534 = vsel %vm1280, %v2477, %v2473
    %v2535 = vsel %vm1282, %v2481, %v2534
    %v2536 = vsel %vm1284, %v2485, %v2535
    %v2537 = vsel %vm1286, %v2489, %v2536
    %v2538 = vsel %vm1280, %v2497, %v2493
    %v2539 = vsel %vm1282, %v2501, %v2538
    %v2540 = vsel %vm1284, %v2505, %v2539
    %v2541 = vsel %vm1286, %v2509, %v2540
    %v2542 = vsel %vm1280, %v2517, %v2513
    %v2543 = vsel %vm1282, %v2521, %v2542
    %v2544 = vsel %vm1284, %v2525, %v2543
    %v2545 = vsel %vm1286, %v2529, %v2544
    %v2550 = vsel %vm1937, %v2533, -inf
    %2551 = vmax.xlane.f32.xlu0 %v2550
    %v2552 = vpop.xlane.xlu0 %2551
    %v2553 = vsel %vm1937, %v2537, -inf
    %2554 = vmax.xlane.f32.xlu0 %v2553
    %v2555 = vpop.xlane.xlu0 %2554
    %v2556 = vsel %vm1937, %v2541, -inf
    %2557 = vmax.xlane.f32.xlu0 %v2556
    %v2558 = vpop.xlane.xlu0 %2557
    %v2559 = vsel %vm1937, %v2545, -inf
    %2560 = vmax.xlane.f32.xlu0 %v2559
    %v2561 = vpop.xlane.xlu0 %2560
    %v2566 = vlaneseq
    %v2567 = vshrl.u32 %v2566, 7
    %v2568 = vsub.s32 0, %v2567
    %v2569 = vrot.slane %v2552, %v2568
    %v2570 = vlaneseq
    %v2571 = vshrl.u32 %v2570, 7
    %v2572 = vsub.s32 1, %v2571
    %v2573 = vrot.slane %v2552, %v2572
    %v2574 = vlaneseq
    %v2575 = vshrl.u32 %v2574, 7
    %v2576 = vsub.s32 2, %v2575
    %v2577 = vrot.slane %v2552, %v2576
    %v2578 = vlaneseq
    %v2579 = vshrl.u32 %v2578, 7
    %v2580 = vsub.s32 3, %v2579
    %v2581 = vrot.slane %v2552, %v2580
    %v2582 = vlaneseq
    %v2583 = vshrl.u32 %v2582, 7
    %v2584 = vsub.s32 4, %v2583
    %v2585 = vrot.slane %v2552, %v2584
    %v2586 = vlaneseq
    %v2587 = vshrl.u32 %v2586, 7
    %v2588 = vsub.s32 0, %v2587
    %v2589 = vrot.slane %v2555, %v2588
    %v2590 = vlaneseq
    %v2591 = vshrl.u32 %v2590, 7
    %v2592 = vsub.s32 1, %v2591
    %v2593 = vrot.slane %v2555, %v2592
    %v2594 = vlaneseq
    %v2595 = vshrl.u32 %v2594, 7
    %v2596 = vsub.s32 2, %v2595
    %v2597 = vrot.slane %v2555, %v2596
    %v2598 = vlaneseq
    %v2599 = vshrl.u32 %v2598, 7
    %v2600 = vsub.s32 3, %v2599
    %v2601 = vrot.slane %v2555, %v2600
    %v2602 = vlaneseq
    %v2603 = vshrl.u32 %v2602, 7
    %v2604 = vsub.s32 4, %v2603
    %v2605 = vrot.slane %v2555, %v2604
    %v2606 = vlaneseq
    %v2607 = vshrl.u32 %v2606, 7
    %v2608 = vsub.s32 0, %v2607
    %v2609 = vrot.slane %v2558, %v2608
    %v2610 = vlaneseq
    %v2611 = vshrl.u32 %v2610, 7
    %v2612 = vsub.s32 1, %v2611
    %v2613 = vrot.slane %v2558, %v2612
    %v2614 = vlaneseq
    %v2615 = vshrl.u32 %v2614, 7
    %v2616 = vsub.s32 2, %v2615
    %v2617 = vrot.slane %v2558, %v2616
    %v2618 = vlaneseq
    %v2619 = vshrl.u32 %v2618, 7
    %v2620 = vsub.s32 3, %v2619
    %v2621 = vrot.slane %v2558, %v2620
    %v2622 = vlaneseq
    %v2623 = vshrl.u32 %v2622, 7
    %v2624 = vsub.s32 4, %v2623
    %v2625 = vrot.slane %v2558, %v2624
    %v2626 = vlaneseq
    %v2627 = vshrl.u32 %v2626, 7
    %v2628 = vsub.s32 0, %v2627
    %v2629 = vrot.slane %v2561, %v2628
    %v2630 = vlaneseq
    %v2631 = vshrl.u32 %v2630, 7
    %v2632 = vsub.s32 1, %v2631
    %v2633 = vrot.slane %v2561, %v2632
    %v2634 = vlaneseq
    %v2635 = vshrl.u32 %v2634, 7
    %v2636 = vsub.s32 2, %v2635
    %v2637 = vrot.slane %v2561, %v2636
    %v2638 = vlaneseq
    %v2639 = vshrl.u32 %v2638, 7
    %v2640 = vsub.s32 3, %v2639
    %v2641 = vrot.slane %v2561, %v2640
    %v2642 = vlaneseq
    %v2643 = vshrl.u32 %v2642, 7
    %v2644 = vsub.s32 4, %v2643
    %v2645 = vrot.slane %v2561, %v2644
    %vm2666 = vcmp.eq.f32.partialorder %v2350, %v2569
    %vm2667 = vcmp.eq.f32.partialorder %v2351, %v2573
    %vm2668 = vcmp.eq.f32.partialorder %v2352, %v2577
    %vm2669 = vcmp.eq.f32.partialorder %v2353, %v2581
    %vm2670 = vcmp.eq.f32.partialorder %v2354, %v2585
    %vm2671 = vcmp.eq.f32.partialorder %v2355, %v2589
    %vm2672 = vcmp.eq.f32.partialorder %v2356, %v2593
    %vm2673 = vcmp.eq.f32.partialorder %v2357, %v2597
    %vm2674 = vcmp.eq.f32.partialorder %v2358, %v2601
    %vm2675 = vcmp.eq.f32.partialorder %v2359, %v2605
    %vm2676 = vcmp.eq.f32.partialorder %v2360, %v2609
    %vm2677 = vcmp.eq.f32.partialorder %v2361, %v2613
    %vm2678 = vcmp.eq.f32.partialorder %v2362, %v2617
    %vm2679 = vcmp.eq.f32.partialorder %v2363, %v2621
    %vm2680 = vcmp.eq.f32.partialorder %v2364, %v2625
    %vm2681 = vcmp.eq.f32.partialorder %v2365, %v2629
    %vm2682 = vcmp.eq.f32.partialorder %v2366, %v2633
    %vm2683 = vcmp.eq.f32.partialorder %v2367, %v2637
    %vm2684 = vcmp.eq.f32.partialorder %v2368, %v2641
    %vm2685 = vcmp.eq.f32.partialorder %v2369, %v2645
    %v2686 = vsel %vm2666, %v2076, 5
    %v2687 = vsel %vm2667, %v2076, 5
    %v2688 = vsel %vm2668, %v2076, 5
    %v2689 = vsel %vm2669, %v2076, 5
    %v2690 = vsel %vm2670, %v2076, 5
    %v2691 = vsel %vm2671, %v2076, 5
    %v2692 = vsel %vm2672, %v2076, 5
    %v2693 = vsel %vm2673, %v2076, 5
    %v2694 = vsel %vm2674, %v2076, 5
    %v2695 = vsel %vm2675, %v2076, 5
    %v2696 = vsel %vm2676, %v2076, 5
    %v2697 = vsel %vm2677, %v2076, 5
    %v2698 = vsel %vm2678, %v2076, 5
    %v2699 = vsel %vm2679, %v2076, 5
    %v2700 = vsel %vm2680, %v2076, 5
    %v2701 = vsel %vm2681, %v2076, 5
    %v2702 = vsel %vm2682, %v2076, 5
    %v2703 = vsel %vm2683, %v2076, 5
    %v2704 = vsel %vm2684, %v2076, 5
    %v2705 = vsel %vm2685, %v2076, 5
    %2706 = vset.pattern.permute.xlu0 0
    %2707 = vperm.xlu0 %2706, %v2686
    %v2708 = vpop.permute.xlu0 %2707
    %2709 = vset.pattern.permute.xlu0 0
    %2710 = vperm.xlu0 %2709, %v2687
    %v2711 = vpop.permute.xlu0 %2710
    %2712 = vset.pattern.permute.xlu0 0
    %2713 = vperm.xlu0 %2712, %v2688
    %v2714 = vpop.permute.xlu0 %2713
    %2715 = vset.pattern.permute.xlu0 0
    %2716 = vperm.xlu0 %2715, %v2689
    %v2717 = vpop.permute.xlu0 %2716
    %2718 = vset.pattern.permute.xlu0 0
    %2719 = vperm.xlu0 %2718, %v2690
    %v2720 = vpop.permute.xlu0 %2719
    %2721 = vset.pattern.permute.xlu0 0
    %2722 = vperm.xlu0 %2721, %v2691
    %v2723 = vpop.permute.xlu0 %2722
    %2724 = vset.pattern.permute.xlu0 0
    %2725 = vperm.xlu0 %2724, %v2692
    %v2726 = vpop.permute.xlu0 %2725
    %2727 = vset.pattern.permute.xlu0 0
    %2728 = vperm.xlu0 %2727, %v2693
    %v2729 = vpop.permute.xlu0 %2728
    %2730 = vset.pattern.permute.xlu0 0
    %2731 = vperm.xlu0 %2730, %v2694
    %v2732 = vpop.permute.xlu0 %2731
    %2733 = vset.pattern.permute.xlu0 0
    %2734 = vperm.xlu0 %2733, %v2695
    %v2735 = vpop.permute.xlu0 %2734
    %2736 = vset.pattern.permute.xlu0 0
    %2737 = vperm.xlu0 %2736, %v2696
    %v2738 = vpop.permute.xlu0 %2737
    %2739 = vset.pattern.permute.xlu0 0
    %2740 = vperm.xlu0 %2739, %v2697
    %v2741 = vpop.permute.xlu0 %2740
    %2742 = vset.pattern.permute.xlu0 0
    %2743 = vperm.xlu0 %2742, %v2698
    %v2744 = vpop.permute.xlu0 %2743
    %2745 = vset.pattern.permute.xlu0 0
    %2746 = vperm.xlu0 %2745, %v2699
    %v2747 = vpop.permute.xlu0 %2746
    %2748 = vset.pattern.permute.xlu0 0
    %2749 = vperm.xlu0 %2748, %v2700
    %v2750 = vpop.permute.xlu0 %2749
    %2751 = vset.pattern.permute.xlu0 0
    %2752 = vperm.xlu0 %2751, %v2701
    %v2753 = vpop.permute.xlu0 %2752
    %2754 = vset.pattern.permute.xlu0 0
    %2755 = vperm.xlu0 %2754, %v2702
    %v2756 = vpop.permute.xlu0 %2755
    %2757 = vset.pattern.permute.xlu0 0
    %2758 = vperm.xlu0 %2757, %v2703
    %v2759 = vpop.permute.xlu0 %2758
    %2760 = vset.pattern.permute.xlu0 0
    %2761 = vperm.xlu0 %2760, %v2704
    %v2762 = vpop.permute.xlu0 %2761
    %2763 = vset.pattern.permute.xlu0 0
    %2764 = vperm.xlu0 %2763, %v2705
    %v2765 = vpop.permute.xlu0 %2764
    %v2766 = vlaneseq
    %v2767 = vshrl.u32 %v2766, 7
    %v2768 = vsub.s32 %v348, %v2767
    %v2769 = vrot.slane %v2708, %v2768
    %v2770 = vlaneseq
    %v2771 = vshrl.u32 %v2770, 7
    %v2772 = vsub.s32 %v348, %v2771
    %v2773 = vrot.slane %v2711, %v2772
    %v2774 = vlaneseq
    %v2775 = vshrl.u32 %v2774, 7
    %v2776 = vsub.s32 %v348, %v2775
    %v2777 = vrot.slane %v2714, %v2776
    %v2778 = vlaneseq
    %v2779 = vshrl.u32 %v2778, 7
    %v2780 = vsub.s32 %v348, %v2779
    %v2781 = vrot.slane %v2717, %v2780
    %v2782 = vlaneseq
    %v2783 = vshrl.u32 %v2782, 7
    %v2784 = vsub.s32 %v348, %v2783
    %v2785 = vrot.slane %v2720, %v2784
    %v2786 = vlaneseq
    %v2787 = vshrl.u32 %v2786, 7
    %v2788 = vsub.s32 %v348, %v2787
    %v2789 = vrot.slane %v2723, %v2788
    %v2790 = vlaneseq
    %v2791 = vshrl.u32 %v2790, 7
    %v2792 = vsub.s32 %v348, %v2791
    %v2793 = vrot.slane %v2726, %v2792
    %v2794 = vlaneseq
    %v2795 = vshrl.u32 %v2794, 7
    %v2796 = vsub.s32 %v348, %v2795
    %v2797 = vrot.slane %v2729, %v2796
    %v2798 = vlaneseq
    %v2799 = vshrl.u32 %v2798, 7
    %v2800 = vsub.s32 %v348, %v2799
    %v2801 = vrot.slane %v2732, %v2800
    %v2802 = vlaneseq
    %v2803 = vshrl.u32 %v2802, 7
    %v2804 = vsub.s32 %v348, %v2803
    %v2805 = vrot.slane %v2735, %v2804
    %v2806 = vlaneseq
    %v2807 = vshrl.u32 %v2806, 7
    %v2808 = vsub.s32 %v348, %v2807
    %v2809 = vrot.slane %v2738, %v2808
    %v2810 = vlaneseq
    %v2811 = vshrl.u32 %v2810, 7
    %v2812 = vsub.s32 %v348, %v2811
    %v2813 = vrot.slane %v2741, %v2812
    %v2814 = vlaneseq
    %v2815 = vshrl.u32 %v2814, 7
    %v2816 = vsub.s32 %v348, %v2815
    %v2817 = vrot.slane %v2744, %v2816
    %v2818 = vlaneseq
    %v2819 = vshrl.u32 %v2818, 7
    %v2820 = vsub.s32 %v348, %v2819
    %v2821 = vrot.slane %v2747, %v2820
    %v2822 = vlaneseq
    %v2823 = vshrl.u32 %v2822, 7
    %v2824 = vsub.s32 %v348, %v2823
    %v2825 = vrot.slane %v2750, %v2824
    %v2826 = vlaneseq
    %v2827 = vshrl.u32 %v2826, 7
    %v2828 = vsub.s32 %v348, %v2827
    %v2829 = vrot.slane %v2753, %v2828
    %v2830 = vlaneseq
    %v2831 = vshrl.u32 %v2830, 7
    %v2832 = vsub.s32 %v348, %v2831
    %v2833 = vrot.slane %v2756, %v2832
    %v2834 = vlaneseq
    %v2835 = vshrl.u32 %v2834, 7
    %v2836 = vsub.s32 %v348, %v2835
    %v2837 = vrot.slane %v2759, %v2836
    %v2838 = vlaneseq
    %v2839 = vshrl.u32 %v2838, 7
    %v2840 = vsub.s32 %v348, %v2839
    %v2841 = vrot.slane %v2762, %v2840
    %v2842 = vlaneseq
    %v2843 = vshrl.u32 %v2842, 7
    %v2844 = vsub.s32 %v348, %v2843
    %v2845 = vrot.slane %v2765, %v2844
    %v2846 = vsel %vm1280, %v2773, %v2769
    %v2847 = vsel %vm1282, %v2777, %v2846
    %v2848 = vsel %vm1284, %v2781, %v2847
    %v2849 = vsel %vm1286, %v2785, %v2848
    %v2850 = vsel %vm1280, %v2793, %v2789
    %v2851 = vsel %vm1282, %v2797, %v2850
    %v2852 = vsel %vm1284, %v2801, %v2851
    %v2853 = vsel %vm1286, %v2805, %v2852
    %v2854 = vsel %vm1280, %v2813, %v2809
    %v2855 = vsel %vm1282, %v2817, %v2854
    %v2856 = vsel %vm1284, %v2821, %v2855
    %v2857 = vsel %vm1286, %v2825, %v2856
    %v2858 = vsel %vm1280, %v2833, %v2829
    %v2859 = vsel %vm1282, %v2837, %v2858
    %v2860 = vsel %vm1284, %v2841, %v2859
    %v2861 = vsel %vm1286, %v2845, %v2860
    %v2862 = vsel %vm1937, %v2849, 2147483647
    %v2863 = vand.u32 %v2862, 65535
    %v2864 = vshra.s32 %v2862, 16
    %v2865 = vcvt.s32.f32 %v2863
    %v2866 = vcvt.s32.f32 %v2864
    %2867 = vmin.xlane.f32.xlu0 %v2866
    %v2868 = vpop.xlane.xlu0 %2867
    %vm2869 = vcmp.eq.f32.partialorder %v2866, %v2868
    %v2870 = vsel %vm2869, %v2865, inf
    %2871 = vmin.xlane.f32.xlu0 %v2870
    %v2872 = vpop.xlane.xlu0 %2871
    %v2873 = vcvt.f32.s32 %v2872
    %v2874 = vcvt.f32.s32 %v2868
    %v2875 = vshll.u32 %v2874, 16
    %v2876 = vadd.s32 %v2875, %v2873
    %v2877 = vsel %vm1937, %v2853, 2147483647
    %v2878 = vand.u32 %v2877, 65535
    %v2879 = vshra.s32 %v2877, 16
    %v2880 = vcvt.s32.f32 %v2878
    %v2881 = vcvt.s32.f32 %v2879
    %2882 = vmin.xlane.f32.xlu0 %v2881
    %v2883 = vpop.xlane.xlu0 %2882
    %vm2884 = vcmp.eq.f32.partialorder %v2881, %v2883
    %v2885 = vsel %vm2884, %v2880, inf
    %2886 = vmin.xlane.f32.xlu0 %v2885
    %v2887 = vpop.xlane.xlu0 %2886
    %v2888 = vcvt.f32.s32 %v2887
    %v2889 = vcvt.f32.s32 %v2883
    %v2890 = vshll.u32 %v2889, 16
    %v2891 = vadd.s32 %v2890, %v2888
    %v2892 = vsel %vm1937, %v2857, 2147483647
    %v2893 = vand.u32 %v2892, 65535
    %v2894 = vshra.s32 %v2892, 16
    %v2895 = vcvt.s32.f32 %v2893
    %v2896 = vcvt.s32.f32 %v2894
    %2897 = vmin.xlane.f32.xlu0 %v2896
    %v2898 = vpop.xlane.xlu0 %2897
    %vm2899 = vcmp.eq.f32.partialorder %v2896, %v2898
    %v2900 = vsel %vm2899, %v2895, inf
    %2901 = vmin.xlane.f32.xlu0 %v2900
    %v2902 = vpop.xlane.xlu0 %2901
    %v2903 = vcvt.f32.s32 %v2902
    %v2904 = vcvt.f32.s32 %v2898
    %v2905 = vshll.u32 %v2904, 16
    %v2906 = vadd.s32 %v2905, %v2903
    %v2907 = vsel %vm1937, %v2861, 2147483647
    %v2908 = vand.u32 %v2907, 65535
    %v2909 = vshra.s32 %v2907, 16
    %v2910 = vcvt.s32.f32 %v2908
    %v2911 = vcvt.s32.f32 %v2909
    %2912 = vmin.xlane.f32.xlu0 %v2911
    %v2913 = vpop.xlane.xlu0 %2912
    %vm2914 = vcmp.eq.f32.partialorder %v2911, %v2913
    %v2915 = vsel %vm2914, %v2910, inf
    %2916 = vmin.xlane.f32.xlu0 %v2915
    %v2917 = vpop.xlane.xlu0 %2916
    %v2918 = vcvt.f32.s32 %v2917
    %v2919 = vcvt.f32.s32 %v2913
    %v2920 = vshll.u32 %v2919, 16
    %v2921 = vadd.s32 %v2920, %v2918
    %v2922 = vlaneseq
    %v2923 = vshrl.u32 %v2922, 7
    %v2924 = vsub.s32 4, %v2923
    %v2925 = vrot.slane %v868, %v2924
    %2927 = vbcast.lane.b32.xlu0 %v2925, 256
    %v2928 = vpop.permute.xlu0 %2927
    %v2929 = vlaneseq
    %v2930 = vshrl.u32 %v2929, 7
    %v2931 = vsub.s32 5, %v2930
    %v2932 = vrot.slane %v868, %v2931
    %2934 = vbcast.lane.b32.xlu0 %v2932, 256
    %v2935 = vpop.permute.xlu0 %2934
    %v2936 = vlaneseq
    %v2937 = vshrl.u32 %v2936, 7
    %v2938 = vsub.s32 6, %v2937
    %v2939 = vrot.slane %v868, %v2938
    %2941 = vbcast.lane.b32.xlu0 %v2939, 256
    %v2942 = vpop.permute.xlu0 %2941
    %v2943 = vlaneseq
    %v2944 = vshrl.u32 %v2943, 7
    %v2945 = vsub.s32 7, %v2944
    %v2946 = vrot.slane %v868, %v2945
    %2948 = vbcast.lane.b32.xlu0 %v2946, 256
    %v2949 = vpop.permute.xlu0 %2948
    %v2954 = vadd.f32 %v2552, %v2928
    %v2955 = vadd.f32 %v2555, %v2935
    %v2956 = vadd.f32 %v2558, %v2942
    %v2957 = vadd.f32 %v2561, %v2949
    %v2958 = vadd.f32 %v2954, %v1719
    %v2959 = vadd.f32 %v2954, %v1722
    %v2960 = vadd.f32 %v2954, %v1725
    %v2961 = vadd.f32 %v2954, %v1728
    %v2962 = vadd.f32 %v2954, %v1731
    %v2963 = vadd.f32 %v2955, %v1719
    %v2964 = vadd.f32 %v2955, %v1722
    %v2965 = vadd.f32 %v2955, %v1725
    %v2966 = vadd.f32 %v2955, %v1728
    %v2967 = vadd.f32 %v2955, %v1731
    %v2968 = vadd.f32 %v2956, %v1719
    %v2969 = vadd.f32 %v2956, %v1722
    %v2970 = vadd.f32 %v2956, %v1725
    %v2971 = vadd.f32 %v2956, %v1728
    %v2972 = vadd.f32 %v2956, %v1731
    %v2973 = vadd.f32 %v2957, %v1719
    %v2974 = vadd.f32 %v2957, %v1722
    %v2975 = vadd.f32 %v2957, %v1725
    %v2976 = vadd.f32 %v2957, %v1728
    %v2977 = vadd.f32 %v2957, %v1731
    %2998 = vset.pattern.permute.xlu0 0
    %2999 = vperm.xlu0 %2998, %v2958
    %v3000 = vpop.permute.xlu0 %2999
    %3001 = vset.pattern.permute.xlu0 0
    %3002 = vperm.xlu0 %3001, %v2959
    %v3003 = vpop.permute.xlu0 %3002
    %3004 = vset.pattern.permute.xlu0 0
    %3005 = vperm.xlu0 %3004, %v2960
    %v3006 = vpop.permute.xlu0 %3005
    %3007 = vset.pattern.permute.xlu0 0
    %3008 = vperm.xlu0 %3007, %v2961
    %v3009 = vpop.permute.xlu0 %3008
    %3010 = vset.pattern.permute.xlu0 0
    %3011 = vperm.xlu0 %3010, %v2962
    %v3012 = vpop.permute.xlu0 %3011
    %3013 = vset.pattern.permute.xlu0 0
    %3014 = vperm.xlu0 %3013, %v2963
    %v3015 = vpop.permute.xlu0 %3014
    %3016 = vset.pattern.permute.xlu0 0
    %3017 = vperm.xlu0 %3016, %v2964
    %v3018 = vpop.permute.xlu0 %3017
    %3019 = vset.pattern.permute.xlu0 0
    %3020 = vperm.xlu0 %3019, %v2965
    %v3021 = vpop.permute.xlu0 %3020
    %3022 = vset.pattern.permute.xlu0 0
    %3023 = vperm.xlu0 %3022, %v2966
    %v3024 = vpop.permute.xlu0 %3023
    %3025 = vset.pattern.permute.xlu0 0
    %3026 = vperm.xlu0 %3025, %v2967
    %v3027 = vpop.permute.xlu0 %3026
    %3028 = vset.pattern.permute.xlu0 0
    %3029 = vperm.xlu0 %3028, %v2968
    %v3030 = vpop.permute.xlu0 %3029
    %3031 = vset.pattern.permute.xlu0 0
    %3032 = vperm.xlu0 %3031, %v2969
    %v3033 = vpop.permute.xlu0 %3032
    %3034 = vset.pattern.permute.xlu0 0
    %3035 = vperm.xlu0 %3034, %v2970
    %v3036 = vpop.permute.xlu0 %3035
    %3037 = vset.pattern.permute.xlu0 0
    %3038 = vperm.xlu0 %3037, %v2971
    %v3039 = vpop.permute.xlu0 %3038
    %3040 = vset.pattern.permute.xlu0 0
    %3041 = vperm.xlu0 %3040, %v2972
    %v3042 = vpop.permute.xlu0 %3041
    %3043 = vset.pattern.permute.xlu0 0
    %3044 = vperm.xlu0 %3043, %v2973
    %v3045 = vpop.permute.xlu0 %3044
    %3046 = vset.pattern.permute.xlu0 0
    %3047 = vperm.xlu0 %3046, %v2974
    %v3048 = vpop.permute.xlu0 %3047
    %3049 = vset.pattern.permute.xlu0 0
    %3050 = vperm.xlu0 %3049, %v2975
    %v3051 = vpop.permute.xlu0 %3050
    %3052 = vset.pattern.permute.xlu0 0
    %3053 = vperm.xlu0 %3052, %v2976
    %v3054 = vpop.permute.xlu0 %3053
    %3055 = vset.pattern.permute.xlu0 0
    %3056 = vperm.xlu0 %3055, %v2977
    %v3057 = vpop.permute.xlu0 %3056
    %v3058 = vlaneseq
    %v3059 = vshrl.u32 %v3058, 7
    %v3060 = vsub.s32 %v348, %v3059
    %v3061 = vrot.slane %v3000, %v3060
    %v3062 = vlaneseq
    %v3063 = vshrl.u32 %v3062, 7
    %v3064 = vsub.s32 %v348, %v3063
    %v3065 = vrot.slane %v3003, %v3064
    %v3066 = vlaneseq
    %v3067 = vshrl.u32 %v3066, 7
    %v3068 = vsub.s32 %v348, %v3067
    %v3069 = vrot.slane %v3006, %v3068
    %v3070 = vlaneseq
    %v3071 = vshrl.u32 %v3070, 7
    %v3072 = vsub.s32 %v348, %v3071
    %v3073 = vrot.slane %v3009, %v3072
    %v3074 = vlaneseq
    %v3075 = vshrl.u32 %v3074, 7
    %v3076 = vsub.s32 %v348, %v3075
    %v3077 = vrot.slane %v3012, %v3076
    %v3078 = vlaneseq
    %v3079 = vshrl.u32 %v3078, 7
    %v3080 = vsub.s32 %v348, %v3079
    %v3081 = vrot.slane %v3015, %v3080
    %v3082 = vlaneseq
    %v3083 = vshrl.u32 %v3082, 7
    %v3084 = vsub.s32 %v348, %v3083
    %v3085 = vrot.slane %v3018, %v3084
    %v3086 = vlaneseq
    %v3087 = vshrl.u32 %v3086, 7
    %v3088 = vsub.s32 %v348, %v3087
    %v3089 = vrot.slane %v3021, %v3088
    %v3090 = vlaneseq
    %v3091 = vshrl.u32 %v3090, 7
    %v3092 = vsub.s32 %v348, %v3091
    %v3093 = vrot.slane %v3024, %v3092
    %v3094 = vlaneseq
    %v3095 = vshrl.u32 %v3094, 7
    %v3096 = vsub.s32 %v348, %v3095
    %v3097 = vrot.slane %v3027, %v3096
    %v3098 = vlaneseq
    %v3099 = vshrl.u32 %v3098, 7
    %v3100 = vsub.s32 %v348, %v3099
    %v3101 = vrot.slane %v3030, %v3100
    %v3102 = vlaneseq
    %v3103 = vshrl.u32 %v3102, 7
    %v3104 = vsub.s32 %v348, %v3103
    %v3105 = vrot.slane %v3033, %v3104
    %v3106 = vlaneseq
    %v3107 = vshrl.u32 %v3106, 7
    %v3108 = vsub.s32 %v348, %v3107
    %v3109 = vrot.slane %v3036, %v3108
    %v3110 = vlaneseq
    %v3111 = vshrl.u32 %v3110, 7
    %v3112 = vsub.s32 %v348, %v3111
    %v3113 = vrot.slane %v3039, %v3112
    %v3114 = vlaneseq
    %v3115 = vshrl.u32 %v3114, 7
    %v3116 = vsub.s32 %v348, %v3115
    %v3117 = vrot.slane %v3042, %v3116
    %v3118 = vlaneseq
    %v3119 = vshrl.u32 %v3118, 7
    %v3120 = vsub.s32 %v348, %v3119
    %v3121 = vrot.slane %v3045, %v3120
    %v3122 = vlaneseq
    %v3123 = vshrl.u32 %v3122, 7
    %v3124 = vsub.s32 %v348, %v3123
    %v3125 = vrot.slane %v3048, %v3124
    %v3126 = vlaneseq
    %v3127 = vshrl.u32 %v3126, 7
    %v3128 = vsub.s32 %v348, %v3127
    %v3129 = vrot.slane %v3051, %v3128
    %v3130 = vlaneseq
    %v3131 = vshrl.u32 %v3130, 7
    %v3132 = vsub.s32 %v348, %v3131
    %v3133 = vrot.slane %v3054, %v3132
    %v3134 = vlaneseq
    %v3135 = vshrl.u32 %v3134, 7
    %v3136 = vsub.s32 %v348, %v3135
    %v3137 = vrot.slane %v3057, %v3136
    %v3138 = vsel %vm1280, %v3065, %v3061
    %v3139 = vsel %vm1282, %v3069, %v3138
    %v3140 = vsel %vm1284, %v3073, %v3139
    %v3141 = vsel %vm1286, %v3077, %v3140
    %v3142 = vsel %vm1280, %v3085, %v3081
    %v3143 = vsel %vm1282, %v3089, %v3142
    %v3144 = vsel %vm1284, %v3093, %v3143
    %v3145 = vsel %vm1286, %v3097, %v3144
    %v3146 = vsel %vm1280, %v3105, %v3101
    %v3147 = vsel %vm1282, %v3109, %v3146
    %v3148 = vsel %vm1284, %v3113, %v3147
    %v3149 = vsel %vm1286, %v3117, %v3148
    %v3150 = vsel %vm1280, %v3125, %v3121
    %v3151 = vsel %vm1282, %v3129, %v3150
    %v3152 = vsel %vm1284, %v3133, %v3151
    %v3153 = vsel %vm1286, %v3137, %v3152
    %v3158 = vsel %vm1937, %v3141, -inf
    %3159 = vmax.xlane.f32.xlu0 %v3158
    %v3160 = vpop.xlane.xlu0 %3159
    %v3161 = vsel %vm1937, %v3145, -inf
    %3162 = vmax.xlane.f32.xlu0 %v3161
    %v3163 = vpop.xlane.xlu0 %3162
    %v3164 = vsel %vm1937, %v3149, -inf
    %3165 = vmax.xlane.f32.xlu0 %v3164
    %v3166 = vpop.xlane.xlu0 %3165
    %v3167 = vsel %vm1937, %v3153, -inf
    %3168 = vmax.xlane.f32.xlu0 %v3167
    %v3169 = vpop.xlane.xlu0 %3168
    %v3174 = vlaneseq
    %v3175 = vshrl.u32 %v3174, 7
    %v3176 = vsub.s32 0, %v3175
    %v3177 = vrot.slane %v3160, %v3176
    %v3178 = vlaneseq
    %v3179 = vshrl.u32 %v3178, 7
    %v3180 = vsub.s32 1, %v3179
    %v3181 = vrot.slane %v3160, %v3180
    %v3182 = vlaneseq
    %v3183 = vshrl.u32 %v3182, 7
    %v3184 = vsub.s32 2, %v3183
    %v3185 = vrot.slane %v3160, %v3184
    %v3186 = vlaneseq
    %v3187 = vshrl.u32 %v3186, 7
    %v3188 = vsub.s32 3, %v3187
    %v3189 = vrot.slane %v3160, %v3188
    %v3190 = vlaneseq
    %v3191 = vshrl.u32 %v3190, 7
    %v3192 = vsub.s32 4, %v3191
    %v3193 = vrot.slane %v3160, %v3192
    %v3194 = vlaneseq
    %v3195 = vshrl.u32 %v3194, 7
    %v3196 = vsub.s32 0, %v3195
    %v3197 = vrot.slane %v3163, %v3196
    %v3198 = vlaneseq
    %v3199 = vshrl.u32 %v3198, 7
    %v3200 = vsub.s32 1, %v3199
    %v3201 = vrot.slane %v3163, %v3200
    %v3202 = vlaneseq
    %v3203 = vshrl.u32 %v3202, 7
    %v3204 = vsub.s32 2, %v3203
    %v3205 = vrot.slane %v3163, %v3204
    %v3206 = vlaneseq
    %v3207 = vshrl.u32 %v3206, 7
    %v3208 = vsub.s32 3, %v3207
    %v3209 = vrot.slane %v3163, %v3208
    %v3210 = vlaneseq
    %v3211 = vshrl.u32 %v3210, 7
    %v3212 = vsub.s32 4, %v3211
    %v3213 = vrot.slane %v3163, %v3212
    %v3214 = vlaneseq
    %v3215 = vshrl.u32 %v3214, 7
    %v3216 = vsub.s32 0, %v3215
    %v3217 = vrot.slane %v3166, %v3216
    %v3218 = vlaneseq
    %v3219 = vshrl.u32 %v3218, 7
    %v3220 = vsub.s32 1, %v3219
    %v3221 = vrot.slane %v3166, %v3220
    %v3222 = vlaneseq
    %v3223 = vshrl.u32 %v3222, 7
    %v3224 = vsub.s32 2, %v3223
    %v3225 = vrot.slane %v3166, %v3224
    %v3226 = vlaneseq
    %v3227 = vshrl.u32 %v3226, 7
    %v3228 = vsub.s32 3, %v3227
    %v3229 = vrot.slane %v3166, %v3228
    %v3230 = vlaneseq
    %v3231 = vshrl.u32 %v3230, 7
    %v3232 = vsub.s32 4, %v3231
    %v3233 = vrot.slane %v3166, %v3232
    %v3234 = vlaneseq
    %v3235 = vshrl.u32 %v3234, 7
    %v3236 = vsub.s32 0, %v3235
    %v3237 = vrot.slane %v3169, %v3236
    %v3238 = vlaneseq
    %v3239 = vshrl.u32 %v3238, 7
    %v3240 = vsub.s32 1, %v3239
    %v3241 = vrot.slane %v3169, %v3240
    %v3242 = vlaneseq
    %v3243 = vshrl.u32 %v3242, 7
    %v3244 = vsub.s32 2, %v3243
    %v3245 = vrot.slane %v3169, %v3244
    %v3246 = vlaneseq
    %v3247 = vshrl.u32 %v3246, 7
    %v3248 = vsub.s32 3, %v3247
    %v3249 = vrot.slane %v3169, %v3248
    %v3250 = vlaneseq
    %v3251 = vshrl.u32 %v3250, 7
    %v3252 = vsub.s32 4, %v3251
    %v3253 = vrot.slane %v3169, %v3252
    %vm3274 = vcmp.eq.f32.partialorder %v2958, %v3177
    %vm3275 = vcmp.eq.f32.partialorder %v2959, %v3181
    %vm3276 = vcmp.eq.f32.partialorder %v2960, %v3185
    %vm3277 = vcmp.eq.f32.partialorder %v2961, %v3189
    %vm3278 = vcmp.eq.f32.partialorder %v2962, %v3193
    %vm3279 = vcmp.eq.f32.partialorder %v2963, %v3197
    %vm3280 = vcmp.eq.f32.partialorder %v2964, %v3201
    %vm3281 = vcmp.eq.f32.partialorder %v2965, %v3205
    %vm3282 = vcmp.eq.f32.partialorder %v2966, %v3209
    %vm3283 = vcmp.eq.f32.partialorder %v2967, %v3213
    %vm3284 = vcmp.eq.f32.partialorder %v2968, %v3217
    %vm3285 = vcmp.eq.f32.partialorder %v2969, %v3221
    %vm3286 = vcmp.eq.f32.partialorder %v2970, %v3225
    %vm3287 = vcmp.eq.f32.partialorder %v2971, %v3229
    %vm3288 = vcmp.eq.f32.partialorder %v2972, %v3233
    %vm3289 = vcmp.eq.f32.partialorder %v2973, %v3237
    %vm3290 = vcmp.eq.f32.partialorder %v2974, %v3241
    %vm3291 = vcmp.eq.f32.partialorder %v2975, %v3245
    %vm3292 = vcmp.eq.f32.partialorder %v2976, %v3249
    %vm3293 = vcmp.eq.f32.partialorder %v2977, %v3253
    %v3294 = vsel %vm3274, %v2076, 5
    %v3295 = vsel %vm3275, %v2076, 5
    %v3296 = vsel %vm3276, %v2076, 5
    %v3297 = vsel %vm3277, %v2076, 5
    %v3298 = vsel %vm3278, %v2076, 5
    %v3299 = vsel %vm3279, %v2076, 5
    %v3300 = vsel %vm3280, %v2076, 5
    %v3301 = vsel %vm3281, %v2076, 5
    %v3302 = vsel %vm3282, %v2076, 5
    %v3303 = vsel %vm3283, %v2076, 5
    %v3304 = vsel %vm3284, %v2076, 5
    %v3305 = vsel %vm3285, %v2076, 5
    %v3306 = vsel %vm3286, %v2076, 5
    %v3307 = vsel %vm3287, %v2076, 5
    %v3308 = vsel %vm3288, %v2076, 5
    %v3309 = vsel %vm3289, %v2076, 5
    %v3310 = vsel %vm3290, %v2076, 5
    %v3311 = vsel %vm3291, %v2076, 5
    %v3312 = vsel %vm3292, %v2076, 5
    %v3313 = vsel %vm3293, %v2076, 5
    %3314 = vset.pattern.permute.xlu0 0
    %3315 = vperm.xlu0 %3314, %v3294
    %v3316 = vpop.permute.xlu0 %3315
    %3317 = vset.pattern.permute.xlu0 0
    %3318 = vperm.xlu0 %3317, %v3295
    %v3319 = vpop.permute.xlu0 %3318
    %3320 = vset.pattern.permute.xlu0 0
    %3321 = vperm.xlu0 %3320, %v3296
    %v3322 = vpop.permute.xlu0 %3321
    %3323 = vset.pattern.permute.xlu0 0
    %3324 = vperm.xlu0 %3323, %v3297
    %v3325 = vpop.permute.xlu0 %3324
    %3326 = vset.pattern.permute.xlu0 0
    %3327 = vperm.xlu0 %3326, %v3298
    %v3328 = vpop.permute.xlu0 %3327
    %3329 = vset.pattern.permute.xlu0 0
    %3330 = vperm.xlu0 %3329, %v3299
    %v3331 = vpop.permute.xlu0 %3330
    %3332 = vset.pattern.permute.xlu0 0
    %3333 = vperm.xlu0 %3332, %v3300
    %v3334 = vpop.permute.xlu0 %3333
    %3335 = vset.pattern.permute.xlu0 0
    %3336 = vperm.xlu0 %3335, %v3301
    %v3337 = vpop.permute.xlu0 %3336
    %3338 = vset.pattern.permute.xlu0 0
    %3339 = vperm.xlu0 %3338, %v3302
    %v3340 = vpop.permute.xlu0 %3339
    %3341 = vset.pattern.permute.xlu0 0
    %3342 = vperm.xlu0 %3341, %v3303
    %v3343 = vpop.permute.xlu0 %3342
    %3344 = vset.pattern.permute.xlu0 0
    %3345 = vperm.xlu0 %3344, %v3304
    %v3346 = vpop.permute.xlu0 %3345
    %3347 = vset.pattern.permute.xlu0 0
    %3348 = vperm.xlu0 %3347, %v3305
    %v3349 = vpop.permute.xlu0 %3348
    %3350 = vset.pattern.permute.xlu0 0
    %3351 = vperm.xlu0 %3350, %v3306
    %v3352 = vpop.permute.xlu0 %3351
    %3353 = vset.pattern.permute.xlu0 0
    %3354 = vperm.xlu0 %3353, %v3307
    %v3355 = vpop.permute.xlu0 %3354
    %3356 = vset.pattern.permute.xlu0 0
    %3357 = vperm.xlu0 %3356, %v3308
    %v3358 = vpop.permute.xlu0 %3357
    %3359 = vset.pattern.permute.xlu0 0
    %3360 = vperm.xlu0 %3359, %v3309
    %v3361 = vpop.permute.xlu0 %3360
    %3362 = vset.pattern.permute.xlu0 0
    %3363 = vperm.xlu0 %3362, %v3310
    %v3364 = vpop.permute.xlu0 %3363
    %3365 = vset.pattern.permute.xlu0 0
    %3366 = vperm.xlu0 %3365, %v3311
    %v3367 = vpop.permute.xlu0 %3366
    %3368 = vset.pattern.permute.xlu0 0
    %3369 = vperm.xlu0 %3368, %v3312
    %v3370 = vpop.permute.xlu0 %3369
    %3371 = vset.pattern.permute.xlu0 0
    %3372 = vperm.xlu0 %3371, %v3313
    %v3373 = vpop.permute.xlu0 %3372
    %v3374 = vlaneseq
    %v3375 = vshrl.u32 %v3374, 7
    %v3376 = vsub.s32 %v348, %v3375
    %v3377 = vrot.slane %v3316, %v3376
    %v3378 = vlaneseq
    %v3379 = vshrl.u32 %v3378, 7
    %v3380 = vsub.s32 %v348, %v3379
    %v3381 = vrot.slane %v3319, %v3380
    %v3382 = vlaneseq
    %v3383 = vshrl.u32 %v3382, 7
    %v3384 = vsub.s32 %v348, %v3383
    %v3385 = vrot.slane %v3322, %v3384
    %v3386 = vlaneseq
    %v3387 = vshrl.u32 %v3386, 7
    %v3388 = vsub.s32 %v348, %v3387
    %v3389 = vrot.slane %v3325, %v3388
    %v3390 = vlaneseq
    %v3391 = vshrl.u32 %v3390, 7
    %v3392 = vsub.s32 %v348, %v3391
    %v3393 = vrot.slane %v3328, %v3392
    %v3394 = vlaneseq
    %v3395 = vshrl.u32 %v3394, 7
    %v3396 = vsub.s32 %v348, %v3395
    %v3397 = vrot.slane %v3331, %v3396
    %v3398 = vlaneseq
    %v3399 = vshrl.u32 %v3398, 7
    %v3400 = vsub.s32 %v348, %v3399
    %v3401 = vrot.slane %v3334, %v3400
    %v3402 = vlaneseq
    %v3403 = vshrl.u32 %v3402, 7
    %v3404 = vsub.s32 %v348, %v3403
    %v3405 = vrot.slane %v3337, %v3404
    %v3406 = vlaneseq
    %v3407 = vshrl.u32 %v3406, 7
    %v3408 = vsub.s32 %v348, %v3407
    %v3409 = vrot.slane %v3340, %v3408
    %v3410 = vlaneseq
    %v3411 = vshrl.u32 %v3410, 7
    %v3412 = vsub.s32 %v348, %v3411
    %v3413 = vrot.slane %v3343, %v3412
    %v3414 = vlaneseq
    %v3415 = vshrl.u32 %v3414, 7
    %v3416 = vsub.s32 %v348, %v3415
    %v3417 = vrot.slane %v3346, %v3416
    %v3418 = vlaneseq
    %v3419 = vshrl.u32 %v3418, 7
    %v3420 = vsub.s32 %v348, %v3419
    %v3421 = vrot.slane %v3349, %v3420
    %v3422 = vlaneseq
    %v3423 = vshrl.u32 %v3422, 7
    %v3424 = vsub.s32 %v348, %v3423
    %v3425 = vrot.slane %v3352, %v3424
    %v3426 = vlaneseq
    %v3427 = vshrl.u32 %v3426, 7
    %v3428 = vsub.s32 %v348, %v3427
    %v3429 = vrot.slane %v3355, %v3428
    %v3430 = vlaneseq
    %v3431 = vshrl.u32 %v3430, 7
    %v3432 = vsub.s32 %v348, %v3431
    %v3433 = vrot.slane %v3358, %v3432
    %v3434 = vlaneseq
    %v3435 = vshrl.u32 %v3434, 7
    %v3436 = vsub.s32 %v348, %v3435
    %v3437 = vrot.slane %v3361, %v3436
    %v3438 = vlaneseq
    %v3439 = vshrl.u32 %v3438, 7
    %v3440 = vsub.s32 %v348, %v3439
    %v3441 = vrot.slane %v3364, %v3440
    %v3442 = vlaneseq
    %v3443 = vshrl.u32 %v3442, 7
    %v3444 = vsub.s32 %v348, %v3443
    %v3445 = vrot.slane %v3367, %v3444
    %v3446 = vlaneseq
    %v3447 = vshrl.u32 %v3446, 7
    %v3448 = vsub.s32 %v348, %v3447
    %v3449 = vrot.slane %v3370, %v3448
    %v3450 = vlaneseq
    %v3451 = vshrl.u32 %v3450, 7
    %v3452 = vsub.s32 %v348, %v3451
    %v3453 = vrot.slane %v3373, %v3452
    %v3454 = vsel %vm1280, %v3381, %v3377
    %v3455 = vsel %vm1282, %v3385, %v3454
    %v3456 = vsel %vm1284, %v3389, %v3455
    %v3457 = vsel %vm1286, %v3393, %v3456
    %v3458 = vsel %vm1280, %v3401, %v3397
    %v3459 = vsel %vm1282, %v3405, %v3458
    %v3460 = vsel %vm1284, %v3409, %v3459
    %v3461 = vsel %vm1286, %v3413, %v3460
    %v3462 = vsel %vm1280, %v3421, %v3417
    %v3463 = vsel %vm1282, %v3425, %v3462
    %v3464 = vsel %vm1284, %v3429, %v3463
    %v3465 = vsel %vm1286, %v3433, %v3464
    %v3466 = vsel %vm1280, %v3441, %v3437
    %v3467 = vsel %vm1282, %v3445, %v3466
    %v3468 = vsel %vm1284, %v3449, %v3467
    %v3469 = vsel %vm1286, %v3453, %v3468
    %v3470 = vsel %vm1937, %v3457, 2147483647
    %v3471 = vand.u32 %v3470, 65535
    %v3472 = vshra.s32 %v3470, 16
    %v3473 = vcvt.s32.f32 %v3471
    %v3474 = vcvt.s32.f32 %v3472
    %3475 = vmin.xlane.f32.xlu0 %v3474
    %v3476 = vpop.xlane.xlu0 %3475
    %vm3477 = vcmp.eq.f32.partialorder %v3474, %v3476
    %v3478 = vsel %vm3477, %v3473, inf
    %3479 = vmin.xlane.f32.xlu0 %v3478
    %v3480 = vpop.xlane.xlu0 %3479
    %v3481 = vcvt.f32.s32 %v3480
    %v3482 = vcvt.f32.s32 %v3476
    %v3483 = vshll.u32 %v3482, 16
    %v3484 = vadd.s32 %v3483, %v3481
    %v3485 = vsel %vm1937, %v3461, 2147483647
    %v3486 = vand.u32 %v3485, 65535
    %v3487 = vshra.s32 %v3485, 16
    %v3488 = vcvt.s32.f32 %v3486
    %v3489 = vcvt.s32.f32 %v3487
    %3490 = vmin.xlane.f32.xlu0 %v3489
    %v3491 = vpop.xlane.xlu0 %3490
    %vm3492 = vcmp.eq.f32.partialorder %v3489, %v3491
    %v3493 = vsel %vm3492, %v3488, inf
    %3494 = vmin.xlane.f32.xlu0 %v3493
    %v3495 = vpop.xlane.xlu0 %3494
    %v3496 = vcvt.f32.s32 %v3495
    %v3497 = vcvt.f32.s32 %v3491
    %v3498 = vshll.u32 %v3497, 16
    %v3499 = vadd.s32 %v3498, %v3496
    %v3500 = vsel %vm1937, %v3465, 2147483647
    %v3501 = vand.u32 %v3500, 65535
    %v3502 = vshra.s32 %v3500, 16
    %v3503 = vcvt.s32.f32 %v3501
    %v3504 = vcvt.s32.f32 %v3502
    %3505 = vmin.xlane.f32.xlu0 %v3504
    %v3506 = vpop.xlane.xlu0 %3505
    %vm3507 = vcmp.eq.f32.partialorder %v3504, %v3506
    %v3508 = vsel %vm3507, %v3503, inf
    %3509 = vmin.xlane.f32.xlu0 %v3508
    %v3510 = vpop.xlane.xlu0 %3509
    %v3511 = vcvt.f32.s32 %v3510
    %v3512 = vcvt.f32.s32 %v3506
    %v3513 = vshll.u32 %v3512, 16
    %v3514 = vadd.s32 %v3513, %v3511
    %v3515 = vsel %vm1937, %v3469, 2147483647
    %v3516 = vand.u32 %v3515, 65535
    %v3517 = vshra.s32 %v3515, 16
    %v3518 = vcvt.s32.f32 %v3516
    %v3519 = vcvt.s32.f32 %v3517
    %3520 = vmin.xlane.f32.xlu0 %v3519
    %v3521 = vpop.xlane.xlu0 %3520
    %vm3522 = vcmp.eq.f32.partialorder %v3519, %v3521
    %v3523 = vsel %vm3522, %v3518, inf
    %3524 = vmin.xlane.f32.xlu0 %v3523
    %v3525 = vpop.xlane.xlu0 %3524
    %v3526 = vcvt.f32.s32 %v3525
    %v3527 = vcvt.f32.s32 %v3521
    %v3528 = vshll.u32 %v3527, 16
    %v3529 = vadd.s32 %v3528, %v3526
    %v3531 = vlaneseq
    %v3532 = vshrl.u32 %v3531, 7
    %v3533 = vsub.s32 0, %v3532
    %v3534 = vrot.slane %v873, %v3533
    %3536 = vbcast.lane.b32.xlu0 %v3534, 256
    %v3537 = vpop.permute.xlu0 %3536
    %v3538 = vlaneseq
    %v3539 = vshrl.u32 %v3538, 7
    %v3540 = vsub.s32 1, %v3539
    %v3541 = vrot.slane %v873, %v3540
    %3543 = vbcast.lane.b32.xlu0 %v3541, 256
    %v3544 = vpop.permute.xlu0 %3543
    %v3545 = vlaneseq
    %v3546 = vshrl.u32 %v3545, 7
    %v3547 = vsub.s32 2, %v3546
    %v3548 = vrot.slane %v873, %v3547
    %3550 = vbcast.lane.b32.xlu0 %v3548, 256
    %v3551 = vpop.permute.xlu0 %3550
    %v3552 = vlaneseq
    %v3553 = vshrl.u32 %v3552, 7
    %v3554 = vsub.s32 3, %v3553
    %v3555 = vrot.slane %v873, %v3554
    %3557 = vbcast.lane.b32.xlu0 %v3555, 256
    %v3558 = vpop.permute.xlu0 %3557
    %v3563 = vadd.f32 %v3160, %v3537
    %v3564 = vadd.f32 %v3163, %v3544
    %v3565 = vadd.f32 %v3166, %v3551
    %v3566 = vadd.f32 %v3169, %v3558
    %v3567 = vadd.f32 %v3563, %v1719
    %v3568 = vadd.f32 %v3563, %v1722
    %v3569 = vadd.f32 %v3563, %v1725
    %v3570 = vadd.f32 %v3563, %v1728
    %v3571 = vadd.f32 %v3563, %v1731
    %v3572 = vadd.f32 %v3564, %v1719
    %v3573 = vadd.f32 %v3564, %v1722
    %v3574 = vadd.f32 %v3564, %v1725
    %v3575 = vadd.f32 %v3564, %v1728
    %v3576 = vadd.f32 %v3564, %v1731
    %v3577 = vadd.f32 %v3565, %v1719
    %v3578 = vadd.f32 %v3565, %v1722
    %v3579 = vadd.f32 %v3565, %v1725
    %v3580 = vadd.f32 %v3565, %v1728
    %v3581 = vadd.f32 %v3565, %v1731
    %v3582 = vadd.f32 %v3566, %v1719
    %v3583 = vadd.f32 %v3566, %v1722
    %v3584 = vadd.f32 %v3566, %v1725
    %v3585 = vadd.f32 %v3566, %v1728
    %v3586 = vadd.f32 %v3566, %v1731
    %3607 = vset.pattern.permute.xlu0 0
    %3608 = vperm.xlu0 %3607, %v3567
    %v3609 = vpop.permute.xlu0 %3608
    %3610 = vset.pattern.permute.xlu0 0
    %3611 = vperm.xlu0 %3610, %v3568
    %v3612 = vpop.permute.xlu0 %3611
    %3613 = vset.pattern.permute.xlu0 0
    %3614 = vperm.xlu0 %3613, %v3569
    %v3615 = vpop.permute.xlu0 %3614
    %3616 = vset.pattern.permute.xlu0 0
    %3617 = vperm.xlu0 %3616, %v3570
    %v3618 = vpop.permute.xlu0 %3617
    %3619 = vset.pattern.permute.xlu0 0
    %3620 = vperm.xlu0 %3619, %v3571
    %v3621 = vpop.permute.xlu0 %3620
    %3622 = vset.pattern.permute.xlu0 0
    %3623 = vperm.xlu0 %3622, %v3572
    %v3624 = vpop.permute.xlu0 %3623
    %3625 = vset.pattern.permute.xlu0 0
    %3626 = vperm.xlu0 %3625, %v3573
    %v3627 = vpop.permute.xlu0 %3626
    %3628 = vset.pattern.permute.xlu0 0
    %3629 = vperm.xlu0 %3628, %v3574
    %v3630 = vpop.permute.xlu0 %3629
    %3631 = vset.pattern.permute.xlu0 0
    %3632 = vperm.xlu0 %3631, %v3575
    %v3633 = vpop.permute.xlu0 %3632
    %3634 = vset.pattern.permute.xlu0 0
    %3635 = vperm.xlu0 %3634, %v3576
    %v3636 = vpop.permute.xlu0 %3635
    %3637 = vset.pattern.permute.xlu0 0
    %3638 = vperm.xlu0 %3637, %v3577
    %v3639 = vpop.permute.xlu0 %3638
    %3640 = vset.pattern.permute.xlu0 0
    %3641 = vperm.xlu0 %3640, %v3578
    %v3642 = vpop.permute.xlu0 %3641
    %3643 = vset.pattern.permute.xlu0 0
    %3644 = vperm.xlu0 %3643, %v3579
    %v3645 = vpop.permute.xlu0 %3644
    %3646 = vset.pattern.permute.xlu0 0
    %3647 = vperm.xlu0 %3646, %v3580
    %v3648 = vpop.permute.xlu0 %3647
    %3649 = vset.pattern.permute.xlu0 0
    %3650 = vperm.xlu0 %3649, %v3581
    %v3651 = vpop.permute.xlu0 %3650
    %3652 = vset.pattern.permute.xlu0 0
    %3653 = vperm.xlu0 %3652, %v3582
    %v3654 = vpop.permute.xlu0 %3653
    %3655 = vset.pattern.permute.xlu0 0
    %3656 = vperm.xlu0 %3655, %v3583
    %v3657 = vpop.permute.xlu0 %3656
    %3658 = vset.pattern.permute.xlu0 0
    %3659 = vperm.xlu0 %3658, %v3584
    %v3660 = vpop.permute.xlu0 %3659
    %3661 = vset.pattern.permute.xlu0 0
    %3662 = vperm.xlu0 %3661, %v3585
    %v3663 = vpop.permute.xlu0 %3662
    %3664 = vset.pattern.permute.xlu0 0
    %3665 = vperm.xlu0 %3664, %v3586
    %v3666 = vpop.permute.xlu0 %3665
    %v3667 = vlaneseq
    %v3668 = vshrl.u32 %v3667, 7
    %v3669 = vsub.s32 %v348, %v3668
    %v3670 = vrot.slane %v3609, %v3669
    %v3671 = vlaneseq
    %v3672 = vshrl.u32 %v3671, 7
    %v3673 = vsub.s32 %v348, %v3672
    %v3674 = vrot.slane %v3612, %v3673
    %v3675 = vlaneseq
    %v3676 = vshrl.u32 %v3675, 7
    %v3677 = vsub.s32 %v348, %v3676
    %v3678 = vrot.slane %v3615, %v3677
    %v3679 = vlaneseq
    %v3680 = vshrl.u32 %v3679, 7
    %v3681 = vsub.s32 %v348, %v3680
    %v3682 = vrot.slane %v3618, %v3681
    %v3683 = vlaneseq
    %v3684 = vshrl.u32 %v3683, 7
    %v3685 = vsub.s32 %v348, %v3684
    %v3686 = vrot.slane %v3621, %v3685
    %v3687 = vlaneseq
    %v3688 = vshrl.u32 %v3687, 7
    %v3689 = vsub.s32 %v348, %v3688
    %v3690 = vrot.slane %v3624, %v3689
    %v3691 = vlaneseq
    %v3692 = vshrl.u32 %v3691, 7
    %v3693 = vsub.s32 %v348, %v3692
    %v3694 = vrot.slane %v3627, %v3693
    %v3695 = vlaneseq
    %v3696 = vshrl.u32 %v3695, 7
    %v3697 = vsub.s32 %v348, %v3696
    %v3698 = vrot.slane %v3630, %v3697
    %v3699 = vlaneseq
    %v3700 = vshrl.u32 %v3699, 7
    %v3701 = vsub.s32 %v348, %v3700
    %v3702 = vrot.slane %v3633, %v3701
    %v3703 = vlaneseq
    %v3704 = vshrl.u32 %v3703, 7
    %v3705 = vsub.s32 %v348, %v3704
    %v3706 = vrot.slane %v3636, %v3705
    %v3707 = vlaneseq
    %v3708 = vshrl.u32 %v3707, 7
    %v3709 = vsub.s32 %v348, %v3708
    %v3710 = vrot.slane %v3639, %v3709
    %v3711 = vlaneseq
    %v3712 = vshrl.u32 %v3711, 7
    %v3713 = vsub.s32 %v348, %v3712
    %v3714 = vrot.slane %v3642, %v3713
    %v3715 = vlaneseq
    %v3716 = vshrl.u32 %v3715, 7
    %v3717 = vsub.s32 %v348, %v3716
    %v3718 = vrot.slane %v3645, %v3717
    %v3719 = vlaneseq
    %v3720 = vshrl.u32 %v3719, 7
    %v3721 = vsub.s32 %v348, %v3720
    %v3722 = vrot.slane %v3648, %v3721
    %v3723 = vlaneseq
    %v3724 = vshrl.u32 %v3723, 7
    %v3725 = vsub.s32 %v348, %v3724
    %v3726 = vrot.slane %v3651, %v3725
    %v3727 = vlaneseq
    %v3728 = vshrl.u32 %v3727, 7
    %v3729 = vsub.s32 %v348, %v3728
    %v3730 = vrot.slane %v3654, %v3729
    %v3731 = vlaneseq
    %v3732 = vshrl.u32 %v3731, 7
    %v3733 = vsub.s32 %v348, %v3732
    %v3734 = vrot.slane %v3657, %v3733
    %v3735 = vlaneseq
    %v3736 = vshrl.u32 %v3735, 7
    %v3737 = vsub.s32 %v348, %v3736
    %v3738 = vrot.slane %v3660, %v3737
    %v3739 = vlaneseq
    %v3740 = vshrl.u32 %v3739, 7
    %v3741 = vsub.s32 %v348, %v3740
    %v3742 = vrot.slane %v3663, %v3741
    %v3743 = vlaneseq
    %v3744 = vshrl.u32 %v3743, 7
    %v3745 = vsub.s32 %v348, %v3744
    %v3746 = vrot.slane %v3666, %v3745
    %v3747 = vsel %vm1280, %v3674, %v3670
    %v3748 = vsel %vm1282, %v3678, %v3747
    %v3749 = vsel %vm1284, %v3682, %v3748
    %v3750 = vsel %vm1286, %v3686, %v3749
    %v3751 = vsel %vm1280, %v3694, %v3690
    %v3752 = vsel %vm1282, %v3698, %v3751
    %v3753 = vsel %vm1284, %v3702, %v3752
    %v3754 = vsel %vm1286, %v3706, %v3753
    %v3755 = vsel %vm1280, %v3714, %v3710
    %v3756 = vsel %vm1282, %v3718, %v3755
    %v3757 = vsel %vm1284, %v3722, %v3756
    %v3758 = vsel %vm1286, %v3726, %v3757
    %v3759 = vsel %vm1280, %v3734, %v3730
    %v3760 = vsel %vm1282, %v3738, %v3759
    %v3761 = vsel %vm1284, %v3742, %v3760
    %v3762 = vsel %vm1286, %v3746, %v3761
    %v3767 = vsel %vm1937, %v3750, -inf
    %3768 = vmax.xlane.f32.xlu0 %v3767
    %v3769 = vpop.xlane.xlu0 %3768
    %v3770 = vsel %vm1937, %v3754, -inf
    %3771 = vmax.xlane.f32.xlu0 %v3770
    %v3772 = vpop.xlane.xlu0 %3771
    %v3773 = vsel %vm1937, %v3758, -inf
    %3774 = vmax.xlane.f32.xlu0 %v3773
    %v3775 = vpop.xlane.xlu0 %3774
    %v3776 = vsel %vm1937, %v3762, -inf
    %3777 = vmax.xlane.f32.xlu0 %v3776
    %v3778 = vpop.xlane.xlu0 %3777
    %v3783 = vlaneseq
    %v3784 = vshrl.u32 %v3783, 7
    %v3785 = vsub.s32 0, %v3784
    %v3786 = vrot.slane %v3769, %v3785
    %v3787 = vlaneseq
    %v3788 = vshrl.u32 %v3787, 7
    %v3789 = vsub.s32 1, %v3788
    %v3790 = vrot.slane %v3769, %v3789
    %v3791 = vlaneseq
    %v3792 = vshrl.u32 %v3791, 7
    %v3793 = vsub.s32 2, %v3792
    %v3794 = vrot.slane %v3769, %v3793
    %v3795 = vlaneseq
    %v3796 = vshrl.u32 %v3795, 7
    %v3797 = vsub.s32 3, %v3796
    %v3798 = vrot.slane %v3769, %v3797
    %v3799 = vlaneseq
    %v3800 = vshrl.u32 %v3799, 7
    %v3801 = vsub.s32 4, %v3800
    %v3802 = vrot.slane %v3769, %v3801
    %v3803 = vlaneseq
    %v3804 = vshrl.u32 %v3803, 7
    %v3805 = vsub.s32 0, %v3804
    %v3806 = vrot.slane %v3772, %v3805
    %v3807 = vlaneseq
    %v3808 = vshrl.u32 %v3807, 7
    %v3809 = vsub.s32 1, %v3808
    %v3810 = vrot.slane %v3772, %v3809
    %v3811 = vlaneseq
    %v3812 = vshrl.u32 %v3811, 7
    %v3813 = vsub.s32 2, %v3812
    %v3814 = vrot.slane %v3772, %v3813
    %v3815 = vlaneseq
    %v3816 = vshrl.u32 %v3815, 7
    %v3817 = vsub.s32 3, %v3816
    %v3818 = vrot.slane %v3772, %v3817
    %v3819 = vlaneseq
    %v3820 = vshrl.u32 %v3819, 7
    %v3821 = vsub.s32 4, %v3820
    %v3822 = vrot.slane %v3772, %v3821
    %v3823 = vlaneseq
    %v3824 = vshrl.u32 %v3823, 7
    %v3825 = vsub.s32 0, %v3824
    %v3826 = vrot.slane %v3775, %v3825
    %v3827 = vlaneseq
    %v3828 = vshrl.u32 %v3827, 7
    %v3829 = vsub.s32 1, %v3828
    %v3830 = vrot.slane %v3775, %v3829
    %v3831 = vlaneseq
    %v3832 = vshrl.u32 %v3831, 7
    %v3833 = vsub.s32 2, %v3832
    %v3834 = vrot.slane %v3775, %v3833
    %v3835 = vlaneseq
    %v3836 = vshrl.u32 %v3835, 7
    %v3837 = vsub.s32 3, %v3836
    %v3838 = vrot.slane %v3775, %v3837
    %v3839 = vlaneseq
    %v3840 = vshrl.u32 %v3839, 7
    %v3841 = vsub.s32 4, %v3840
    %v3842 = vrot.slane %v3775, %v3841
    %v3843 = vlaneseq
    %v3844 = vshrl.u32 %v3843, 7
    %v3845 = vsub.s32 0, %v3844
    %v3846 = vrot.slane %v3778, %v3845
    %v3847 = vlaneseq
    %v3848 = vshrl.u32 %v3847, 7
    %v3849 = vsub.s32 1, %v3848
    %v3850 = vrot.slane %v3778, %v3849
    %v3851 = vlaneseq
    %v3852 = vshrl.u32 %v3851, 7
    %v3853 = vsub.s32 2, %v3852
    %v3854 = vrot.slane %v3778, %v3853
    %v3855 = vlaneseq
    %v3856 = vshrl.u32 %v3855, 7
    %v3857 = vsub.s32 3, %v3856
    %v3858 = vrot.slane %v3778, %v3857
    %v3859 = vlaneseq
    %v3860 = vshrl.u32 %v3859, 7
    %v3861 = vsub.s32 4, %v3860
    %v3862 = vrot.slane %v3778, %v3861
    %vm3883 = vcmp.eq.f32.partialorder %v3567, %v3786
    %vm3884 = vcmp.eq.f32.partialorder %v3568, %v3790
    %vm3885 = vcmp.eq.f32.partialorder %v3569, %v3794
    %vm3886 = vcmp.eq.f32.partialorder %v3570, %v3798
    %vm3887 = vcmp.eq.f32.partialorder %v3571, %v3802
    %vm3888 = vcmp.eq.f32.partialorder %v3572, %v3806
    %vm3889 = vcmp.eq.f32.partialorder %v3573, %v3810
    %vm3890 = vcmp.eq.f32.partialorder %v3574, %v3814
    %vm3891 = vcmp.eq.f32.partialorder %v3575, %v3818
    %vm3892 = vcmp.eq.f32.partialorder %v3576, %v3822
    %vm3893 = vcmp.eq.f32.partialorder %v3577, %v3826
    %vm3894 = vcmp.eq.f32.partialorder %v3578, %v3830
    %vm3895 = vcmp.eq.f32.partialorder %v3579, %v3834
    %vm3896 = vcmp.eq.f32.partialorder %v3580, %v3838
    %vm3897 = vcmp.eq.f32.partialorder %v3581, %v3842
    %vm3898 = vcmp.eq.f32.partialorder %v3582, %v3846
    %vm3899 = vcmp.eq.f32.partialorder %v3583, %v3850
    %vm3900 = vcmp.eq.f32.partialorder %v3584, %v3854
    %vm3901 = vcmp.eq.f32.partialorder %v3585, %v3858
    %vm3902 = vcmp.eq.f32.partialorder %v3586, %v3862
    %v3903 = vsel %vm3883, %v2076, 5
    %v3904 = vsel %vm3884, %v2076, 5
    %v3905 = vsel %vm3885, %v2076, 5
    %v3906 = vsel %vm3886, %v2076, 5
    %v3907 = vsel %vm3887, %v2076, 5
    %v3908 = vsel %vm3888, %v2076, 5
    %v3909 = vsel %vm3889, %v2076, 5
    %v3910 = vsel %vm3890, %v2076, 5
    %v3911 = vsel %vm3891, %v2076, 5
    %v3912 = vsel %vm3892, %v2076, 5
    %v3913 = vsel %vm3893, %v2076, 5
    %v3914 = vsel %vm3894, %v2076, 5
    %v3915 = vsel %vm3895, %v2076, 5
    %v3916 = vsel %vm3896, %v2076, 5
    %v3917 = vsel %vm3897, %v2076, 5
    %v3918 = vsel %vm3898, %v2076, 5
    %v3919 = vsel %vm3899, %v2076, 5
    %v3920 = vsel %vm3900, %v2076, 5
    %v3921 = vsel %vm3901, %v2076, 5
    %v3922 = vsel %vm3902, %v2076, 5
    %3923 = vset.pattern.permute.xlu0 0
    %3924 = vperm.xlu0 %3923, %v3903
    %v3925 = vpop.permute.xlu0 %3924
    %3926 = vset.pattern.permute.xlu0 0
    %3927 = vperm.xlu0 %3926, %v3904
    %v3928 = vpop.permute.xlu0 %3927
    %3929 = vset.pattern.permute.xlu0 0
    %3930 = vperm.xlu0 %3929, %v3905
    %v3931 = vpop.permute.xlu0 %3930
    %3932 = vset.pattern.permute.xlu0 0
    %3933 = vperm.xlu0 %3932, %v3906
    %v3934 = vpop.permute.xlu0 %3933
    %3935 = vset.pattern.permute.xlu0 0
    %3936 = vperm.xlu0 %3935, %v3907
    %v3937 = vpop.permute.xlu0 %3936
    %3938 = vset.pattern.permute.xlu0 0
    %3939 = vperm.xlu0 %3938, %v3908
    %v3940 = vpop.permute.xlu0 %3939
    %3941 = vset.pattern.permute.xlu0 0
    %3942 = vperm.xlu0 %3941, %v3909
    %v3943 = vpop.permute.xlu0 %3942
    %3944 = vset.pattern.permute.xlu0 0
    %3945 = vperm.xlu0 %3944, %v3910
    %v3946 = vpop.permute.xlu0 %3945
    %3947 = vset.pattern.permute.xlu0 0
    %3948 = vperm.xlu0 %3947, %v3911
    %v3949 = vpop.permute.xlu0 %3948
    %3950 = vset.pattern.permute.xlu0 0
    %3951 = vperm.xlu0 %3950, %v3912
    %v3952 = vpop.permute.xlu0 %3951
    %3953 = vset.pattern.permute.xlu0 0
    %3954 = vperm.xlu0 %3953, %v3913
    %v3955 = vpop.permute.xlu0 %3954
    %3956 = vset.pattern.permute.xlu0 0
    %3957 = vperm.xlu0 %3956, %v3914
    %v3958 = vpop.permute.xlu0 %3957
    %3959 = vset.pattern.permute.xlu0 0
    %3960 = vperm.xlu0 %3959, %v3915
    %v3961 = vpop.permute.xlu0 %3960
    %3962 = vset.pattern.permute.xlu0 0
    %3963 = vperm.xlu0 %3962, %v3916
    %v3964 = vpop.permute.xlu0 %3963
    %3965 = vset.pattern.permute.xlu0 0
    %3966 = vperm.xlu0 %3965, %v3917
    %v3967 = vpop.permute.xlu0 %3966
    %3968 = vset.pattern.permute.xlu0 0
    %3969 = vperm.xlu0 %3968, %v3918
    %v3970 = vpop.permute.xlu0 %3969
    %3971 = vset.pattern.permute.xlu0 0
    %3972 = vperm.xlu0 %3971, %v3919
    %v3973 = vpop.permute.xlu0 %3972
    %3974 = vset.pattern.permute.xlu0 0
    %3975 = vperm.xlu0 %3974, %v3920
    %v3976 = vpop.permute.xlu0 %3975
    %3977 = vset.pattern.permute.xlu0 0
    %3978 = vperm.xlu0 %3977, %v3921
    %v3979 = vpop.permute.xlu0 %3978
    %3980 = vset.pattern.permute.xlu0 0
    %3981 = vperm.xlu0 %3980, %v3922
    %v3982 = vpop.permute.xlu0 %3981
    %v3983 = vlaneseq
    %v3984 = vshrl.u32 %v3983, 7
    %v3985 = vsub.s32 %v348, %v3984
    %v3986 = vrot.slane %v3925, %v3985
    %v3987 = vlaneseq
    %v3988 = vshrl.u32 %v3987, 7
    %v3989 = vsub.s32 %v348, %v3988
    %v3990 = vrot.slane %v3928, %v3989
    %v3991 = vlaneseq
    %v3992 = vshrl.u32 %v3991, 7
    %v3993 = vsub.s32 %v348, %v3992
    %v3994 = vrot.slane %v3931, %v3993
    %v3995 = vlaneseq
    %v3996 = vshrl.u32 %v3995, 7
    %v3997 = vsub.s32 %v348, %v3996
    %v3998 = vrot.slane %v3934, %v3997
    %v3999 = vlaneseq
    %v4000 = vshrl.u32 %v3999, 7
    %v4001 = vsub.s32 %v348, %v4000
    %v4002 = vrot.slane %v3937, %v4001
    %v4003 = vlaneseq
    %v4004 = vshrl.u32 %v4003, 7
    %v4005 = vsub.s32 %v348, %v4004
    %v4006 = vrot.slane %v3940, %v4005
    %v4007 = vlaneseq
    %v4008 = vshrl.u32 %v4007, 7
    %v4009 = vsub.s32 %v348, %v4008
    %v4010 = vrot.slane %v3943, %v4009
    %v4011 = vlaneseq
    %v4012 = vshrl.u32 %v4011, 7
    %v4013 = vsub.s32 %v348, %v4012
    %v4014 = vrot.slane %v3946, %v4013
    %v4015 = vlaneseq
    %v4016 = vshrl.u32 %v4015, 7
    %v4017 = vsub.s32 %v348, %v4016
    %v4018 = vrot.slane %v3949, %v4017
    %v4019 = vlaneseq
    %v4020 = vshrl.u32 %v4019, 7
    %v4021 = vsub.s32 %v348, %v4020
    %v4022 = vrot.slane %v3952, %v4021
    %v4023 = vlaneseq
    %v4024 = vshrl.u32 %v4023, 7
    %v4025 = vsub.s32 %v348, %v4024
    %v4026 = vrot.slane %v3955, %v4025
    %v4027 = vlaneseq
    %v4028 = vshrl.u32 %v4027, 7
    %v4029 = vsub.s32 %v348, %v4028
    %v4030 = vrot.slane %v3958, %v4029
    %v4031 = vlaneseq
    %v4032 = vshrl.u32 %v4031, 7
    %v4033 = vsub.s32 %v348, %v4032
    %v4034 = vrot.slane %v3961, %v4033
    %v4035 = vlaneseq
    %v4036 = vshrl.u32 %v4035, 7
    %v4037 = vsub.s32 %v348, %v4036
    %v4038 = vrot.slane %v3964, %v4037
    %v4039 = vlaneseq
    %v4040 = vshrl.u32 %v4039, 7
    %v4041 = vsub.s32 %v348, %v4040
    %v4042 = vrot.slane %v3967, %v4041
    %v4043 = vlaneseq
    %v4044 = vshrl.u32 %v4043, 7
    %v4045 = vsub.s32 %v348, %v4044
    %v4046 = vrot.slane %v3970, %v4045
    %v4047 = vlaneseq
    %v4048 = vshrl.u32 %v4047, 7
    %v4049 = vsub.s32 %v348, %v4048
    %v4050 = vrot.slane %v3973, %v4049
    %v4051 = vlaneseq
    %v4052 = vshrl.u32 %v4051, 7
    %v4053 = vsub.s32 %v348, %v4052
    %v4054 = vrot.slane %v3976, %v4053
    %v4055 = vlaneseq
    %v4056 = vshrl.u32 %v4055, 7
    %v4057 = vsub.s32 %v348, %v4056
    %v4058 = vrot.slane %v3979, %v4057
    %v4059 = vlaneseq
    %v4060 = vshrl.u32 %v4059, 7
    %v4061 = vsub.s32 %v348, %v4060
    %v4062 = vrot.slane %v3982, %v4061
    %v4063 = vsel %vm1280, %v3990, %v3986
    %v4064 = vsel %vm1282, %v3994, %v4063
    %v4065 = vsel %vm1284, %v3998, %v4064
    %v4066 = vsel %vm1286, %v4002, %v4065
    %v4067 = vsel %vm1280, %v4010, %v4006
    %v4068 = vsel %vm1282, %v4014, %v4067
    %v4069 = vsel %vm1284, %v4018, %v4068
    %v4070 = vsel %vm1286, %v4022, %v4069
    %v4071 = vsel %vm1280, %v4030, %v4026
    %v4072 = vsel %vm1282, %v4034, %v4071
    %v4073 = vsel %vm1284, %v4038, %v4072
    %v4074 = vsel %vm1286, %v4042, %v4073
    %v4075 = vsel %vm1280, %v4050, %v4046
    %v4076 = vsel %vm1282, %v4054, %v4075
    %v4077 = vsel %vm1284, %v4058, %v4076
    %v4078 = vsel %vm1286, %v4062, %v4077
    %v4079 = vsel %vm1937, %v4066, 2147483647
    %v4080 = vand.u32 %v4079, 65535
    %v4081 = vshra.s32 %v4079, 16
    %v4082 = vcvt.s32.f32 %v4080
    %v4083 = vcvt.s32.f32 %v4081
    %4084 = vmin.xlane.f32.xlu0 %v4083
    %v4085 = vpop.xlane.xlu0 %4084
    %vm4086 = vcmp.eq.f32.partialorder %v4083, %v4085
    %v4087 = vsel %vm4086, %v4082, inf
    %4088 = vmin.xlane.f32.xlu0 %v4087
    %v4089 = vpop.xlane.xlu0 %4088
    %v4090 = vcvt.f32.s32 %v4089
    %v4091 = vcvt.f32.s32 %v4085
    %v4092 = vshll.u32 %v4091, 16
    %v4093 = vadd.s32 %v4092, %v4090
    %v4094 = vsel %vm1937, %v4070, 2147483647
    %v4095 = vand.u32 %v4094, 65535
    %v4096 = vshra.s32 %v4094, 16
    %v4097 = vcvt.s32.f32 %v4095
    %v4098 = vcvt.s32.f32 %v4096
    %4099 = vmin.xlane.f32.xlu0 %v4098
    %v4100 = vpop.xlane.xlu0 %4099
    %vm4101 = vcmp.eq.f32.partialorder %v4098, %v4100
    %v4102 = vsel %vm4101, %v4097, inf
    %4103 = vmin.xlane.f32.xlu0 %v4102
    %v4104 = vpop.xlane.xlu0 %4103
    %v4105 = vcvt.f32.s32 %v4104
    %v4106 = vcvt.f32.s32 %v4100
    %v4107 = vshll.u32 %v4106, 16
    %v4108 = vadd.s32 %v4107, %v4105
    %v4109 = vsel %vm1937, %v4074, 2147483647
    %v4110 = vand.u32 %v4109, 65535
    %v4111 = vshra.s32 %v4109, 16
    %v4112 = vcvt.s32.f32 %v4110
    %v4113 = vcvt.s32.f32 %v4111
    %4114 = vmin.xlane.f32.xlu0 %v4113
    %v4115 = vpop.xlane.xlu0 %4114
    %vm4116 = vcmp.eq.f32.partialorder %v4113, %v4115
    %v4117 = vsel %vm4116, %v4112, inf
    %4118 = vmin.xlane.f32.xlu0 %v4117
    %v4119 = vpop.xlane.xlu0 %4118
    %v4120 = vcvt.f32.s32 %v4119
    %v4121 = vcvt.f32.s32 %v4115
    %v4122 = vshll.u32 %v4121, 16
    %v4123 = vadd.s32 %v4122, %v4120
    %v4124 = vsel %vm1937, %v4078, 2147483647
    %v4125 = vand.u32 %v4124, 65535
    %v4126 = vshra.s32 %v4124, 16
    %v4127 = vcvt.s32.f32 %v4125
    %v4128 = vcvt.s32.f32 %v4126
    %4129 = vmin.xlane.f32.xlu0 %v4128
    %v4130 = vpop.xlane.xlu0 %4129
    %vm4131 = vcmp.eq.f32.partialorder %v4128, %v4130
    %v4132 = vsel %vm4131, %v4127, inf
    %4133 = vmin.xlane.f32.xlu0 %v4132
    %v4134 = vpop.xlane.xlu0 %4133
    %v4135 = vcvt.f32.s32 %v4134
    %v4136 = vcvt.f32.s32 %v4130
    %v4137 = vshll.u32 %v4136, 16
    %v4138 = vadd.s32 %v4137, %v4135
    %v4139 = vlaneseq
    %v4140 = vshrl.u32 %v4139, 7
    %v4141 = vsub.s32 4, %v4140
    %v4142 = vrot.slane %v873, %v4141
    %4144 = vbcast.lane.b32.xlu0 %v4142, 256
    %v4145 = vpop.permute.xlu0 %4144
    %v4146 = vlaneseq
    %v4147 = vshrl.u32 %v4146, 7
    %v4148 = vsub.s32 5, %v4147
    %v4149 = vrot.slane %v873, %v4148
    %4151 = vbcast.lane.b32.xlu0 %v4149, 256
    %v4152 = vpop.permute.xlu0 %4151
    %v4153 = vlaneseq
    %v4154 = vshrl.u32 %v4153, 7
    %v4155 = vsub.s32 6, %v4154
    %v4156 = vrot.slane %v873, %v4155
    %4158 = vbcast.lane.b32.xlu0 %v4156, 256
    %v4159 = vpop.permute.xlu0 %4158
    %v4160 = vlaneseq
    %v4161 = vshrl.u32 %v4160, 7
    %v4162 = vsub.s32 7, %v4161
    %v4163 = vrot.slane %v873, %v4162
    %4165 = vbcast.lane.b32.xlu0 %v4163, 256
    %v4166 = vpop.permute.xlu0 %4165
    %v4171 = vadd.f32 %v3769, %v4145
    %v4172 = vadd.f32 %v3772, %v4152
    %v4173 = vadd.f32 %v3775, %v4159
    %v4174 = vadd.f32 %v3778, %v4166
    %v4175 = vadd.f32 %v4171, %v1719
    %v4176 = vadd.f32 %v4171, %v1722
    %v4177 = vadd.f32 %v4171, %v1725
    %v4178 = vadd.f32 %v4171, %v1728
    %v4179 = vadd.f32 %v4171, %v1731
    %v4180 = vadd.f32 %v4172, %v1719
    %v4181 = vadd.f32 %v4172, %v1722
    %v4182 = vadd.f32 %v4172, %v1725
    %v4183 = vadd.f32 %v4172, %v1728
    %v4184 = vadd.f32 %v4172, %v1731
    %v4185 = vadd.f32 %v4173, %v1719
    %v4186 = vadd.f32 %v4173, %v1722
    %v4187 = vadd.f32 %v4173, %v1725
    %v4188 = vadd.f32 %v4173, %v1728
    %v4189 = vadd.f32 %v4173, %v1731
    %v4190 = vadd.f32 %v4174, %v1719
    %v4191 = vadd.f32 %v4174, %v1722
    %v4192 = vadd.f32 %v4174, %v1725
    %v4193 = vadd.f32 %v4174, %v1728
    %v4194 = vadd.f32 %v4174, %v1731
    %4215 = vset.pattern.permute.xlu0 0
    %4216 = vperm.xlu0 %4215, %v4175
    %v4217 = vpop.permute.xlu0 %4216
    %4218 = vset.pattern.permute.xlu0 0
    %4219 = vperm.xlu0 %4218, %v4176
    %v4220 = vpop.permute.xlu0 %4219
    %4221 = vset.pattern.permute.xlu0 0
    %4222 = vperm.xlu0 %4221, %v4177
    %v4223 = vpop.permute.xlu0 %4222
    %4224 = vset.pattern.permute.xlu0 0
    %4225 = vperm.xlu0 %4224, %v4178
    %v4226 = vpop.permute.xlu0 %4225
    %4227 = vset.pattern.permute.xlu0 0
    %4228 = vperm.xlu0 %4227, %v4179
    %v4229 = vpop.permute.xlu0 %4228
    %4230 = vset.pattern.permute.xlu0 0
    %4231 = vperm.xlu0 %4230, %v4180
    %v4232 = vpop.permute.xlu0 %4231
    %4233 = vset.pattern.permute.xlu0 0
    %4234 = vperm.xlu0 %4233, %v4181
    %v4235 = vpop.permute.xlu0 %4234
    %4236 = vset.pattern.permute.xlu0 0
    %4237 = vperm.xlu0 %4236, %v4182
    %v4238 = vpop.permute.xlu0 %4237
    %4239 = vset.pattern.permute.xlu0 0
    %4240 = vperm.xlu0 %4239, %v4183
    %v4241 = vpop.permute.xlu0 %4240
    %4242 = vset.pattern.permute.xlu0 0
    %4243 = vperm.xlu0 %4242, %v4184
    %v4244 = vpop.permute.xlu0 %4243
    %4245 = vset.pattern.permute.xlu0 0
    %4246 = vperm.xlu0 %4245, %v4185
    %v4247 = vpop.permute.xlu0 %4246
    %4248 = vset.pattern.permute.xlu0 0
    %4249 = vperm.xlu0 %4248, %v4186
    %v4250 = vpop.permute.xlu0 %4249
    %4251 = vset.pattern.permute.xlu0 0
    %4252 = vperm.xlu0 %4251, %v4187
    %v4253 = vpop.permute.xlu0 %4252
    %4254 = vset.pattern.permute.xlu0 0
    %4255 = vperm.xlu0 %4254, %v4188
    %v4256 = vpop.permute.xlu0 %4255
    %4257 = vset.pattern.permute.xlu0 0
    %4258 = vperm.xlu0 %4257, %v4189
    %v4259 = vpop.permute.xlu0 %4258
    %4260 = vset.pattern.permute.xlu0 0
    %4261 = vperm.xlu0 %4260, %v4190
    %v4262 = vpop.permute.xlu0 %4261
    %4263 = vset.pattern.permute.xlu0 0
    %4264 = vperm.xlu0 %4263, %v4191
    %v4265 = vpop.permute.xlu0 %4264
    %4266 = vset.pattern.permute.xlu0 0
    %4267 = vperm.xlu0 %4266, %v4192
    %v4268 = vpop.permute.xlu0 %4267
    %4269 = vset.pattern.permute.xlu0 0
    %4270 = vperm.xlu0 %4269, %v4193
    %v4271 = vpop.permute.xlu0 %4270
    %4272 = vset.pattern.permute.xlu0 0
    %4273 = vperm.xlu0 %4272, %v4194
    %v4274 = vpop.permute.xlu0 %4273
    %v4275 = vlaneseq
    %v4276 = vshrl.u32 %v4275, 7
    %v4277 = vsub.s32 %v348, %v4276
    %v4278 = vrot.slane %v4217, %v4277
    %v4279 = vlaneseq
    %v4280 = vshrl.u32 %v4279, 7
    %v4281 = vsub.s32 %v348, %v4280
    %v4282 = vrot.slane %v4220, %v4281
    %v4283 = vlaneseq
    %v4284 = vshrl.u32 %v4283, 7
    %v4285 = vsub.s32 %v348, %v4284
    %v4286 = vrot.slane %v4223, %v4285
    %v4287 = vlaneseq
    %v4288 = vshrl.u32 %v4287, 7
    %v4289 = vsub.s32 %v348, %v4288
    %v4290 = vrot.slane %v4226, %v4289
    %v4291 = vlaneseq
    %v4292 = vshrl.u32 %v4291, 7
    %v4293 = vsub.s32 %v348, %v4292
    %v4294 = vrot.slane %v4229, %v4293
    %v4295 = vlaneseq
    %v4296 = vshrl.u32 %v4295, 7
    %v4297 = vsub.s32 %v348, %v4296
    %v4298 = vrot.slane %v4232, %v4297
    %v4299 = vlaneseq
    %v4300 = vshrl.u32 %v4299, 7
    %v4301 = vsub.s32 %v348, %v4300
    %v4302 = vrot.slane %v4235, %v4301
    %v4303 = vlaneseq
    %v4304 = vshrl.u32 %v4303, 7
    %v4305 = vsub.s32 %v348, %v4304
    %v4306 = vrot.slane %v4238, %v4305
    %v4307 = vlaneseq
    %v4308 = vshrl.u32 %v4307, 7
    %v4309 = vsub.s32 %v348, %v4308
    %v4310 = vrot.slane %v4241, %v4309
    %v4311 = vlaneseq
    %v4312 = vshrl.u32 %v4311, 7
    %v4313 = vsub.s32 %v348, %v4312
    %v4314 = vrot.slane %v4244, %v4313
    %v4315 = vlaneseq
    %v4316 = vshrl.u32 %v4315, 7
    %v4317 = vsub.s32 %v348, %v4316
    %v4318 = vrot.slane %v4247, %v4317
    %v4319 = vlaneseq
    %v4320 = vshrl.u32 %v4319, 7
    %v4321 = vsub.s32 %v348, %v4320
    %v4322 = vrot.slane %v4250, %v4321
    %v4323 = vlaneseq
    %v4324 = vshrl.u32 %v4323, 7
    %v4325 = vsub.s32 %v348, %v4324
    %v4326 = vrot.slane %v4253, %v4325
    %v4327 = vlaneseq
    %v4328 = vshrl.u32 %v4327, 7
    %v4329 = vsub.s32 %v348, %v4328
    %v4330 = vrot.slane %v4256, %v4329
    %v4331 = vlaneseq
    %v4332 = vshrl.u32 %v4331, 7
    %v4333 = vsub.s32 %v348, %v4332
    %v4334 = vrot.slane %v4259, %v4333
    %v4335 = vlaneseq
    %v4336 = vshrl.u32 %v4335, 7
    %v4337 = vsub.s32 %v348, %v4336
    %v4338 = vrot.slane %v4262, %v4337
    %v4339 = vlaneseq
    %v4340 = vshrl.u32 %v4339, 7
    %v4341 = vsub.s32 %v348, %v4340
    %v4342 = vrot.slane %v4265, %v4341
    %v4343 = vlaneseq
    %v4344 = vshrl.u32 %v4343, 7
    %v4345 = vsub.s32 %v348, %v4344
    %v4346 = vrot.slane %v4268, %v4345
    %v4347 = vlaneseq
    %v4348 = vshrl.u32 %v4347, 7
    %v4349 = vsub.s32 %v348, %v4348
    %v4350 = vrot.slane %v4271, %v4349
    %v4351 = vlaneseq
    %v4352 = vshrl.u32 %v4351, 7
    %v4353 = vsub.s32 %v348, %v4352
    %v4354 = vrot.slane %v4274, %v4353
    %v4355 = vsel %vm1280, %v4282, %v4278
    %v4356 = vsel %vm1282, %v4286, %v4355
    %v4357 = vsel %vm1284, %v4290, %v4356
    %v4358 = vsel %vm1286, %v4294, %v4357
    %v4359 = vsel %vm1280, %v4302, %v4298
    %v4360 = vsel %vm1282, %v4306, %v4359
    %v4361 = vsel %vm1284, %v4310, %v4360
    %v4362 = vsel %vm1286, %v4314, %v4361
    %v4363 = vsel %vm1280, %v4322, %v4318
    %v4364 = vsel %vm1282, %v4326, %v4363
    %v4365 = vsel %vm1284, %v4330, %v4364
    %v4366 = vsel %vm1286, %v4334, %v4365
    %v4367 = vsel %vm1280, %v4342, %v4338
    %v4368 = vsel %vm1282, %v4346, %v4367
    %v4369 = vsel %vm1284, %v4350, %v4368
    %v4370 = vsel %vm1286, %v4354, %v4369
    %v4375 = vsel %vm1937, %v4358, -inf
    %4376 = vmax.xlane.f32.xlu0 %v4375
    %v4377 = vpop.xlane.xlu0 %4376
    %v4378 = vsel %vm1937, %v4362, -inf
    %4379 = vmax.xlane.f32.xlu0 %v4378
    %v4380 = vpop.xlane.xlu0 %4379
    %v4381 = vsel %vm1937, %v4366, -inf
    %4382 = vmax.xlane.f32.xlu0 %v4381
    %v4383 = vpop.xlane.xlu0 %4382
    %v4384 = vsel %vm1937, %v4370, -inf
    %4385 = vmax.xlane.f32.xlu0 %v4384
    %v4386 = vpop.xlane.xlu0 %4385
    %v4391 = vlaneseq
    %v4392 = vshrl.u32 %v4391, 7
    %v4393 = vsub.s32 0, %v4392
    %v4394 = vrot.slane %v4377, %v4393
    %v4395 = vlaneseq
    %v4396 = vshrl.u32 %v4395, 7
    %v4397 = vsub.s32 1, %v4396
    %v4398 = vrot.slane %v4377, %v4397
    %v4399 = vlaneseq
    %v4400 = vshrl.u32 %v4399, 7
    %v4401 = vsub.s32 2, %v4400
    %v4402 = vrot.slane %v4377, %v4401
    %v4403 = vlaneseq
    %v4404 = vshrl.u32 %v4403, 7
    %v4405 = vsub.s32 3, %v4404
    %v4406 = vrot.slane %v4377, %v4405
    %v4407 = vlaneseq
    %v4408 = vshrl.u32 %v4407, 7
    %v4409 = vsub.s32 4, %v4408
    %v4410 = vrot.slane %v4377, %v4409
    %v4411 = vlaneseq
    %v4412 = vshrl.u32 %v4411, 7
    %v4413 = vsub.s32 0, %v4412
    %v4414 = vrot.slane %v4380, %v4413
    %v4415 = vlaneseq
    %v4416 = vshrl.u32 %v4415, 7
    %v4417 = vsub.s32 1, %v4416
    %v4418 = vrot.slane %v4380, %v4417
    %v4419 = vlaneseq
    %v4420 = vshrl.u32 %v4419, 7
    %v4421 = vsub.s32 2, %v4420
    %v4422 = vrot.slane %v4380, %v4421
    %v4423 = vlaneseq
    %v4424 = vshrl.u32 %v4423, 7
    %v4425 = vsub.s32 3, %v4424
    %v4426 = vrot.slane %v4380, %v4425
    %v4427 = vlaneseq
    %v4428 = vshrl.u32 %v4427, 7
    %v4429 = vsub.s32 4, %v4428
    %v4430 = vrot.slane %v4380, %v4429
    %v4431 = vlaneseq
    %v4432 = vshrl.u32 %v4431, 7
    %v4433 = vsub.s32 0, %v4432
    %v4434 = vrot.slane %v4383, %v4433
    %v4435 = vlaneseq
    %v4436 = vshrl.u32 %v4435, 7
    %v4437 = vsub.s32 1, %v4436
    %v4438 = vrot.slane %v4383, %v4437
    %v4439 = vlaneseq
    %v4440 = vshrl.u32 %v4439, 7
    %v4441 = vsub.s32 2, %v4440
    %v4442 = vrot.slane %v4383, %v4441
    %v4443 = vlaneseq
    %v4444 = vshrl.u32 %v4443, 7
    %v4445 = vsub.s32 3, %v4444
    %v4446 = vrot.slane %v4383, %v4445
    %v4447 = vlaneseq
    %v4448 = vshrl.u32 %v4447, 7
    %v4449 = vsub.s32 4, %v4448
    %v4450 = vrot.slane %v4383, %v4449
    %v4451 = vlaneseq
    %v4452 = vshrl.u32 %v4451, 7
    %v4453 = vsub.s32 0, %v4452
    %v4454 = vrot.slane %v4386, %v4453
    %v4455 = vlaneseq
    %v4456 = vshrl.u32 %v4455, 7
    %v4457 = vsub.s32 1, %v4456
    %v4458 = vrot.slane %v4386, %v4457
    %v4459 = vlaneseq
    %v4460 = vshrl.u32 %v4459, 7
    %v4461 = vsub.s32 2, %v4460
    %v4462 = vrot.slane %v4386, %v4461
    %v4463 = vlaneseq
    %v4464 = vshrl.u32 %v4463, 7
    %v4465 = vsub.s32 3, %v4464
    %v4466 = vrot.slane %v4386, %v4465
    %v4467 = vlaneseq
    %v4468 = vshrl.u32 %v4467, 7
    %v4469 = vsub.s32 4, %v4468
    %v4470 = vrot.slane %v4386, %v4469
    %vm4491 = vcmp.eq.f32.partialorder %v4175, %v4394
    %vm4492 = vcmp.eq.f32.partialorder %v4176, %v4398
    %vm4493 = vcmp.eq.f32.partialorder %v4177, %v4402
    %vm4494 = vcmp.eq.f32.partialorder %v4178, %v4406
    %vm4495 = vcmp.eq.f32.partialorder %v4179, %v4410
    %vm4496 = vcmp.eq.f32.partialorder %v4180, %v4414
    %vm4497 = vcmp.eq.f32.partialorder %v4181, %v4418
    %vm4498 = vcmp.eq.f32.partialorder %v4182, %v4422
    %vm4499 = vcmp.eq.f32.partialorder %v4183, %v4426
    %vm4500 = vcmp.eq.f32.partialorder %v4184, %v4430
    %vm4501 = vcmp.eq.f32.partialorder %v4185, %v4434
    %vm4502 = vcmp.eq.f32.partialorder %v4186, %v4438
    %vm4503 = vcmp.eq.f32.partialorder %v4187, %v4442
    %vm4504 = vcmp.eq.f32.partialorder %v4188, %v4446
    %vm4505 = vcmp.eq.f32.partialorder %v4189, %v4450
    %vm4506 = vcmp.eq.f32.partialorder %v4190, %v4454
    %vm4507 = vcmp.eq.f32.partialorder %v4191, %v4458
    %vm4508 = vcmp.eq.f32.partialorder %v4192, %v4462
    %vm4509 = vcmp.eq.f32.partialorder %v4193, %v4466
    %vm4510 = vcmp.eq.f32.partialorder %v4194, %v4470
    %v4511 = vsel %vm4491, %v2076, 5
    %v4512 = vsel %vm4492, %v2076, 5
    %v4513 = vsel %vm4493, %v2076, 5
    %v4514 = vsel %vm4494, %v2076, 5
    %v4515 = vsel %vm4495, %v2076, 5
    %v4516 = vsel %vm4496, %v2076, 5
    %v4517 = vsel %vm4497, %v2076, 5
    %v4518 = vsel %vm4498, %v2076, 5
    %v4519 = vsel %vm4499, %v2076, 5
    %v4520 = vsel %vm4500, %v2076, 5
    %v4521 = vsel %vm4501, %v2076, 5
    %v4522 = vsel %vm4502, %v2076, 5
    %v4523 = vsel %vm4503, %v2076, 5
    %v4524 = vsel %vm4504, %v2076, 5
    %v4525 = vsel %vm4505, %v2076, 5
    %v4526 = vsel %vm4506, %v2076, 5
    %v4527 = vsel %vm4507, %v2076, 5
    %v4528 = vsel %vm4508, %v2076, 5
    %v4529 = vsel %vm4509, %v2076, 5
    %v4530 = vsel %vm4510, %v2076, 5
    %4531 = vset.pattern.permute.xlu0 0
    %4532 = vperm.xlu0 %4531, %v4511
    %v4533 = vpop.permute.xlu0 %4532
    %4534 = vset.pattern.permute.xlu0 0
    %4535 = vperm.xlu0 %4534, %v4512
    %v4536 = vpop.permute.xlu0 %4535
    %4537 = vset.pattern.permute.xlu0 0
    %4538 = vperm.xlu0 %4537, %v4513
    %v4539 = vpop.permute.xlu0 %4538
    %4540 = vset.pattern.permute.xlu0 0
    %4541 = vperm.xlu0 %4540, %v4514
    %v4542 = vpop.permute.xlu0 %4541
    %4543 = vset.pattern.permute.xlu0 0
    %4544 = vperm.xlu0 %4543, %v4515
    %v4545 = vpop.permute.xlu0 %4544
    %4546 = vset.pattern.permute.xlu0 0
    %4547 = vperm.xlu0 %4546, %v4516
    %v4548 = vpop.permute.xlu0 %4547
    %4549 = vset.pattern.permute.xlu0 0
    %4550 = vperm.xlu0 %4549, %v4517
    %v4551 = vpop.permute.xlu0 %4550
    %4552 = vset.pattern.permute.xlu0 0
    %4553 = vperm.xlu0 %4552, %v4518
    %v4554 = vpop.permute.xlu0 %4553
    %4555 = vset.pattern.permute.xlu0 0
    %4556 = vperm.xlu0 %4555, %v4519
    %v4557 = vpop.permute.xlu0 %4556
    %4558 = vset.pattern.permute.xlu0 0
    %4559 = vperm.xlu0 %4558, %v4520
    %v4560 = vpop.permute.xlu0 %4559
    %4561 = vset.pattern.permute.xlu0 0
    %4562 = vperm.xlu0 %4561, %v4521
    %v4563 = vpop.permute.xlu0 %4562
    %4564 = vset.pattern.permute.xlu0 0
    %4565 = vperm.xlu0 %4564, %v4522
    %v4566 = vpop.permute.xlu0 %4565
    %4567 = vset.pattern.permute.xlu0 0
    %4568 = vperm.xlu0 %4567, %v4523
    %v4569 = vpop.permute.xlu0 %4568
    %4570 = vset.pattern.permute.xlu0 0
    %4571 = vperm.xlu0 %4570, %v4524
    %v4572 = vpop.permute.xlu0 %4571
    %4573 = vset.pattern.permute.xlu0 0
    %4574 = vperm.xlu0 %4573, %v4525
    %v4575 = vpop.permute.xlu0 %4574
    %4576 = vset.pattern.permute.xlu0 0
    %4577 = vperm.xlu0 %4576, %v4526
    %v4578 = vpop.permute.xlu0 %4577
    %4579 = vset.pattern.permute.xlu0 0
    %4580 = vperm.xlu0 %4579, %v4527
    %v4581 = vpop.permute.xlu0 %4580
    %4582 = vset.pattern.permute.xlu0 0
    %4583 = vperm.xlu0 %4582, %v4528
    %v4584 = vpop.permute.xlu0 %4583
    %4585 = vset.pattern.permute.xlu0 0
    %4586 = vperm.xlu0 %4585, %v4529
    %v4587 = vpop.permute.xlu0 %4586
    %4588 = vset.pattern.permute.xlu0 0
    %4589 = vperm.xlu0 %4588, %v4530
    %v4590 = vpop.permute.xlu0 %4589
    %v4591 = vlaneseq
    %v4592 = vshrl.u32 %v4591, 7
    %v4593 = vsub.s32 %v348, %v4592
    %v4594 = vrot.slane %v4533, %v4593
    %v4595 = vlaneseq
    %v4596 = vshrl.u32 %v4595, 7
    %v4597 = vsub.s32 %v348, %v4596
    %v4598 = vrot.slane %v4536, %v4597
    %v4599 = vlaneseq
    %v4600 = vshrl.u32 %v4599, 7
    %v4601 = vsub.s32 %v348, %v4600
    %v4602 = vrot.slane %v4539, %v4601
    %v4603 = vlaneseq
    %v4604 = vshrl.u32 %v4603, 7
    %v4605 = vsub.s32 %v348, %v4604
    %v4606 = vrot.slane %v4542, %v4605
    %v4607 = vlaneseq
    %v4608 = vshrl.u32 %v4607, 7
    %v4609 = vsub.s32 %v348, %v4608
    %v4610 = vrot.slane %v4545, %v4609
    %v4611 = vlaneseq
    %v4612 = vshrl.u32 %v4611, 7
    %v4613 = vsub.s32 %v348, %v4612
    %v4614 = vrot.slane %v4548, %v4613
    %v4615 = vlaneseq
    %v4616 = vshrl.u32 %v4615, 7
    %v4617 = vsub.s32 %v348, %v4616
    %v4618 = vrot.slane %v4551, %v4617
    %v4619 = vlaneseq
    %v4620 = vshrl.u32 %v4619, 7
    %v4621 = vsub.s32 %v348, %v4620
    %v4622 = vrot.slane %v4554, %v4621
    %v4623 = vlaneseq
    %v4624 = vshrl.u32 %v4623, 7
    %v4625 = vsub.s32 %v348, %v4624
    %v4626 = vrot.slane %v4557, %v4625
    %v4627 = vlaneseq
    %v4628 = vshrl.u32 %v4627, 7
    %v4629 = vsub.s32 %v348, %v4628
    %v4630 = vrot.slane %v4560, %v4629
    %v4631 = vlaneseq
    %v4632 = vshrl.u32 %v4631, 7
    %v4633 = vsub.s32 %v348, %v4632
    %v4634 = vrot.slane %v4563, %v4633
    %v4635 = vlaneseq
    %v4636 = vshrl.u32 %v4635, 7
    %v4637 = vsub.s32 %v348, %v4636
    %v4638 = vrot.slane %v4566, %v4637
    %v4639 = vlaneseq
    %v4640 = vshrl.u32 %v4639, 7
    %v4641 = vsub.s32 %v348, %v4640
    %v4642 = vrot.slane %v4569, %v4641
    %v4643 = vlaneseq
    %v4644 = vshrl.u32 %v4643, 7
    %v4645 = vsub.s32 %v348, %v4644
    %v4646 = vrot.slane %v4572, %v4645
    %v4647 = vlaneseq
    %v4648 = vshrl.u32 %v4647, 7
    %v4649 = vsub.s32 %v348, %v4648
    %v4650 = vrot.slane %v4575, %v4649
    %v4651 = vlaneseq
    %v4652 = vshrl.u32 %v4651, 7
    %v4653 = vsub.s32 %v348, %v4652
    %v4654 = vrot.slane %v4578, %v4653
    %v4655 = vlaneseq
    %v4656 = vshrl.u32 %v4655, 7
    %v4657 = vsub.s32 %v348, %v4656
    %v4658 = vrot.slane %v4581, %v4657
    %v4659 = vlaneseq
    %v4660 = vshrl.u32 %v4659, 7
    %v4661 = vsub.s32 %v348, %v4660
    %v4662 = vrot.slane %v4584, %v4661
    %v4663 = vlaneseq
    %v4664 = vshrl.u32 %v4663, 7
    %v4665 = vsub.s32 %v348, %v4664
    %v4666 = vrot.slane %v4587, %v4665
    %v4667 = vlaneseq
    %v4668 = vshrl.u32 %v4667, 7
    %v4669 = vsub.s32 %v348, %v4668
    %v4670 = vrot.slane %v4590, %v4669
    %v4671 = vsel %vm1280, %v4598, %v4594
    %v4672 = vsel %vm1282, %v4602, %v4671
    %v4673 = vsel %vm1284, %v4606, %v4672
    %v4674 = vsel %vm1286, %v4610, %v4673
    %v4675 = vsel %vm1280, %v4618, %v4614
    %v4676 = vsel %vm1282, %v4622, %v4675
    %v4677 = vsel %vm1284, %v4626, %v4676
    %v4678 = vsel %vm1286, %v4630, %v4677
    %v4679 = vsel %vm1280, %v4638, %v4634
    %v4680 = vsel %vm1282, %v4642, %v4679
    %v4681 = vsel %vm1284, %v4646, %v4680
    %v4682 = vsel %vm1286, %v4650, %v4681
    %v4683 = vsel %vm1280, %v4658, %v4654
    %v4684 = vsel %vm1282, %v4662, %v4683
    %v4685 = vsel %vm1284, %v4666, %v4684
    %v4686 = vsel %vm1286, %v4670, %v4685
    %v4687 = vsel %vm1937, %v4674, 2147483647
    %v4688 = vand.u32 %v4687, 65535
    %v4689 = vshra.s32 %v4687, 16
    %v4690 = vcvt.s32.f32 %v4688
    %v4691 = vcvt.s32.f32 %v4689
    %4692 = vmin.xlane.f32.xlu0 %v4691
    %v4693 = vpop.xlane.xlu0 %4692
    %vm4694 = vcmp.eq.f32.partialorder %v4691, %v4693
    %v4695 = vsel %vm4694, %v4690, inf
    %4696 = vmin.xlane.f32.xlu0 %v4695
    %v4697 = vpop.xlane.xlu0 %4696
    %v4698 = vcvt.f32.s32 %v4697
    %v4699 = vcvt.f32.s32 %v4693
    %v4700 = vshll.u32 %v4699, 16
    %v4701 = vadd.s32 %v4700, %v4698
    %v4702 = vsel %vm1937, %v4678, 2147483647
    %v4703 = vand.u32 %v4702, 65535
    %v4704 = vshra.s32 %v4702, 16
    %v4705 = vcvt.s32.f32 %v4703
    %v4706 = vcvt.s32.f32 %v4704
    %4707 = vmin.xlane.f32.xlu0 %v4706
    %v4708 = vpop.xlane.xlu0 %4707
    %vm4709 = vcmp.eq.f32.partialorder %v4706, %v4708
    %v4710 = vsel %vm4709, %v4705, inf
    %4711 = vmin.xlane.f32.xlu0 %v4710
    %v4712 = vpop.xlane.xlu0 %4711
    %v4713 = vcvt.f32.s32 %v4712
    %v4714 = vcvt.f32.s32 %v4708
    %v4715 = vshll.u32 %v4714, 16
    %v4716 = vadd.s32 %v4715, %v4713
    %v4717 = vsel %vm1937, %v4682, 2147483647
    %v4718 = vand.u32 %v4717, 65535
    %v4719 = vshra.s32 %v4717, 16
    %v4720 = vcvt.s32.f32 %v4718
    %v4721 = vcvt.s32.f32 %v4719
    %4722 = vmin.xlane.f32.xlu0 %v4721
    %v4723 = vpop.xlane.xlu0 %4722
    %vm4724 = vcmp.eq.f32.partialorder %v4721, %v4723
    %v4725 = vsel %vm4724, %v4720, inf
    %4726 = vmin.xlane.f32.xlu0 %v4725
    %v4727 = vpop.xlane.xlu0 %4726
    %v4728 = vcvt.f32.s32 %v4727
    %v4729 = vcvt.f32.s32 %v4723
    %v4730 = vshll.u32 %v4729, 16
    %v4731 = vadd.s32 %v4730, %v4728
    %v4732 = vsel %vm1937, %v4686, 2147483647
    %v4733 = vand.u32 %v4732, 65535
    %v4734 = vshra.s32 %v4732, 16
    %v4735 = vcvt.s32.f32 %v4733
    %v4736 = vcvt.s32.f32 %v4734
    %4737 = vmin.xlane.f32.xlu0 %v4736
    %v4738 = vpop.xlane.xlu0 %4737
    %vm4739 = vcmp.eq.f32.partialorder %v4736, %v4738
    %v4740 = vsel %vm4739, %v4735, inf
    %4741 = vmin.xlane.f32.xlu0 %v4740
    %v4742 = vpop.xlane.xlu0 %4741
    %v4743 = vcvt.f32.s32 %v4742
    %v4744 = vcvt.f32.s32 %v4738
    %v4745 = vshll.u32 %v4744, 16
    %v4746 = vadd.s32 %v4745, %v4743
    %v4748 = vlaneseq
    %v4749 = vshrl.u32 %v4748, 7
    %v4750 = vsub.s32 0, %v4749
    %v4751 = vrot.slane %v878, %v4750
    %4753 = vbcast.lane.b32.xlu0 %v4751, 256
    %v4754 = vpop.permute.xlu0 %4753
    %v4755 = vlaneseq
    %v4756 = vshrl.u32 %v4755, 7
    %v4757 = vsub.s32 1, %v4756
    %v4758 = vrot.slane %v878, %v4757
    %4760 = vbcast.lane.b32.xlu0 %v4758, 256
    %v4761 = vpop.permute.xlu0 %4760
    %v4762 = vlaneseq
    %v4763 = vshrl.u32 %v4762, 7
    %v4764 = vsub.s32 2, %v4763
    %v4765 = vrot.slane %v878, %v4764
    %4767 = vbcast.lane.b32.xlu0 %v4765, 256
    %v4768 = vpop.permute.xlu0 %4767
    %v4769 = vlaneseq
    %v4770 = vshrl.u32 %v4769, 7
    %v4771 = vsub.s32 3, %v4770
    %v4772 = vrot.slane %v878, %v4771
    %4774 = vbcast.lane.b32.xlu0 %v4772, 256
    %v4775 = vpop.permute.xlu0 %4774
    %v4780 = vadd.f32 %v4377, %v4754
    %v4781 = vadd.f32 %v4380, %v4761
    %v4782 = vadd.f32 %v4383, %v4768
    %v4783 = vadd.f32 %v4386, %v4775
    %v4784 = vadd.f32 %v4780, %v1719
    %v4785 = vadd.f32 %v4780, %v1722
    %v4786 = vadd.f32 %v4780, %v1725
    %v4787 = vadd.f32 %v4780, %v1728
    %v4788 = vadd.f32 %v4780, %v1731
    %v4789 = vadd.f32 %v4781, %v1719
    %v4790 = vadd.f32 %v4781, %v1722
    %v4791 = vadd.f32 %v4781, %v1725
    %v4792 = vadd.f32 %v4781, %v1728
    %v4793 = vadd.f32 %v4781, %v1731
    %v4794 = vadd.f32 %v4782, %v1719
    %v4795 = vadd.f32 %v4782, %v1722
    %v4796 = vadd.f32 %v4782, %v1725
    %v4797 = vadd.f32 %v4782, %v1728
    %v4798 = vadd.f32 %v4782, %v1731
    %v4799 = vadd.f32 %v4783, %v1719
    %v4800 = vadd.f32 %v4783, %v1722
    %v4801 = vadd.f32 %v4783, %v1725
    %v4802 = vadd.f32 %v4783, %v1728
    %v4803 = vadd.f32 %v4783, %v1731
    %4824 = vset.pattern.permute.xlu0 0
    %4825 = vperm.xlu0 %4824, %v4784
    %v4826 = vpop.permute.xlu0 %4825
    %4827 = vset.pattern.permute.xlu0 0
    %4828 = vperm.xlu0 %4827, %v4785
    %v4829 = vpop.permute.xlu0 %4828
    %4830 = vset.pattern.permute.xlu0 0
    %4831 = vperm.xlu0 %4830, %v4786
    %v4832 = vpop.permute.xlu0 %4831
    %4833 = vset.pattern.permute.xlu0 0
    %4834 = vperm.xlu0 %4833, %v4787
    %v4835 = vpop.permute.xlu0 %4834
    %4836 = vset.pattern.permute.xlu0 0
    %4837 = vperm.xlu0 %4836, %v4788
    %v4838 = vpop.permute.xlu0 %4837
    %4839 = vset.pattern.permute.xlu0 0
    %4840 = vperm.xlu0 %4839, %v4789
    %v4841 = vpop.permute.xlu0 %4840
    %4842 = vset.pattern.permute.xlu0 0
    %4843 = vperm.xlu0 %4842, %v4790
    %v4844 = vpop.permute.xlu0 %4843
    %4845 = vset.pattern.permute.xlu0 0
    %4846 = vperm.xlu0 %4845, %v4791
    %v4847 = vpop.permute.xlu0 %4846
    %4848 = vset.pattern.permute.xlu0 0
    %4849 = vperm.xlu0 %4848, %v4792
    %v4850 = vpop.permute.xlu0 %4849
    %4851 = vset.pattern.permute.xlu0 0
    %4852 = vperm.xlu0 %4851, %v4793
    %v4853 = vpop.permute.xlu0 %4852
    %4854 = vset.pattern.permute.xlu0 0
    %4855 = vperm.xlu0 %4854, %v4794
    %v4856 = vpop.permute.xlu0 %4855
    %4857 = vset.pattern.permute.xlu0 0
    %4858 = vperm.xlu0 %4857, %v4795
    %v4859 = vpop.permute.xlu0 %4858
    %4860 = vset.pattern.permute.xlu0 0
    %4861 = vperm.xlu0 %4860, %v4796
    %v4862 = vpop.permute.xlu0 %4861
    %4863 = vset.pattern.permute.xlu0 0
    %4864 = vperm.xlu0 %4863, %v4797
    %v4865 = vpop.permute.xlu0 %4864
    %4866 = vset.pattern.permute.xlu0 0
    %4867 = vperm.xlu0 %4866, %v4798
    %v4868 = vpop.permute.xlu0 %4867
    %4869 = vset.pattern.permute.xlu0 0
    %4870 = vperm.xlu0 %4869, %v4799
    %v4871 = vpop.permute.xlu0 %4870
    %4872 = vset.pattern.permute.xlu0 0
    %4873 = vperm.xlu0 %4872, %v4800
    %v4874 = vpop.permute.xlu0 %4873
    %4875 = vset.pattern.permute.xlu0 0
    %4876 = vperm.xlu0 %4875, %v4801
    %v4877 = vpop.permute.xlu0 %4876
    %4878 = vset.pattern.permute.xlu0 0
    %4879 = vperm.xlu0 %4878, %v4802
    %v4880 = vpop.permute.xlu0 %4879
    %4881 = vset.pattern.permute.xlu0 0
    %4882 = vperm.xlu0 %4881, %v4803
    %v4883 = vpop.permute.xlu0 %4882
    %v4884 = vlaneseq
    %v4885 = vshrl.u32 %v4884, 7
    %v4886 = vsub.s32 %v348, %v4885
    %v4887 = vrot.slane %v4826, %v4886
    %v4888 = vlaneseq
    %v4889 = vshrl.u32 %v4888, 7
    %v4890 = vsub.s32 %v348, %v4889
    %v4891 = vrot.slane %v4829, %v4890
    %v4892 = vlaneseq
    %v4893 = vshrl.u32 %v4892, 7
    %v4894 = vsub.s32 %v348, %v4893
    %v4895 = vrot.slane %v4832, %v4894
    %v4896 = vlaneseq
    %v4897 = vshrl.u32 %v4896, 7
    %v4898 = vsub.s32 %v348, %v4897
    %v4899 = vrot.slane %v4835, %v4898
    %v4900 = vlaneseq
    %v4901 = vshrl.u32 %v4900, 7
    %v4902 = vsub.s32 %v348, %v4901
    %v4903 = vrot.slane %v4838, %v4902
    %v4904 = vlaneseq
    %v4905 = vshrl.u32 %v4904, 7
    %v4906 = vsub.s32 %v348, %v4905
    %v4907 = vrot.slane %v4841, %v4906
    %v4908 = vlaneseq
    %v4909 = vshrl.u32 %v4908, 7
    %v4910 = vsub.s32 %v348, %v4909
    %v4911 = vrot.slane %v4844, %v4910
    %v4912 = vlaneseq
    %v4913 = vshrl.u32 %v4912, 7
    %v4914 = vsub.s32 %v348, %v4913
    %v4915 = vrot.slane %v4847, %v4914
    %v4916 = vlaneseq
    %v4917 = vshrl.u32 %v4916, 7
    %v4918 = vsub.s32 %v348, %v4917
    %v4919 = vrot.slane %v4850, %v4918
    %v4920 = vlaneseq
    %v4921 = vshrl.u32 %v4920, 7
    %v4922 = vsub.s32 %v348, %v4921
    %v4923 = vrot.slane %v4853, %v4922
    %v4924 = vlaneseq
    %v4925 = vshrl.u32 %v4924, 7
    %v4926 = vsub.s32 %v348, %v4925
    %v4927 = vrot.slane %v4856, %v4926
    %v4928 = vlaneseq
    %v4929 = vshrl.u32 %v4928, 7
    %v4930 = vsub.s32 %v348, %v4929
    %v4931 = vrot.slane %v4859, %v4930
    %v4932 = vlaneseq
    %v4933 = vshrl.u32 %v4932, 7
    %v4934 = vsub.s32 %v348, %v4933
    %v4935 = vrot.slane %v4862, %v4934
    %v4936 = vlaneseq
    %v4937 = vshrl.u32 %v4936, 7
    %v4938 = vsub.s32 %v348, %v4937
    %v4939 = vrot.slane %v4865, %v4938
    %v4940 = vlaneseq
    %v4941 = vshrl.u32 %v4940, 7
    %v4942 = vsub.s32 %v348, %v4941
    %v4943 = vrot.slane %v4868, %v4942
    %v4944 = vlaneseq
    %v4945 = vshrl.u32 %v4944, 7
    %v4946 = vsub.s32 %v348, %v4945
    %v4947 = vrot.slane %v4871, %v4946
    %v4948 = vlaneseq
    %v4949 = vshrl.u32 %v4948, 7
    %v4950 = vsub.s32 %v348, %v4949
    %v4951 = vrot.slane %v4874, %v4950
    %v4952 = vlaneseq
    %v4953 = vshrl.u32 %v4952, 7
    %v4954 = vsub.s32 %v348, %v4953
    %v4955 = vrot.slane %v4877, %v4954
    %v4956 = vlaneseq
    %v4957 = vshrl.u32 %v4956, 7
    %v4958 = vsub.s32 %v348, %v4957
    %v4959 = vrot.slane %v4880, %v4958
    %v4960 = vlaneseq
    %v4961 = vshrl.u32 %v4960, 7
    %v4962 = vsub.s32 %v348, %v4961
    %v4963 = vrot.slane %v4883, %v4962
    %v4964 = vsel %vm1280, %v4891, %v4887
    %v4965 = vsel %vm1282, %v4895, %v4964
    %v4966 = vsel %vm1284, %v4899, %v4965
    %v4967 = vsel %vm1286, %v4903, %v4966
    %v4968 = vsel %vm1280, %v4911, %v4907
    %v4969 = vsel %vm1282, %v4915, %v4968
    %v4970 = vsel %vm1284, %v4919, %v4969
    %v4971 = vsel %vm1286, %v4923, %v4970
    %v4972 = vsel %vm1280, %v4931, %v4927
    %v4973 = vsel %vm1282, %v4935, %v4972
    %v4974 = vsel %vm1284, %v4939, %v4973
    %v4975 = vsel %vm1286, %v4943, %v4974
    %v4976 = vsel %vm1280, %v4951, %v4947
    %v4977 = vsel %vm1282, %v4955, %v4976
    %v4978 = vsel %vm1284, %v4959, %v4977
    %v4979 = vsel %vm1286, %v4963, %v4978
    %v4984 = vsel %vm1937, %v4967, -inf
    %4985 = vmax.xlane.f32.xlu0 %v4984
    %v4986 = vpop.xlane.xlu0 %4985
    %v4987 = vsel %vm1937, %v4971, -inf
    %4988 = vmax.xlane.f32.xlu0 %v4987
    %v4989 = vpop.xlane.xlu0 %4988
    %v4990 = vsel %vm1937, %v4975, -inf
    %4991 = vmax.xlane.f32.xlu0 %v4990
    %v4992 = vpop.xlane.xlu0 %4991
    %v4993 = vsel %vm1937, %v4979, -inf
    %4994 = vmax.xlane.f32.xlu0 %v4993
    %v4995 = vpop.xlane.xlu0 %4994
    %v5000 = vlaneseq
    %v5001 = vshrl.u32 %v5000, 7
    %v5002 = vsub.s32 0, %v5001
    %v5003 = vrot.slane %v4986, %v5002
    %v5004 = vlaneseq
    %v5005 = vshrl.u32 %v5004, 7
    %v5006 = vsub.s32 1, %v5005
    %v5007 = vrot.slane %v4986, %v5006
    %v5008 = vlaneseq
    %v5009 = vshrl.u32 %v5008, 7
    %v5010 = vsub.s32 2, %v5009
    %v5011 = vrot.slane %v4986, %v5010
    %v5012 = vlaneseq
    %v5013 = vshrl.u32 %v5012, 7
    %v5014 = vsub.s32 3, %v5013
    %v5015 = vrot.slane %v4986, %v5014
    %v5016 = vlaneseq
    %v5017 = vshrl.u32 %v5016, 7
    %v5018 = vsub.s32 4, %v5017
    %v5019 = vrot.slane %v4986, %v5018
    %v5020 = vlaneseq
    %v5021 = vshrl.u32 %v5020, 7
    %v5022 = vsub.s32 0, %v5021
    %v5023 = vrot.slane %v4989, %v5022
    %v5024 = vlaneseq
    %v5025 = vshrl.u32 %v5024, 7
    %v5026 = vsub.s32 1, %v5025
    %v5027 = vrot.slane %v4989, %v5026
    %v5028 = vlaneseq
    %v5029 = vshrl.u32 %v5028, 7
    %v5030 = vsub.s32 2, %v5029
    %v5031 = vrot.slane %v4989, %v5030
    %v5032 = vlaneseq
    %v5033 = vshrl.u32 %v5032, 7
    %v5034 = vsub.s32 3, %v5033
    %v5035 = vrot.slane %v4989, %v5034
    %v5036 = vlaneseq
    %v5037 = vshrl.u32 %v5036, 7
    %v5038 = vsub.s32 4, %v5037
    %v5039 = vrot.slane %v4989, %v5038
    %v5040 = vlaneseq
    %v5041 = vshrl.u32 %v5040, 7
    %v5042 = vsub.s32 0, %v5041
    %v5043 = vrot.slane %v4992, %v5042
    %v5044 = vlaneseq
    %v5045 = vshrl.u32 %v5044, 7
    %v5046 = vsub.s32 1, %v5045
    %v5047 = vrot.slane %v4992, %v5046
    %v5048 = vlaneseq
    %v5049 = vshrl.u32 %v5048, 7
    %v5050 = vsub.s32 2, %v5049
    %v5051 = vrot.slane %v4992, %v5050
    %v5052 = vlaneseq
    %v5053 = vshrl.u32 %v5052, 7
    %v5054 = vsub.s32 3, %v5053
    %v5055 = vrot.slane %v4992, %v5054
    %v5056 = vlaneseq
    %v5057 = vshrl.u32 %v5056, 7
    %v5058 = vsub.s32 4, %v5057
    %v5059 = vrot.slane %v4992, %v5058
    %v5060 = vlaneseq
    %v5061 = vshrl.u32 %v5060, 7
    %v5062 = vsub.s32 0, %v5061
    %v5063 = vrot.slane %v4995, %v5062
    %v5064 = vlaneseq
    %v5065 = vshrl.u32 %v5064, 7
    %v5066 = vsub.s32 1, %v5065
    %v5067 = vrot.slane %v4995, %v5066
    %v5068 = vlaneseq
    %v5069 = vshrl.u32 %v5068, 7
    %v5070 = vsub.s32 2, %v5069
    %v5071 = vrot.slane %v4995, %v5070
    %v5072 = vlaneseq
    %v5073 = vshrl.u32 %v5072, 7
    %v5074 = vsub.s32 3, %v5073
    %v5075 = vrot.slane %v4995, %v5074
    %v5076 = vlaneseq
    %v5077 = vshrl.u32 %v5076, 7
    %v5078 = vsub.s32 4, %v5077
    %v5079 = vrot.slane %v4995, %v5078
    %vm5100 = vcmp.eq.f32.partialorder %v4784, %v5003
    %vm5101 = vcmp.eq.f32.partialorder %v4785, %v5007
    %vm5102 = vcmp.eq.f32.partialorder %v4786, %v5011
    %vm5103 = vcmp.eq.f32.partialorder %v4787, %v5015
    %vm5104 = vcmp.eq.f32.partialorder %v4788, %v5019
    %vm5105 = vcmp.eq.f32.partialorder %v4789, %v5023
    %vm5106 = vcmp.eq.f32.partialorder %v4790, %v5027
    %vm5107 = vcmp.eq.f32.partialorder %v4791, %v5031
    %vm5108 = vcmp.eq.f32.partialorder %v4792, %v5035
    %vm5109 = vcmp.eq.f32.partialorder %v4793, %v5039
    %vm5110 = vcmp.eq.f32.partialorder %v4794, %v5043
    %vm5111 = vcmp.eq.f32.partialorder %v4795, %v5047
    %vm5112 = vcmp.eq.f32.partialorder %v4796, %v5051
    %vm5113 = vcmp.eq.f32.partialorder %v4797, %v5055
    %vm5114 = vcmp.eq.f32.partialorder %v4798, %v5059
    %vm5115 = vcmp.eq.f32.partialorder %v4799, %v5063
    %vm5116 = vcmp.eq.f32.partialorder %v4800, %v5067
    %vm5117 = vcmp.eq.f32.partialorder %v4801, %v5071
    %vm5118 = vcmp.eq.f32.partialorder %v4802, %v5075
    %vm5119 = vcmp.eq.f32.partialorder %v4803, %v5079
    %v5120 = vsel %vm5100, %v2076, 5
    %v5121 = vsel %vm5101, %v2076, 5
    %v5122 = vsel %vm5102, %v2076, 5
    %v5123 = vsel %vm5103, %v2076, 5
    %v5124 = vsel %vm5104, %v2076, 5
    %v5125 = vsel %vm5105, %v2076, 5
    %v5126 = vsel %vm5106, %v2076, 5
    %v5127 = vsel %vm5107, %v2076, 5
    %v5128 = vsel %vm5108, %v2076, 5
    %v5129 = vsel %vm5109, %v2076, 5
    %v5130 = vsel %vm5110, %v2076, 5
    %v5131 = vsel %vm5111, %v2076, 5
    %v5132 = vsel %vm5112, %v2076, 5
    %v5133 = vsel %vm5113, %v2076, 5
    %v5134 = vsel %vm5114, %v2076, 5
    %v5135 = vsel %vm5115, %v2076, 5
    %v5136 = vsel %vm5116, %v2076, 5
    %v5137 = vsel %vm5117, %v2076, 5
    %v5138 = vsel %vm5118, %v2076, 5
    %v5139 = vsel %vm5119, %v2076, 5
    %5140 = vset.pattern.permute.xlu0 0
    %5141 = vperm.xlu0 %5140, %v5120
    %v5142 = vpop.permute.xlu0 %5141
    %5143 = vset.pattern.permute.xlu0 0
    %5144 = vperm.xlu0 %5143, %v5121
    %v5145 = vpop.permute.xlu0 %5144
    %5146 = vset.pattern.permute.xlu0 0
    %5147 = vperm.xlu0 %5146, %v5122
    %v5148 = vpop.permute.xlu0 %5147
    %5149 = vset.pattern.permute.xlu0 0
    %5150 = vperm.xlu0 %5149, %v5123
    %v5151 = vpop.permute.xlu0 %5150
    %5152 = vset.pattern.permute.xlu0 0
    %5153 = vperm.xlu0 %5152, %v5124
    %v5154 = vpop.permute.xlu0 %5153
    %5155 = vset.pattern.permute.xlu0 0
    %5156 = vperm.xlu0 %5155, %v5125
    %v5157 = vpop.permute.xlu0 %5156
    %5158 = vset.pattern.permute.xlu0 0
    %5159 = vperm.xlu0 %5158, %v5126
    %v5160 = vpop.permute.xlu0 %5159
    %5161 = vset.pattern.permute.xlu0 0
    %5162 = vperm.xlu0 %5161, %v5127
    %v5163 = vpop.permute.xlu0 %5162
    %5164 = vset.pattern.permute.xlu0 0
    %5165 = vperm.xlu0 %5164, %v5128
    %v5166 = vpop.permute.xlu0 %5165
    %5167 = vset.pattern.permute.xlu0 0
    %5168 = vperm.xlu0 %5167, %v5129
    %v5169 = vpop.permute.xlu0 %5168
    %5170 = vset.pattern.permute.xlu0 0
    %5171 = vperm.xlu0 %5170, %v5130
    %v5172 = vpop.permute.xlu0 %5171
    %5173 = vset.pattern.permute.xlu0 0
    %5174 = vperm.xlu0 %5173, %v5131
    %v5175 = vpop.permute.xlu0 %5174
    %5176 = vset.pattern.permute.xlu0 0
    %5177 = vperm.xlu0 %5176, %v5132
    %v5178 = vpop.permute.xlu0 %5177
    %5179 = vset.pattern.permute.xlu0 0
    %5180 = vperm.xlu0 %5179, %v5133
    %v5181 = vpop.permute.xlu0 %5180
    %5182 = vset.pattern.permute.xlu0 0
    %5183 = vperm.xlu0 %5182, %v5134
    %v5184 = vpop.permute.xlu0 %5183
    %5185 = vset.pattern.permute.xlu0 0
    %5186 = vperm.xlu0 %5185, %v5135
    %v5187 = vpop.permute.xlu0 %5186
    %5188 = vset.pattern.permute.xlu0 0
    %5189 = vperm.xlu0 %5188, %v5136
    %v5190 = vpop.permute.xlu0 %5189
    %5191 = vset.pattern.permute.xlu0 0
    %5192 = vperm.xlu0 %5191, %v5137
    %v5193 = vpop.permute.xlu0 %5192
    %5194 = vset.pattern.permute.xlu0 0
    %5195 = vperm.xlu0 %5194, %v5138
    %v5196 = vpop.permute.xlu0 %5195
    %5197 = vset.pattern.permute.xlu0 0
    %5198 = vperm.xlu0 %5197, %v5139
    %v5199 = vpop.permute.xlu0 %5198
    %v5200 = vlaneseq
    %v5201 = vshrl.u32 %v5200, 7
    %v5202 = vsub.s32 %v348, %v5201
    %v5203 = vrot.slane %v5142, %v5202
    %v5204 = vlaneseq
    %v5205 = vshrl.u32 %v5204, 7
    %v5206 = vsub.s32 %v348, %v5205
    %v5207 = vrot.slane %v5145, %v5206
    %v5208 = vlaneseq
    %v5209 = vshrl.u32 %v5208, 7
    %v5210 = vsub.s32 %v348, %v5209
    %v5211 = vrot.slane %v5148, %v5210
    %v5212 = vlaneseq
    %v5213 = vshrl.u32 %v5212, 7
    %v5214 = vsub.s32 %v348, %v5213
    %v5215 = vrot.slane %v5151, %v5214
    %v5216 = vlaneseq
    %v5217 = vshrl.u32 %v5216, 7
    %v5218 = vsub.s32 %v348, %v5217
    %v5219 = vrot.slane %v5154, %v5218
    %v5220 = vlaneseq
    %v5221 = vshrl.u32 %v5220, 7
    %v5222 = vsub.s32 %v348, %v5221
    %v5223 = vrot.slane %v5157, %v5222
    %v5224 = vlaneseq
    %v5225 = vshrl.u32 %v5224, 7
    %v5226 = vsub.s32 %v348, %v5225
    %v5227 = vrot.slane %v5160, %v5226
    %v5228 = vlaneseq
    %v5229 = vshrl.u32 %v5228, 7
    %v5230 = vsub.s32 %v348, %v5229
    %v5231 = vrot.slane %v5163, %v5230
    %v5232 = vlaneseq
    %v5233 = vshrl.u32 %v5232, 7
    %v5234 = vsub.s32 %v348, %v5233
    %v5235 = vrot.slane %v5166, %v5234
    %v5236 = vlaneseq
    %v5237 = vshrl.u32 %v5236, 7
    %v5238 = vsub.s32 %v348, %v5237
    %v5239 = vrot.slane %v5169, %v5238
    %v5240 = vlaneseq
    %v5241 = vshrl.u32 %v5240, 7
    %v5242 = vsub.s32 %v348, %v5241
    %v5243 = vrot.slane %v5172, %v5242
    %v5244 = vlaneseq
    %v5245 = vshrl.u32 %v5244, 7
    %v5246 = vsub.s32 %v348, %v5245
    %v5247 = vrot.slane %v5175, %v5246
    %v5248 = vlaneseq
    %v5249 = vshrl.u32 %v5248, 7
    %v5250 = vsub.s32 %v348, %v5249
    %v5251 = vrot.slane %v5178, %v5250
    %v5252 = vlaneseq
    %v5253 = vshrl.u32 %v5252, 7
    %v5254 = vsub.s32 %v348, %v5253
    %v5255 = vrot.slane %v5181, %v5254
    %v5256 = vlaneseq
    %v5257 = vshrl.u32 %v5256, 7
    %v5258 = vsub.s32 %v348, %v5257
    %v5259 = vrot.slane %v5184, %v5258
    %v5260 = vlaneseq
    %v5261 = vshrl.u32 %v5260, 7
    %v5262 = vsub.s32 %v348, %v5261
    %v5263 = vrot.slane %v5187, %v5262
    %v5264 = vlaneseq
    %v5265 = vshrl.u32 %v5264, 7
    %v5266 = vsub.s32 %v348, %v5265
    %v5267 = vrot.slane %v5190, %v5266
    %v5268 = vlaneseq
    %v5269 = vshrl.u32 %v5268, 7
    %v5270 = vsub.s32 %v348, %v5269
    %v5271 = vrot.slane %v5193, %v5270
    %v5272 = vlaneseq
    %v5273 = vshrl.u32 %v5272, 7
    %v5274 = vsub.s32 %v348, %v5273
    %v5275 = vrot.slane %v5196, %v5274
    %v5276 = vlaneseq
    %v5277 = vshrl.u32 %v5276, 7
    %v5278 = vsub.s32 %v348, %v5277
    %v5279 = vrot.slane %v5199, %v5278
    %v5280 = vsel %vm1280, %v5207, %v5203
    %v5281 = vsel %vm1282, %v5211, %v5280
    %v5282 = vsel %vm1284, %v5215, %v5281
    %v5283 = vsel %vm1286, %v5219, %v5282
    %v5284 = vsel %vm1280, %v5227, %v5223
    %v5285 = vsel %vm1282, %v5231, %v5284
    %v5286 = vsel %vm1284, %v5235, %v5285
    %v5287 = vsel %vm1286, %v5239, %v5286
    %v5288 = vsel %vm1280, %v5247, %v5243
    %v5289 = vsel %vm1282, %v5251, %v5288
    %v5290 = vsel %vm1284, %v5255, %v5289
    %v5291 = vsel %vm1286, %v5259, %v5290
    %v5292 = vsel %vm1280, %v5267, %v5263
    %v5293 = vsel %vm1282, %v5271, %v5292
    %v5294 = vsel %vm1284, %v5275, %v5293
    %v5295 = vsel %vm1286, %v5279, %v5294
    %v5296 = vsel %vm1937, %v5283, 2147483647
    %v5297 = vand.u32 %v5296, 65535
    %v5298 = vshra.s32 %v5296, 16
    %v5299 = vcvt.s32.f32 %v5297
    %v5300 = vcvt.s32.f32 %v5298
    %5301 = vmin.xlane.f32.xlu0 %v5300
    %v5302 = vpop.xlane.xlu0 %5301
    %vm5303 = vcmp.eq.f32.partialorder %v5300, %v5302
    %v5304 = vsel %vm5303, %v5299, inf
    %5305 = vmin.xlane.f32.xlu0 %v5304
    %v5306 = vpop.xlane.xlu0 %5305
    %v5307 = vcvt.f32.s32 %v5306
    %v5308 = vcvt.f32.s32 %v5302
    %v5309 = vshll.u32 %v5308, 16
    %v5310 = vadd.s32 %v5309, %v5307
    %v5311 = vsel %vm1937, %v5287, 2147483647
    %v5312 = vand.u32 %v5311, 65535
    %v5313 = vshra.s32 %v5311, 16
    %v5314 = vcvt.s32.f32 %v5312
    %v5315 = vcvt.s32.f32 %v5313
    %5316 = vmin.xlane.f32.xlu0 %v5315
    %v5317 = vpop.xlane.xlu0 %5316
    %vm5318 = vcmp.eq.f32.partialorder %v5315, %v5317
    %v5319 = vsel %vm5318, %v5314, inf
    %5320 = vmin.xlane.f32.xlu0 %v5319
    %v5321 = vpop.xlane.xlu0 %5320
    %v5322 = vcvt.f32.s32 %v5321
    %v5323 = vcvt.f32.s32 %v5317
    %v5324 = vshll.u32 %v5323, 16
    %v5325 = vadd.s32 %v5324, %v5322
    %v5326 = vsel %vm1937, %v5291, 2147483647
    %v5327 = vand.u32 %v5326, 65535
    %v5328 = vshra.s32 %v5326, 16
    %v5329 = vcvt.s32.f32 %v5327
    %v5330 = vcvt.s32.f32 %v5328
    %5331 = vmin.xlane.f32.xlu0 %v5330
    %v5332 = vpop.xlane.xlu0 %5331
    %vm5333 = vcmp.eq.f32.partialorder %v5330, %v5332
    %v5334 = vsel %vm5333, %v5329, inf
    %5335 = vmin.xlane.f32.xlu0 %v5334
    %v5336 = vpop.xlane.xlu0 %5335
    %v5337 = vcvt.f32.s32 %v5336
    %v5338 = vcvt.f32.s32 %v5332
    %v5339 = vshll.u32 %v5338, 16
    %v5340 = vadd.s32 %v5339, %v5337
    %v5341 = vsel %vm1937, %v5295, 2147483647
    %v5342 = vand.u32 %v5341, 65535
    %v5343 = vshra.s32 %v5341, 16
    %v5344 = vcvt.s32.f32 %v5342
    %v5345 = vcvt.s32.f32 %v5343
    %5346 = vmin.xlane.f32.xlu0 %v5345
    %v5347 = vpop.xlane.xlu0 %5346
    %vm5348 = vcmp.eq.f32.partialorder %v5345, %v5347
    %v5349 = vsel %vm5348, %v5344, inf
    %5350 = vmin.xlane.f32.xlu0 %v5349
    %v5351 = vpop.xlane.xlu0 %5350
    %v5352 = vcvt.f32.s32 %v5351
    %v5353 = vcvt.f32.s32 %v5347
    %v5354 = vshll.u32 %v5353, 16
    %v5355 = vadd.s32 %v5354, %v5352
    %v5356 = vlaneseq
    %v5357 = vshrl.u32 %v5356, 7
    %v5358 = vsub.s32 4, %v5357
    %v5359 = vrot.slane %v878, %v5358
    %5361 = vbcast.lane.b32.xlu0 %v5359, 256
    %v5362 = vpop.permute.xlu0 %5361
    %v5363 = vlaneseq
    %v5364 = vshrl.u32 %v5363, 7
    %v5365 = vsub.s32 5, %v5364
    %v5366 = vrot.slane %v878, %v5365
    %5368 = vbcast.lane.b32.xlu0 %v5366, 256
    %v5369 = vpop.permute.xlu0 %5368
    %v5370 = vlaneseq
    %v5371 = vshrl.u32 %v5370, 7
    %v5372 = vsub.s32 6, %v5371
    %v5373 = vrot.slane %v878, %v5372
    %5375 = vbcast.lane.b32.xlu0 %v5373, 256
    %v5376 = vpop.permute.xlu0 %5375
    %v5377 = vlaneseq
    %v5378 = vshrl.u32 %v5377, 7
    %v5379 = vsub.s32 7, %v5378
    %v5380 = vrot.slane %v878, %v5379
    %5382 = vbcast.lane.b32.xlu0 %v5380, 256
    %v5383 = vpop.permute.xlu0 %5382
    %v5388 = vadd.f32 %v4986, %v5362
    %v5389 = vadd.f32 %v4989, %v5369
    %v5390 = vadd.f32 %v4992, %v5376
    %v5391 = vadd.f32 %v4995, %v5383
    %v5392 = vlaneseq
    %v5393 = vshrl.u32 %v5392, 7
    %v5394 = vsub.s32 5, %v5393
    %v5395 = vrot.slane %v475, %v5394
    %5398 = vbcast.lane.b32.xlu0 %v5395, 256
    %v5399 = vpop.permute.xlu0 %5398
    %v5401 = vadd.f32 %v5388, %v5399
    %v5402 = vadd.f32 %v5389, %v5399
    %v5403 = vadd.f32 %v5390, %v5399
    %v5404 = vadd.f32 %v5391, %v5399
    %5409 = vset.pattern.permute.xlu0 0
    %5410 = vperm.xlu0 %5409, %v5401
    %v5411 = vpop.permute.xlu0 %5410
    %5412 = vset.pattern.permute.xlu0 0
    %5413 = vperm.xlu0 %5412, %v5402
    %v5414 = vpop.permute.xlu0 %5413
    %5415 = vset.pattern.permute.xlu0 0
    %5416 = vperm.xlu0 %5415, %v5403
    %v5417 = vpop.permute.xlu0 %5416
    %5418 = vset.pattern.permute.xlu0 0
    %5419 = vperm.xlu0 %5418, %v5404
    %v5420 = vpop.permute.xlu0 %5419
    %v5421 = vlaneseq
    %v5422 = vshrl.u32 %v5421, 7
    %v5423 = vsub.s32 %v348, %v5422
    %v5424 = vrot.slane %v5411, %v5423
    %v5425 = vlaneseq
    %v5426 = vshrl.u32 %v5425, 7
    %v5427 = vsub.s32 %v348, %v5426
    %v5428 = vrot.slane %v5414, %v5427
    %v5429 = vlaneseq
    %v5430 = vshrl.u32 %v5429, 7
    %v5431 = vsub.s32 %v348, %v5430
    %v5432 = vrot.slane %v5417, %v5431
    %v5433 = vlaneseq
    %v5434 = vshrl.u32 %v5433, 7
    %v5435 = vsub.s32 %v348, %v5434
    %v5436 = vrot.slane %v5420, %v5435
    %v5437 = vsel %vm1280, %v5428, %v5424
    %v5438 = vsel %vm1282, %v5432, %v5437
    %v5439 = vsel %vm1284, %v5436, %v5438
    %vm5441 = vcmask 35840
    %v5442 = vsel %vm5441, %v5439, -inf
    %5443 = vmax.xlane.f32.xlu0 %v5442
    %v5444 = vpop.xlane.xlu0 %5443
    %v5446 = vlaneseq
    %v5447 = vshrl.u32 %v5446, 7
    %v5448 = vsub.s32 0, %v5447
    %v5449 = vrot.slane %v5444, %v5448
    %v5450 = vlaneseq
    %v5451 = vshrl.u32 %v5450, 7
    %v5452 = vsub.s32 1, %v5451
    %v5453 = vrot.slane %v5444, %v5452
    %v5454 = vlaneseq
    %v5455 = vshrl.u32 %v5454, 7
    %v5456 = vsub.s32 2, %v5455
    %v5457 = vrot.slane %v5444, %v5456
    %v5458 = vlaneseq
    %v5459 = vshrl.u32 %v5458, 7
    %v5460 = vsub.s32 3, %v5459
    %v5461 = vrot.slane %v5444, %v5460
    %vm5466 = vcmp.eq.f32.partialorder %v5401, %v5449
    %vm5467 = vcmp.eq.f32.partialorder %v5402, %v5453
    %vm5468 = vcmp.eq.f32.partialorder %v5403, %v5457
    %vm5469 = vcmp.eq.f32.partialorder %v5404, %v5461
    %v5470 = vsel %vm5466, %v2076, 5
    %v5471 = vsel %vm5467, %v2076, 5
    %v5472 = vsel %vm5468, %v2076, 5
    %v5473 = vsel %vm5469, %v2076, 5
    %5474 = vset.pattern.permute.xlu0 0
    %5475 = vperm.xlu0 %5474, %v5470
    %v5476 = vpop.permute.xlu0 %5475
    %5477 = vset.pattern.permute.xlu0 0
    %5478 = vperm.xlu0 %5477, %v5471
    %v5479 = vpop.permute.xlu0 %5478
    %5480 = vset.pattern.permute.xlu0 0
    %5481 = vperm.xlu0 %5480, %v5472
    %v5482 = vpop.permute.xlu0 %5481
    %5483 = vset.pattern.permute.xlu0 0
    %5484 = vperm.xlu0 %5483, %v5473
    %v5485 = vpop.permute.xlu0 %5484
    %v5486 = vlaneseq
    %v5487 = vshrl.u32 %v5486, 7
    %v5488 = vsub.s32 %v348, %v5487
    %v5489 = vrot.slane %v5476, %v5488
    %v5490 = vlaneseq
    %v5491 = vshrl.u32 %v5490, 7
    %v5492 = vsub.s32 %v348, %v5491
    %v5493 = vrot.slane %v5479, %v5492
    %v5494 = vlaneseq
    %v5495 = vshrl.u32 %v5494, 7
    %v5496 = vsub.s32 %v348, %v5495
    %v5497 = vrot.slane %v5482, %v5496
    %v5498 = vlaneseq
    %v5499 = vshrl.u32 %v5498, 7
    %v5500 = vsub.s32 %v348, %v5499
    %v5501 = vrot.slane %v5485, %v5500
    %v5502 = vsel %vm1280, %v5493, %v5489
    %v5503 = vsel %vm1282, %v5497, %v5502
    %v5504 = vsel %vm1284, %v5501, %v5503
    %v5505 = vsel %vm5441, %v5504, 2147483647
    %v5506 = vand.u32 %v5505, 65535
    %v5507 = vshra.s32 %v5505, 16
    %v5508 = vcvt.s32.f32 %v5506
    %v5509 = vcvt.s32.f32 %v5507
    %5510 = vmin.xlane.f32.xlu0 %v5509
    %v5511 = vpop.xlane.xlu0 %5510
    %vm5512 = vcmp.eq.f32.partialorder %v5509, %v5511
    %v5513 = vsel %vm5512, %v5508, inf
    %5514 = vmin.xlane.f32.xlu0 %v5513
    %v5515 = vpop.xlane.xlu0 %5514
    %v5516 = vcvt.f32.s32 %v5515
    %v5517 = vcvt.f32.s32 %v5511
    %v5518 = vshll.u32 %v5517, 16
    %v5519 = vadd.s32 %v5518, %v5516
    %vm5520 = vcmp.eq.s32.totalorder %v348, 7
    %v5521 = vsel %vm5520, %v5519, 0
    %vm5522 = vcmp.eq.s32.totalorder %v348, %v5519
    %v5523 = vlaneseq
    %v5524 = vshrl.u32 %v5523, 7
    %v5525 = vsub.s32 %v348, %v5524
    %v5526 = vrot.slane %v5310, %v5525
    %v5527 = vlaneseq
    %v5528 = vshrl.u32 %v5527, 7
    %v5529 = vsub.s32 %v348, %v5528
    %v5530 = vrot.slane %v5325, %v5529
    %v5531 = vlaneseq
    %v5532 = vshrl.u32 %v5531, 7
    %v5533 = vsub.s32 %v348, %v5532
    %v5534 = vrot.slane %v5340, %v5533
    %v5535 = vlaneseq
    %v5536 = vshrl.u32 %v5535, 7
    %v5537 = vsub.s32 %v348, %v5536
    %v5538 = vrot.slane %v5355, %v5537
    %v5539 = vsel %vm1280, %v5530, %v5526
    %v5540 = vsel %vm1282, %v5534, %v5539
    %v5541 = vsel %vm1284, %v5538, %v5540
    %v5542 = vsel %vm5522, %v5541, 0
    %v5543 = vsel %vm5441, %v5542, 0
    %v5544 = vand.u32 %v5543, 65535
    %v5545 = vshrl.u32 %v5543, 16
    %v5546 = vcvt.s32.f32 %v5544
    %v5547 = vcvt.s32.f32 %v5545
    %5548 = vadd.xlane.f32.xlu0 %v5546
    %v5549 = vpop.xlane.xlu0 %5548
    %5550 = vadd.xlane.f32.xlu0 %v5547
    %v5551 = vpop.xlane.xlu0 %5550
    %v5552 = vcvt.f32.s32 %v5549
    %v5553 = vcvt.f32.s32 %v5551
    %v5554 = vshll.u32 %v5553, 16
    %v5555 = vadd.s32 %v5554, %v5552
    %vm5556 = vcmp.eq.s32.totalorder %v348, 6
    %v5557 = vsel %vm5556, %v5555, %v5521
    %vm5558 = vcmp.eq.s32.totalorder %v348, %v5555
    %v5559 = vlaneseq
    %v5560 = vshrl.u32 %v5559, 7
    %v5561 = vsub.s32 %v348, %v5560
    %v5562 = vrot.slane %v4701, %v5561
    %v5563 = vlaneseq
    %v5564 = vshrl.u32 %v5563, 7
    %v5565 = vsub.s32 %v348, %v5564
    %v5566 = vrot.slane %v4716, %v5565
    %v5567 = vlaneseq
    %v5568 = vshrl.u32 %v5567, 7
    %v5569 = vsub.s32 %v348, %v5568
    %v5570 = vrot.slane %v4731, %v5569
    %v5571 = vlaneseq
    %v5572 = vshrl.u32 %v5571, 7
    %v5573 = vsub.s32 %v348, %v5572
    %v5574 = vrot.slane %v4746, %v5573
    %v5575 = vsel %vm1280, %v5566, %v5562
    %v5576 = vsel %vm1282, %v5570, %v5575
    %v5577 = vsel %vm1284, %v5574, %v5576
    %v5578 = vsel %vm5558, %v5577, 0
    %v5579 = vsel %vm5441, %v5578, 0
    %v5580 = vand.u32 %v5579, 65535
    %v5581 = vshrl.u32 %v5579, 16
    %v5582 = vcvt.s32.f32 %v5580
    %v5583 = vcvt.s32.f32 %v5581
    %5584 = vadd.xlane.f32.xlu0 %v5582
    %v5585 = vpop.xlane.xlu0 %5584
    %5586 = vadd.xlane.f32.xlu0 %v5583
    %v5587 = vpop.xlane.xlu0 %5586
    %v5588 = vcvt.f32.s32 %v5585
    %v5589 = vcvt.f32.s32 %v5587
    %v5590 = vshll.u32 %v5589, 16
    %v5591 = vadd.s32 %v5590, %v5588
    %vm5592 = vcmp.eq.s32.totalorder %v348, 5
    %v5593 = vsel %vm5592, %v5591, %v5557
    %vm5594 = vcmp.eq.s32.totalorder %v348, %v5591
    %v5595 = vlaneseq
    %v5596 = vshrl.u32 %v5595, 7
    %v5597 = vsub.s32 %v348, %v5596
    %v5598 = vrot.slane %v4093, %v5597
    %v5599 = vlaneseq
    %v5600 = vshrl.u32 %v5599, 7
    %v5601 = vsub.s32 %v348, %v5600
    %v5602 = vrot.slane %v4108, %v5601
    %v5603 = vlaneseq
    %v5604 = vshrl.u32 %v5603, 7
    %v5605 = vsub.s32 %v348, %v5604
    %v5606 = vrot.slane %v4123, %v5605
    %v5607 = vlaneseq
    %v5608 = vshrl.u32 %v5607, 7
    %v5609 = vsub.s32 %v348, %v5608
    %v5610 = vrot.slane %v4138, %v5609
    %v5611 = vsel %vm1280, %v5602, %v5598
    %v5612 = vsel %vm1282, %v5606, %v5611
    %v5613 = vsel %vm1284, %v5610, %v5612
    %v5614 = vsel %vm5594, %v5613, 0
    %v5615 = vsel %vm5441, %v5614, 0
    %v5616 = vand.u32 %v5615, 65535
    %v5617 = vshrl.u32 %v5615, 16
    %v5618 = vcvt.s32.f32 %v5616
    %v5619 = vcvt.s32.f32 %v5617
    %5620 = vadd.xlane.f32.xlu0 %v5618
    %v5621 = vpop.xlane.xlu0 %5620
    %5622 = vadd.xlane.f32.xlu0 %v5619
    %v5623 = vpop.xlane.xlu0 %5622
    %v5624 = vcvt.f32.s32 %v5621
    %v5625 = vcvt.f32.s32 %v5623
    %v5626 = vshll.u32 %v5625, 16
    %v5627 = vadd.s32 %v5626, %v5624
    %vm5628 = vcmp.eq.s32.totalorder %v348, 4
    %v5629 = vsel %vm5628, %v5627, %v5593
    %vm5630 = vcmp.eq.s32.totalorder %v348, %v5627
    %v5631 = vlaneseq
    %v5632 = vshrl.u32 %v5631, 7
    %v5633 = vsub.s32 %v348, %v5632
    %v5634 = vrot.slane %v3484, %v5633
    %v5635 = vlaneseq
    %v5636 = vshrl.u32 %v5635, 7
    %v5637 = vsub.s32 %v348, %v5636
    %v5638 = vrot.slane %v3499, %v5637
    %v5639 = vlaneseq
    %v5640 = vshrl.u32 %v5639, 7
    %v5641 = vsub.s32 %v348, %v5640
    %v5642 = vrot.slane %v3514, %v5641
    %v5643 = vlaneseq
    %v5644 = vshrl.u32 %v5643, 7
    %v5645 = vsub.s32 %v348, %v5644
    %v5646 = vrot.slane %v3529, %v5645
    %v5647 = vsel %vm1280, %v5638, %v5634
    %v5648 = vsel %vm1282, %v5642, %v5647
    %v5649 = vsel %vm1284, %v5646, %v5648
    %v5650 = vsel %vm5630, %v5649, 0
    %v5651 = vsel %vm5441, %v5650, 0
    %v5652 = vand.u32 %v5651, 65535
    %v5653 = vshrl.u32 %v5651, 16
    %v5654 = vcvt.s32.f32 %v5652
    %v5655 = vcvt.s32.f32 %v5653
    %5656 = vadd.xlane.f32.xlu0 %v5654
    %v5657 = vpop.xlane.xlu0 %5656
    %5658 = vadd.xlane.f32.xlu0 %v5655
    %v5659 = vpop.xlane.xlu0 %5658
    %v5660 = vcvt.f32.s32 %v5657
    %v5661 = vcvt.f32.s32 %v5659
    %v5662 = vshll.u32 %v5661, 16
    %v5663 = vadd.s32 %v5662, %v5660
    %v5664 = vsel %vm881, %v5663, %v5629
    %vm5665 = vcmp.eq.s32.totalorder %v348, %v5663
    %v5666 = vlaneseq
    %v5667 = vshrl.u32 %v5666, 7
    %v5668 = vsub.s32 %v348, %v5667
    %v5669 = vrot.slane %v2876, %v5668
    %v5670 = vlaneseq
    %v5671 = vshrl.u32 %v5670, 7
    %v5672 = vsub.s32 %v348, %v5671
    %v5673 = vrot.slane %v2891, %v5672
    %v5674 = vlaneseq
    %v5675 = vshrl.u32 %v5674, 7
    %v5676 = vsub.s32 %v348, %v5675
    %v5677 = vrot.slane %v2906, %v5676
    %v5678 = vlaneseq
    %v5679 = vshrl.u32 %v5678, 7
    %v5680 = vsub.s32 %v348, %v5679
    %v5681 = vrot.slane %v2921, %v5680
    %v5682 = vsel %vm1280, %v5673, %v5669
    %v5683 = vsel %vm1282, %v5677, %v5682
    %v5684 = vsel %vm1284, %v5681, %v5683
    %v5685 = vsel %vm5665, %v5684, 0
    %v5686 = vsel %vm5441, %v5685, 0
    %v5687 = vand.u32 %v5686, 65535
    %v5688 = vshrl.u32 %v5686, 16
    %v5689 = vcvt.s32.f32 %v5687
    %v5690 = vcvt.s32.f32 %v5688
    %5691 = vadd.xlane.f32.xlu0 %v5689
    %v5692 = vpop.xlane.xlu0 %5691
    %5693 = vadd.xlane.f32.xlu0 %v5690
    %v5694 = vpop.xlane.xlu0 %5693
    %v5695 = vcvt.f32.s32 %v5692
    %v5696 = vcvt.f32.s32 %v5694
    %v5697 = vshll.u32 %v5696, 16
    %v5698 = vadd.s32 %v5697, %v5695
    %vm5699 = vcmp.eq.s32.totalorder %v348, 2
    %v5700 = vsel %vm5699, %v5698, %v5664
    %vm5701 = vcmp.eq.s32.totalorder %v348, %v5698
    %v5702 = vlaneseq
    %v5703 = vshrl.u32 %v5702, 7
    %v5704 = vsub.s32 %v348, %v5703
    %v5705 = vrot.slane %v2267, %v5704
    %v5706 = vlaneseq
    %v5707 = vshrl.u32 %v5706, 7
    %v5708 = vsub.s32 %v348, %v5707
    %v5709 = vrot.slane %v2282, %v5708
    %v5710 = vlaneseq
    %v5711 = vshrl.u32 %v5710, 7
    %v5712 = vsub.s32 %v348, %v5711
    %v5713 = vrot.slane %v2297, %v5712
    %v5714 = vlaneseq
    %v5715 = vshrl.u32 %v5714, 7
    %v5716 = vsub.s32 %v348, %v5715
    %v5717 = vrot.slane %v2312, %v5716
    %v5718 = vsel %vm1280, %v5709, %v5705
    %v5719 = vsel %vm1282, %v5713, %v5718
    %v5720 = vsel %vm1284, %v5717, %v5719
    %v5721 = vsel %vm5701, %v5720, 0
    %v5722 = vsel %vm5441, %v5721, 0
    %v5723 = vand.u32 %v5722, 65535
    %v5724 = vshrl.u32 %v5722, 16
    %v5725 = vcvt.s32.f32 %v5723
    %v5726 = vcvt.s32.f32 %v5724
    %5727 = vadd.xlane.f32.xlu0 %v5725
    %v5728 = vpop.xlane.xlu0 %5727
    %5729 = vadd.xlane.f32.xlu0 %v5726
    %v5730 = vpop.xlane.xlu0 %5729
    %v5731 = vcvt.f32.s32 %v5728
    %v5732 = vcvt.f32.s32 %v5730
    %v5733 = vshll.u32 %v5732, 16
    %v5734 = vadd.s32 %v5733, %v5731
    %vm5735 = vcmp.eq.s32.totalorder %v348, 1
    %v5736 = vsel %vm5735, %v5734, %v5700
    %vm5737 = vcmp.eq.s32.totalorder %v348, %v5734
    %v5738 = vlaneseq
    %v5739 = vshrl.u32 %v5738, 7
    %v5740 = vsub.s32 %v348, %v5739
    %v5741 = vrot.slane %v1635, %v5740
    %v5742 = vlaneseq
    %v5743 = vshrl.u32 %v5742, 7
    %v5744 = vsub.s32 %v348, %v5743
    %v5745 = vrot.slane %v1650, %v5744
    %v5746 = vlaneseq
    %v5747 = vshrl.u32 %v5746, 7
    %v5748 = vsub.s32 %v348, %v5747
    %v5749 = vrot.slane %v1665, %v5748
    %v5750 = vlaneseq
    %v5751 = vshrl.u32 %v5750, 7
    %v5752 = vsub.s32 %v348, %v5751
    %v5753 = vrot.slane %v1680, %v5752
    %v5754 = vsel %vm1280, %v5745, %v5741
    %v5755 = vsel %vm1282, %v5749, %v5754
    %v5756 = vsel %vm1284, %v5753, %v5755
    %v5757 = vsel %vm5737, %v5756, 0
    %v5758 = vsel %vm5441, %v5757, 0
    %v5759 = vand.u32 %v5758, 65535
    %v5760 = vshrl.u32 %v5758, 16
    %v5761 = vcvt.s32.f32 %v5759
    %v5762 = vcvt.s32.f32 %v5760
    %5763 = vadd.xlane.f32.xlu0 %v5761
    %v5764 = vpop.xlane.xlu0 %5763
    %5765 = vadd.xlane.f32.xlu0 %v5762
    %v5766 = vpop.xlane.xlu0 %5765
    %v5767 = vcvt.f32.s32 %v5764
    %v5768 = vcvt.f32.s32 %v5766
    %v5769 = vshll.u32 %v5768, 16
    %v5770 = vadd.s32 %v5769, %v5767
    %vm5771 = vcmp.eq.s32.totalorder %v348, 0
    %v5772 = vsel %vm5771, %v5770, %v5736
    %vm5773 = vcmp.eq.s32.totalorder %v348, %v5770
    %v5774 = vadd.s32 %v348, 1
    %v5775 = vlaneseq
    %v5776 = vshrl.u32 %v5775, 7
    %v5777 = vsub.s32 %v5774, %v5776
    %v5778 = vrot.slane %v967, %v5777
    %v5779 = vlaneseq
    %v5780 = vshrl.u32 %v5779, 7
    %v5781 = vsub.s32 %v5774, %v5780
    %v5782 = vrot.slane %v982, %v5781
    %v5783 = vlaneseq
    %v5784 = vshrl.u32 %v5783, 7
    %v5785 = vsub.s32 %v5774, %v5784
    %v5786 = vrot.slane %v997, %v5785
    %v5787 = vlaneseq
    %v5788 = vshrl.u32 %v5787, 7
    %v5789 = vsub.s32 %v5774, %v5788
    %v5790 = vrot.slane %v1012, %v5789
    %v5791 = vsel %vm1280, %v5782, %v5778
    %v5792 = vsel %vm1282, %v5786, %v5791
    %v5793 = vsel %vm1284, %v5790, %v5792
    %v5794 = vsel %vm5773, %v5793, 0
    %v5795 = vsel %vm5441, %v5794, 0
    %v5796 = vand.u32 %v5795, 65535
    %v5797 = vshrl.u32 %v5795, 16
    %v5798 = vcvt.s32.f32 %v5796
    %v5799 = vcvt.s32.f32 %v5797
    %5800 = vadd.xlane.f32.xlu0 %v5798
    %v5801 = vpop.xlane.xlu0 %5800
    %5802 = vadd.xlane.f32.xlu0 %v5799
    %v5803 = vpop.xlane.xlu0 %5802
    %v5804 = vcvt.f32.s32 %v5801
    %v5805 = vcvt.f32.s32 %v5803
    %v5806 = vshll.u32 %v5805, 16
    %v5807 = vadd.s32 %v5806, %v5804
    %vm5808 = vcmp.eq.s32.totalorder %v348, 8
    %v5809 = vsel %vm5808, %v5807, %v5772
    %vm5810 = vcmp.eq.s32.totalorder %v348, 9
    %v5811 = vsel %vm5810, %v5444, %v5809
    %5812 = vst [vmem:[#allocation4] sm:$0xf] %v5811
    // Predicated region
    $region14: #{forward_batch.1} parent=1 // pred_check
      _
    $region15: #{forward_batch.1} parent=1 // pred_check_branch
      %5814 = sbr.rel (0) target = $region17
    $region16: #{forward_batch.1} parent=1 // pred_region
      %s5816 = ssub.s32 64, 64
      %5817 = vsyncadd [#allocation5], %s5816
      %s5819 = sshll.u32 [#allocation4], 4
      %s5820 = int_to_ptr.vmem [resolvable:$true] %s5819
      %5822 = dma.vmem_to_hbm [thread:$0]  %s5820, 64, %s4, [#allocation5]
    $region17: #{forward_batch.1} parent=1 // pred_fallthru
      _
    // Predicated region
    $region18: #{forward_batch.1} parent=1 // pred_check
      _
    $region19: #{forward_batch.1} parent=1 // pred_check_branch
      %5824 = sbr.rel (0) target = $region21
    $region20: #{forward_batch.1} parent=1 // pred_region
      %5825 = dma.done [#allocation5], 64
    $region21: #{forward_batch.1} parent=1 // pred_fallthru
      _
    %5826 = vsyncpa [#allocation5], 1

</llo_original>
